<compile_context>
chip_gen: v7x
topology: tpu7x:2x2x1
jax: 0.10.0
libtpu: 0.0.40
codegen_flags: <defaults>
</compile_context>

<pallas_src>
import math
import jax
import jax.numpy as jnp
import numpy as np
from jax import lax
from jax.experimental import pallas as pl
from jax.experimental.pallas import tpu as pltpu

# -------------------- problem sizes --------------------
B = 2          # batch
S = 8          # decoder (target) sequence length
S_ENC = 8      # encoder (source) sequence length
D = 32         # d_model
H = 4          # heads
DK = D // H    # d_k
D_FF = 64      # feed-forward hidden
EPS = 1e-6
NEG_INF = -1e9        # torch masked_fill value
CROSS_NEG = -1e30     # disables cross-batch attention blocks when the batch is folded


# -------------------- in-kernel helpers --------------------
def _layer_norm(x, alpha, bias):
    # torch: mean over last dim, unbiased std (N-1 divisor), eps added to std
    mean = jnp.mean(x, axis=-1, keepdims=True)
    var = jnp.sum((x - mean) ** 2, axis=-1, keepdims=True) / (x.shape[-1] - 1)
    std = jnp.sqrt(var)
    return alpha * (x - mean) / (std + EPS) + bias


def _attention(q, k, v, bias, wo, bo):
    """q: (Rq, D); k, v: (Rk, D); bias: (Rq, Rk) additive mask bias.

    Static H-loop of per-head score/softmax/context; the output projection is
    accumulated per head (no concatenate).  Attention-dropout is identity.
    """
    scale = 1.0 / math.sqrt(DK)
    out = None
    for h in range(H):
        sl = slice(h * DK, (h + 1) * DK)
        # NT matmul: contract the last dim of both operands (q_h @ k_h^T).
        scores = lax.dot_general(
            q[:, sl], k[:, sl], (((1,), (1,)), ((), ())),
            preferred_element_type=jnp.float32) * scale + bias
        m = jnp.max(scores, axis=-1, keepdims=True)
        e = jnp.exp(scores - m)
        probs = e * pl.reciprocal(jnp.sum(e, axis=-1, keepdims=True), approx=False)
        # TODO(synk): attention-dropout is identity here (inference mode)
        ctx = jnp.dot(probs, v[:, sl], preferred_element_type=jnp.float32)      # (Rq, DK)
        contrib = jnp.dot(ctx, wo[sl, :], preferred_element_type=jnp.float32)   # (Rq, D)
        out = contrib if out is None else out + contrib
    return out + bo


# -------------------- kernel --------------------
def decoder_block_kernel(
    x_ref, enc_ref, tgt_bias_ref, src_bias_ref,
    wqkv1_ref, wo1_ref,                 # self-attention
    wq2_ref, wkv2_ref, wo2_ref,         # cross-attention
    w1_ref, b1_ref, w2_ref,             # feed-forward
    vec_ref,                            # packed (9, D): bo1, bo2, b2, ln1a, ln1b, ln2a, ln2b, ln3a, ln3b
    out_ref,
):
    x = x_ref[0]                  # (R, D)   R  = Bb * S    (batch folded into rows)
    enc = enc_ref[0]              # (RE, D)  RE = Bb * S_ENC
    tgt_bias = tgt_bias_ref[0]    # (R, R)   additive bias (0 / -1e9 / -1e30)
    src_bias = src_bias_ref[0]    # (R, RE)

    vecs = vec_ref[...]           # (9, D)
    bo1, bo2, b2 = vecs[0:1], vecs[1:2], vecs[2:3]
    ln1_a, ln1_b = vecs[3:4], vecs[4:5]
    ln2_a, ln2_b = vecs[5:6], vecs[6:7]
    ln3_a, ln3_b = vecs[7:8], vecs[8:9]
    b1 = b1_ref[...]              # (1, D_FF)

    # ---- residual 1: masked self-attention (fused QKV projection) ----
    n1 = _layer_norm(x, ln1_a, ln1_b)
    qkv = jnp.dot(n1, wqkv1_ref[...], preferred_element_type=jnp.float32)   # (R, 3D)
    x = x + _attention(qkv[:, 0:D], qkv[:, D:2 * D], qkv[:, 2 * D:3 * D],
                       tgt_bias, wo1_ref[...], bo1)

    # ---- residual 2: cross-attention (K/V from raw encoder output, fused KV) ----
    n2 = _layer_norm(x, ln2_a, ln2_b)
    q2 = jnp.dot(n2, wq2_ref[...], preferred_element_type=jnp.float32)      # (R, D)
    kv2 = jnp.dot(enc, wkv2_ref[...], preferred_element_type=jnp.float32)   # (RE, 2D)
    x = x + _attention(q2, kv2[:, 0:D], kv2[:, D:2 * D],
                       src_bias, wo2_ref[...], bo2)

    # ---- residual 3: feed-forward ----
    n3 = _layer_norm(x, ln3_a, ln3_b)
    hid = jnp.maximum(
        jnp.dot(n3, w1_ref[...], preferred_element_type=jnp.float32) + b1, 0.0)
    x = x + jnp.dot(hid, w2_ref[...], preferred_element_type=jnp.float32) + b2

    out_ref[0] = x.astype(out_ref.dtype)


# -------------------- wrapper --------------------
def _pick_batch_block(batch):
    # v7x has 2 TensorCores/chip: keep batch on the "parallel" grid so both cores
    # get work.  v5e/v6e have a single TC: fold the whole batch into one grid
    # step (halves pipeline-step + DMA-descriptor overhead on a tiny kernel).
    try:
        kind = jax.devices()[0].device_kind.lower()
    except Exception:
        kind = ""
    if "v7" in kind or "7x" in kind:
        return 1
    return batch


def _build_block_bias(mask, batch_block):
    """mask: (B, Sq, Skv) int -> (GB, Bb*Sq, Bb*Skv) f32 additive bias.

    Inside each folded block: 0 where mask != 0, -1e9 where mask == 0 (torch
    masked_fill), and -1e30 on cross-batch score blocks so folded examples never
    attend to each other.
    """
    Bn, Sq, Skv = mask.shape
    Bb = batch_block
    GB = Bn // Bb
    bias = jnp.where(mask == 0, NEG_INF, 0.0).astype(jnp.float32)     # (B, Sq, Skv)
    bias = bias.reshape(GB, Bb, Sq, Skv)
    eye = jnp.eye(Bb, dtype=jnp.float32)                              # (Bb, Bb)
    big = jnp.where(eye[None, :, None, :, None] > 0,
                    bias[:, :, :, None, :],
                    jnp.float32(CROSS_NEG))                           # (GB, Bb, Sq, Bb, Skv)
    return big.reshape(GB, Bb * Sq, Bb * Skv)


def decoder_block(x, enc, tgt_mask, src_mask, params, batch_block=None):
    """x: (B,S,D) f32, enc: (B,S_ENC,D) f32, masks int32 (B,S,S)/(B,S,S_ENC)."""
    (wq1, wk1, wv1, wo1, bo1, wq2, wk2, wv2, wo2, bo2,
     w1, b1, w2, b2, l1a, l1b, l2a, l2b, l3a, l3b) = params

    Bn, Sq, Dm = x.shape
    Se = enc.shape[1]
    if batch_block is None:
        batch_block = _pick_batch_block(Bn)
    Bb = batch_block
    assert Bn % Bb == 0
    GB = Bn // Bb
    R, RE = Bb * Sq, Bb * Se

    # ---- pack parameters (fewer, larger DMAs) ----
    wqkv1 = jnp.concatenate([wq1, wk1, wv1], axis=1)     # (D, 3D)
    wkv2 = jnp.concatenate([wk2, wv2], axis=1)           # (D, 2D)
    vecs = jnp.concatenate([bo1, bo2, b2, l1a, l1b, l2a, l2b, l3a, l3b], axis=0)  # (9, D)

    # ---- fold batch into rows; precompute additive mask biases ----
    xf = x.reshape(GB, R, Dm)
    encf = enc.reshape(GB, RE, Dm)
    tgt_bias = _build_block_bias(tgt_mask, Bb)           # (GB, R, R)
    src_bias = _build_block_bias(src_mask, Bb)           # (GB, R, RE)

    def act_spec(rows):
        return pl.BlockSpec((1, rows, Dm), lambda g: (g, 0, 0))

    def full(shape):
        return pl.BlockSpec(shape, lambda g: (0, 0))

    in_specs = [
        act_spec(R),                                        # x
        act_spec(RE),                                       # enc
        pl.BlockSpec((1, R, R), lambda g: (g, 0, 0)),       # tgt bias
        pl.BlockSpec((1, R, RE), lambda g: (g, 0, 0)),      # src bias
        full((Dm, 3 * Dm)), full((Dm, Dm)),                 # wqkv1, wo1
        full((Dm, Dm)), full((Dm, 2 * Dm)), full((Dm, Dm)), # wq2, wkv2, wo2
        full((Dm, D_FF)), full((1, D_FF)), full((D_FF, Dm)),# w1, b1, w2
        full((9, Dm)),                                      # packed vectors
    ]

    out = pl.pallas_call(
        decoder_block_kernel,
        out_shape=jax.ShapeDtypeStruct((GB, R, Dm), jnp.float32),
        grid=(GB,),
        in_specs=in_specs,
        out_specs=act_spec(R),
        compiler_params=pltpu.CompilerParams(
            dimension_semantics=("parallel",)),
    )(xf, encf, tgt_bias, src_bias,
      wqkv1, wo1, wq2, wkv2, wo2, w1, b1, w2, vecs)

    return out.reshape(Bn, Sq, Dm)


# -------------------- pure-JAX reference (for verification) --------------------
def decoder_block_ref(x, enc, tgt_mask, src_mask, params):
    (wq1, wk1, wv1, wo1, bo1, wq2, wk2, wv2, wo2, bo2,
     w1, b1, w2, b2, l1a, l1b, l2a, l2b, l3a, l3b) = params

    def ln(t, a, b):
        mean = t.mean(-1, keepdims=True)
        var = ((t - mean) ** 2).sum(-1, keepdims=True) / (t.shape[-1] - 1)
        return a * (t - mean) / (jnp.sqrt(var) + EPS) + b

    def mha(q_in, kv_in, mask, wq, wk, wv, wo, bo):
        q = q_in @ wq
        k = kv_in @ wk
        v = kv_in @ wv
        Bn, Sq, _ = q.shape
        Skv = k.shape[1]
        qh = q.reshape(Bn, Sq, H, DK).transpose(0, 2, 1, 3)
        kh = k.reshape(Bn, Skv, H, DK).transpose(0, 2, 1, 3)
        vh = v.reshape(Bn, Skv, H, DK).transpose(0, 2, 1, 3)
        s = jnp.einsum("bhqd,bhkd->bhqk", qh, kh) / math.sqrt(DK)
        s = jnp.where(mask[:, None] == 0, NEG_INF, s)
        p = jax.nn.softmax(s, axis=-1)
        o = jnp.einsum("bhqk,bhkd->bhqd", p, vh).transpose(0, 2, 1, 3).reshape(Bn, Sq, H * DK)
        return o @ wo + bo

    n1 = ln(x, l1a[0], l1b[0])
    x = x + mha(n1, n1, tgt_mask, wq1, wk1, wv1, wo1, bo1[0])
    n2 = ln(x, l2a[0], l2b[0])
    x = x + mha(n2, enc, src_mask, wq2, wk2, wv2, wo2, bo2[0])
    n3 = ln(x, l3a[0], l3b[0])
    hid = jax.nn.relu(n3 @ w1 + b1[0])
    return x + (hid @ w2 + b2[0])


if __name__ == "__main__":
    key = jax.random.PRNGKey(0)
    keys = jax.random.split(key, 16)

    x = jax.random.normal(keys[0], (B, S, D), jnp.float32)
    enc = jax.random.normal(keys[1], (B, S_ENC, D), jnp.float32)

    # causal target mask, all-ones source mask
    tgt_mask = jnp.broadcast_to(
        jnp.tril(jnp.ones((S, S), jnp.int32))[None], (B, S, S)).astype(jnp.int32)
    src_mask = jnp.ones((B, S, S_ENC), jnp.int32)

    scale = 0.1
    params = (
        # self-attention
        scale * jax.random.normal(keys[2], (D, D), jnp.float32),
        scale * jax.random.normal(keys[3], (D, D), jnp.float32),
        scale * jax.random.normal(keys[4], (D, D), jnp.float32),
        scale * jax.random.normal(keys[5], (D, D), jnp.float32),
        scale * jax.random.normal(keys[6], (1, D), jnp.float32),
        # cross-attention
        scale * jax.random.normal(keys[7], (D, D), jnp.float32),
        scale * jax.random.normal(keys[8], (D, D), jnp.float32),
        scale * jax.random.normal(keys[9], (D, D), jnp.float32),
        scale * jax.random.normal(keys[10], (D, D), jnp.float32),
        scale * jax.random.normal(keys[11], (1, D), jnp.float32),
        # feed-forward
        scale * jax.random.normal(keys[12], (D, D_FF), jnp.float32),
        scale * jax.random.normal(keys[13], (1, D_FF), jnp.float32),
        scale * jax.random.normal(keys[14], (D_FF, D), jnp.float32),
        scale * jax.random.normal(keys[15], (1, D), jnp.float32),
        # layer norms: alpha=1, bias=0 (as in torch init)
        jnp.ones((1, D), jnp.float32), jnp.zeros((1, D), jnp.float32),
        jnp.ones((1, D), jnp.float32), jnp.zeros((1, D), jnp.float32),
        jnp.ones((1, D), jnp.float32), jnp.zeros((1, D), jnp.float32),
    )

    out = decoder_block(x, enc, tgt_mask, src_mask, params)
    out = jax.block_until_ready(out)

    ref = decoder_block_ref(x, enc, tgt_mask, src_mask, params)
    np.testing.assert_allclose(np.asarray(out), np.asarray(ref), rtol=1e-4, atol=1e-4)

    print("KERNEL_OK")
</pallas_src>

<mosaic_0001>
module attributes {stable_mosaic.version = 11 : i64} {
  func.func @decoder_block_kernel(%arg0: i32, %arg1: memref<1x16x32xf32, #tpu.memory_space<vmem>>, %arg2: memref<1x16x32xf32, #tpu.memory_space<vmem>>, %arg3: memref<1x16x16xf32, #tpu.memory_space<vmem>>, %arg4: memref<1x16x16xf32, #tpu.memory_space<vmem>>, %arg5: memref<32x96xf32, #tpu.memory_space<vmem>>, %arg6: memref<32x32xf32, #tpu.memory_space<vmem>>, %arg7: memref<32x32xf32, #tpu.memory_space<vmem>>, %arg8: memref<32x64xf32, #tpu.memory_space<vmem>>, %arg9: memref<32x32xf32, #tpu.memory_space<vmem>>, %arg10: memref<32x64xf32, #tpu.memory_space<vmem>>, %arg11: memref<1x64xf32, #tpu.memory_space<vmem>>, %arg12: memref<64x32xf32, #tpu.memory_space<vmem>>, %arg13: memref<9x32xf32, #tpu.memory_space<vmem>>, %arg14: memref<1x16x32xf32, #tpu.memory_space<vmem>>) attributes {dimension_semantics = [#tpu.dimension_semantics<parallel>], iteration_bounds = array<i64: 1>, scalar_prefetch = 0 : i64, scratch_operands = 0 : i64, tpu.core_type = #tpu.core_type<tc>, window_params = [{transform_indices = @transform_0, window_bounds = array<i64: 1, 16, 32>}, {transform_indices = @transform_1, window_bounds = array<i64: 1, 16, 32>}, {transform_indices = @transform_2, window_bounds = array<i64: 1, 16, 16>}, {transform_indices = @transform_3, window_bounds = array<i64: 1, 16, 16>}, {pipeline_mode = #tpu.pipeline_mode<synchronous>, transform_indices = @transform_4, window_bounds = array<i64: 32, 96>}, {pipeline_mode = #tpu.pipeline_mode<synchronous>, transform_indices = @transform_5, window_bounds = array<i64: 32, 32>}, {pipeline_mode = #tpu.pipeline_mode<synchronous>, transform_indices = @transform_6, window_bounds = array<i64: 32, 32>}, {pipeline_mode = #tpu.pipeline_mode<synchronous>, transform_indices = @transform_7, window_bounds = array<i64: 32, 64>}, {pipeline_mode = #tpu.pipeline_mode<synchronous>, transform_indices = @transform_8, window_bounds = array<i64: 32, 32>}, {pipeline_mode = #tpu.pipeline_mode<synchronous>, transform_indices = @transform_9, window_bounds = array<i64: 32, 64>}, {pipeline_mode = #tpu.pipeline_mode<synchronous>, transform_indices = @transform_10, window_bounds = array<i64: 1, 64>}, {pipeline_mode = #tpu.pipeline_mode<synchronous>, transform_indices = @transform_11, window_bounds = array<i64: 64, 32>}, {pipeline_mode = #tpu.pipeline_mode<synchronous>, transform_indices = @transform_12, window_bounds = array<i64: 9, 32>}, {transform_indices = @transform_13, window_bounds = array<i64: 1, 16, 32>}]} {
    %c0 = arith.constant 0 : index
    %c0_0 = arith.constant 0 : index
    %c0_1 = arith.constant 0 : index
    %0 = vector.load %arg1[%c0, %c0_0, %c0_1] : memref<1x16x32xf32, #tpu.memory_space<vmem>>, vector<1x16x32xf32>
    %1 = vector.shape_cast %0 : vector<1x16x32xf32> to vector<16x32xf32>
    %c0_2 = arith.constant 0 : index
    %c0_3 = arith.constant 0 : index
    %c0_4 = arith.constant 0 : index
    %2 = vector.load %arg2[%c0_2, %c0_3, %c0_4] : memref<1x16x32xf32, #tpu.memory_space<vmem>>, vector<1x16x32xf32>
    %3 = vector.shape_cast %2 : vector<1x16x32xf32> to vector<16x32xf32>
    %c0_5 = arith.constant 0 : index
    %c0_6 = arith.constant 0 : index
    %c0_7 = arith.constant 0 : index
    %4 = vector.load %arg3[%c0_5, %c0_6, %c0_7] : memref<1x16x16xf32, #tpu.memory_space<vmem>>, vector<1x16x16xf32>
    %5 = vector.shape_cast %4 : vector<1x16x16xf32> to vector<16x16xf32>
    %c0_8 = arith.constant 0 : index
    %c0_9 = arith.constant 0 : index
    %c0_10 = arith.constant 0 : index
    %6 = vector.load %arg4[%c0_8, %c0_9, %c0_10] : memref<1x16x16xf32, #tpu.memory_space<vmem>>, vector<1x16x16xf32>
    %7 = vector.shape_cast %6 : vector<1x16x16xf32> to vector<16x16xf32>
    %c0_11 = arith.constant 0 : index
    %c0_12 = arith.constant 0 : index
    %8 = vector.load %arg13[%c0_11, %c0_12] : memref<9x32xf32, #tpu.memory_space<vmem>>, vector<9x32xf32>
    %9 = vector.extract_strided_slice %8 {offsets = [0, 0], sizes = [1, 32], strides = [1, 1]} : vector<9x32xf32> to vector<1x32xf32>
    %10 = vector.extract_strided_slice %8 {offsets = [1, 0], sizes = [1, 32], strides = [1, 1]} : vector<9x32xf32> to vector<1x32xf32>
    %11 = vector.extract_strided_slice %8 {offsets = [2, 0], sizes = [1, 32], strides = [1, 1]} : vector<9x32xf32> to vector<1x32xf32>
    %12 = vector.extract_strided_slice %8 {offsets = [3, 0], sizes = [1, 32], strides = [1, 1]} : vector<9x32xf32> to vector<1x32xf32>
    %13 = vector.extract_strided_slice %8 {offsets = [4, 0], sizes = [1, 32], strides = [1, 1]} : vector<9x32xf32> to vector<1x32xf32>
    %14 = vector.extract_strided_slice %8 {offsets = [5, 0], sizes = [1, 32], strides = [1, 1]} : vector<9x32xf32> to vector<1x32xf32>
    %15 = vector.extract_strided_slice %8 {offsets = [6, 0], sizes = [1, 32], strides = [1, 1]} : vector<9x32xf32> to vector<1x32xf32>
    %16 = vector.extract_strided_slice %8 {offsets = [7, 0], sizes = [1, 32], strides = [1, 1]} : vector<9x32xf32> to vector<1x32xf32>
    %17 = vector.extract_strided_slice %8 {offsets = [8, 0], sizes = [1, 32], strides = [1, 1]} : vector<9x32xf32> to vector<1x32xf32>
    %c0_13 = arith.constant 0 : index
    %c0_14 = arith.constant 0 : index
    %18 = vector.load %arg11[%c0_13, %c0_14] : memref<1x64xf32, #tpu.memory_space<vmem>>, vector<1x64xf32>
    %cst = arith.constant dense<0.000000e+00> : vector<16xf32>
    %19 = vector.multi_reduction <add>, %1, %cst [1] : vector<16x32xf32> to vector<16xf32>
    %20 = vector.shape_cast %19 : vector<16xf32> to vector<16x1xf32>
    %cst_15 = arith.constant 3.200000e+01 : f32
    %21 = vector.broadcast %cst_15 : f32 to vector<16x1xf32>
    %22 = arith.divf %20, %21 : vector<16x1xf32>
    %23 = vector.broadcast %22 : vector<16x1xf32> to vector<16x32xf32>
    %24 = arith.subf %1, %23 : vector<16x32xf32>
    %25 = arith.mulf %24, %24 : vector<16x32xf32>
    %cst_16 = arith.constant dense<0.000000e+00> : vector<16xf32>
    %26 = vector.multi_reduction <add>, %25, %cst_16 [1] : vector<16x32xf32> to vector<16xf32>
    %27 = vector.shape_cast %26 : vector<16xf32> to vector<16x1xf32>
    %cst_17 = arith.constant 3.100000e+01 : f32
    %28 = vector.broadcast %cst_17 : f32 to vector<16x1xf32>
    %29 = arith.divf %27, %28 : vector<16x1xf32>
    %30 = math.sqrt %29 : vector<16x1xf32>
    %31 = vector.broadcast %22 : vector<16x1xf32> to vector<16x32xf32>
    %32 = arith.subf %1, %31 : vector<16x32xf32>
    %33 = vector.broadcast %12 : vector<1x32xf32> to vector<16x32xf32>
    %34 = arith.mulf %33, %32 : vector<16x32xf32>
    %cst_18 = arith.constant 9.99999997E-7 : f32
    %35 = vector.broadcast %cst_18 : f32 to vector<16x1xf32>
    %36 = arith.addf %30, %35 : vector<16x1xf32>
    %37 = vector.broadcast %36 : vector<16x1xf32> to vector<16x32xf32>
    %38 = arith.divf %34, %37 : vector<16x32xf32>
    %39 = vector.broadcast %13 : vector<1x32xf32> to vector<16x32xf32>
    %40 = arith.addf %38, %39 : vector<16x32xf32>
    %c0_19 = arith.constant 0 : index
    %c0_20 = arith.constant 0 : index
    %41 = vector.load %arg5[%c0_19, %c0_20] : memref<32x96xf32, #tpu.memory_space<vmem>>, vector<32x96xf32>
    %cst_21 = arith.constant dense<0.000000e+00> : vector<16x96xf32>
    %42 = tpu.matmul %40, %41, %cst_21 {dimension_numbers = #tpu.dot_dimension_numbers<[1], [0], [0], [1], [0, 0, 1, 1], [], []>} : vector<16x32xf32>, vector<32x96xf32>, vector<16x96xf32> -> vector<16x96xf32>
    %43 = vector.extract_strided_slice %42 {offsets = [0, 0], sizes = [16, 32], strides = [1, 1]} : vector<16x96xf32> to vector<16x32xf32>
    %44 = vector.extract_strided_slice %42 {offsets = [0, 32], sizes = [16, 32], strides = [1, 1]} : vector<16x96xf32> to vector<16x32xf32>
    %45 = vector.extract_strided_slice %42 {offsets = [0, 64], sizes = [16, 32], strides = [1, 1]} : vector<16x96xf32> to vector<16x32xf32>
    %c0_22 = arith.constant 0 : index
    %c0_23 = arith.constant 0 : index
    %46 = vector.load %arg6[%c0_22, %c0_23] : memref<32x32xf32, #tpu.memory_space<vmem>>, vector<32x32xf32>
    %47 = vector.extract_strided_slice %43 {offsets = [0, 0], sizes = [16, 8], strides = [1, 1]} : vector<16x32xf32> to vector<16x8xf32>
    %48 = vector.extract_strided_slice %44 {offsets = [0, 0], sizes = [16, 8], strides = [1, 1]} : vector<16x32xf32> to vector<16x8xf32>
    %cst_24 = arith.constant dense<0.000000e+00> : vector<16x16xf32>
    %49 = tpu.matmul %47, %48, %cst_24 {dimension_numbers = #tpu.dot_dimension_numbers<[1], [1], [0], [0], [0, 0, 1, 0], [], []>} : vector<16x8xf32>, vector<16x8xf32>, vector<16x16xf32> -> vector<16x16xf32>
    %cst_25 = arith.constant 0.353553385 : f32
    %50 = vector.broadcast %cst_25 : f32 to vector<16x16xf32>
    %51 = arith.mulf %49, %50 : vector<16x16xf32>
    %52 = arith.addf %51, %5 : vector<16x16xf32>
    %cst_26 = arith.constant dense<0xFF800000> : vector<16xf32>
    %53 = vector.multi_reduction <maximumf>, %52, %cst_26 [1] : vector<16x16xf32> to vector<16xf32>
    %54 = vector.shape_cast %53 : vector<16xf32> to vector<16x1xf32>
    %55 = vector.broadcast %54 : vector<16x1xf32> to vector<16x16xf32>
    %56 = arith.subf %52, %55 : vector<16x16xf32>
    %57 = math.exp %56 : vector<16x16xf32>
    %cst_27 = arith.constant dense<0.000000e+00> : vector<16xf32>
    %58 = vector.multi_reduction <add>, %57, %cst_27 [1] : vector<16x16xf32> to vector<16xf32>
    %59 = vector.shape_cast %58 : vector<16xf32> to vector<16x1xf32>
    %60 = tpu.reciprocal %59 : vector<16x1xf32> -> vector<16x1xf32>
    %61 = vector.broadcast %60 : vector<16x1xf32> to vector<16x16xf32>
    %62 = arith.mulf %57, %61 : vector<16x16xf32>
    %63 = vector.extract_strided_slice %45 {offsets = [0, 0], sizes = [16, 8], strides = [1, 1]} : vector<16x32xf32> to vector<16x8xf32>
    %cst_28 = arith.constant dense<0.000000e+00> : vector<16x8xf32>
    %64 = tpu.matmul %62, %63, %cst_28 {dimension_numbers = #tpu.dot_dimension_numbers<[1], [0], [0], [1], [0, 0, 1, 1], [], []>} : vector<16x16xf32>, vector<16x8xf32>, vector<16x8xf32> -> vector<16x8xf32>
    %65 = vector.extract_strided_slice %46 {offsets = [0, 0], sizes = [8, 32], strides = [1, 1]} : vector<32x32xf32> to vector<8x32xf32>
    %cst_29 = arith.constant dense<0.000000e+00> : vector<16x32xf32>
    %66 = tpu.matmul %64, %65, %cst_29 {dimension_numbers = #tpu.dot_dimension_numbers<[1], [0], [0], [1], [0, 0, 1, 1], [], []>} : vector<16x8xf32>, vector<8x32xf32>, vector<16x32xf32> -> vector<16x32xf32>
    %67 = vector.extract_strided_slice %43 {offsets = [0, 8], sizes = [16, 8], strides = [1, 1]} : vector<16x32xf32> to vector<16x8xf32>
    %68 = vector.extract_strided_slice %44 {offsets = [0, 8], sizes = [16, 8], strides = [1, 1]} : vector<16x32xf32> to vector<16x8xf32>
    %cst_30 = arith.constant dense<0.000000e+00> : vector<16x16xf32>
    %69 = tpu.matmul %67, %68, %cst_30 {dimension_numbers = #tpu.dot_dimension_numbers<[1], [1], [0], [0], [0, 0, 1, 0], [], []>} : vector<16x8xf32>, vector<16x8xf32>, vector<16x16xf32> -> vector<16x16xf32>
    %cst_31 = arith.constant 0.353553385 : f32
    %70 = vector.broadcast %cst_31 : f32 to vector<16x16xf32>
    %71 = arith.mulf %69, %70 : vector<16x16xf32>
    %72 = arith.addf %71, %5 : vector<16x16xf32>
    %cst_32 = arith.constant dense<0xFF800000> : vector<16xf32>
    %73 = vector.multi_reduction <maximumf>, %72, %cst_32 [1] : vector<16x16xf32> to vector<16xf32>
    %74 = vector.shape_cast %73 : vector<16xf32> to vector<16x1xf32>
    %75 = vector.broadcast %74 : vector<16x1xf32> to vector<16x16xf32>
    %76 = arith.subf %72, %75 : vector<16x16xf32>
    %77 = math.exp %76 : vector<16x16xf32>
    %cst_33 = arith.constant dense<0.000000e+00> : vector<16xf32>
    %78 = vector.multi_reduction <add>, %77, %cst_33 [1] : vector<16x16xf32> to vector<16xf32>
    %79 = vector.shape_cast %78 : vector<16xf32> to vector<16x1xf32>
    %80 = tpu.reciprocal %79 : vector<16x1xf32> -> vector<16x1xf32>
    %81 = vector.broadcast %80 : vector<16x1xf32> to vector<16x16xf32>
    %82 = arith.mulf %77, %81 : vector<16x16xf32>
    %83 = vector.extract_strided_slice %45 {offsets = [0, 8], sizes = [16, 8], strides = [1, 1]} : vector<16x32xf32> to vector<16x8xf32>
    %cst_34 = arith.constant dense<0.000000e+00> : vector<16x8xf32>
    %84 = tpu.matmul %82, %83, %cst_34 {dimension_numbers = #tpu.dot_dimension_numbers<[1], [0], [0], [1], [0, 0, 1, 1], [], []>} : vector<16x16xf32>, vector<16x8xf32>, vector<16x8xf32> -> vector<16x8xf32>
    %85 = vector.extract_strided_slice %46 {offsets = [8, 0], sizes = [8, 32], strides = [1, 1]} : vector<32x32xf32> to vector<8x32xf32>
    %cst_35 = arith.constant dense<0.000000e+00> : vector<16x32xf32>
    %86 = tpu.matmul %84, %85, %cst_35 {dimension_numbers = #tpu.dot_dimension_numbers<[1], [0], [0], [1], [0, 0, 1, 1], [], []>} : vector<16x8xf32>, vector<8x32xf32>, vector<16x32xf32> -> vector<16x32xf32>
    %87 = arith.addf %66, %86 : vector<16x32xf32>
    %88 = vector.extract_strided_slice %43 {offsets = [0, 16], sizes = [16, 8], strides = [1, 1]} : vector<16x32xf32> to vector<16x8xf32>
    %89 = vector.extract_strided_slice %44 {offsets = [0, 16], sizes = [16, 8], strides = [1, 1]} : vector<16x32xf32> to vector<16x8xf32>
    %cst_36 = arith.constant dense<0.000000e+00> : vector<16x16xf32>
    %90 = tpu.matmul %88, %89, %cst_36 {dimension_numbers = #tpu.dot_dimension_numbers<[1], [1], [0], [0], [0, 0, 1, 0], [], []>} : vector<16x8xf32>, vector<16x8xf32>, vector<16x16xf32> -> vector<16x16xf32>
    %cst_37 = arith.constant 0.353553385 : f32
    %91 = vector.broadcast %cst_37 : f32 to vector<16x16xf32>
    %92 = arith.mulf %90, %91 : vector<16x16xf32>
    %93 = arith.addf %92, %5 : vector<16x16xf32>
    %cst_38 = arith.constant dense<0xFF800000> : vector<16xf32>
    %94 = vector.multi_reduction <maximumf>, %93, %cst_38 [1] : vector<16x16xf32> to vector<16xf32>
    %95 = vector.shape_cast %94 : vector<16xf32> to vector<16x1xf32>
    %96 = vector.broadcast %95 : vector<16x1xf32> to vector<16x16xf32>
    %97 = arith.subf %93, %96 : vector<16x16xf32>
    %98 = math.exp %97 : vector<16x16xf32>
    %cst_39 = arith.constant dense<0.000000e+00> : vector<16xf32>
    %99 = vector.multi_reduction <add>, %98, %cst_39 [1] : vector<16x16xf32> to vector<16xf32>
    %100 = vector.shape_cast %99 : vector<16xf32> to vector<16x1xf32>
    %101 = tpu.reciprocal %100 : vector<16x1xf32> -> vector<16x1xf32>
    %102 = vector.broadcast %101 : vector<16x1xf32> to vector<16x16xf32>
    %103 = arith.mulf %98, %102 : vector<16x16xf32>
    %104 = vector.extract_strided_slice %45 {offsets = [0, 16], sizes = [16, 8], strides = [1, 1]} : vector<16x32xf32> to vector<16x8xf32>
    %cst_40 = arith.constant dense<0.000000e+00> : vector<16x8xf32>
    %105 = tpu.matmul %103, %104, %cst_40 {dimension_numbers = #tpu.dot_dimension_numbers<[1], [0], [0], [1], [0, 0, 1, 1], [], []>} : vector<16x16xf32>, vector<16x8xf32>, vector<16x8xf32> -> vector<16x8xf32>
    %106 = vector.extract_strided_slice %46 {offsets = [16, 0], sizes = [8, 32], strides = [1, 1]} : vector<32x32xf32> to vector<8x32xf32>
    %cst_41 = arith.constant dense<0.000000e+00> : vector<16x32xf32>
    %107 = tpu.matmul %105, %106, %cst_41 {dimension_numbers = #tpu.dot_dimension_numbers<[1], [0], [0], [1], [0, 0, 1, 1], [], []>} : vector<16x8xf32>, vector<8x32xf32>, vector<16x32xf32> -> vector<16x32xf32>
    %108 = arith.addf %87, %107 : vector<16x32xf32>
    %109 = vector.extract_strided_slice %43 {offsets = [0, 24], sizes = [16, 8], strides = [1, 1]} : vector<16x32xf32> to vector<16x8xf32>
    %110 = vector.extract_strided_slice %44 {offsets = [0, 24], sizes = [16, 8], strides = [1, 1]} : vector<16x32xf32> to vector<16x8xf32>
    %cst_42 = arith.constant dense<0.000000e+00> : vector<16x16xf32>
    %111 = tpu.matmul %109, %110, %cst_42 {dimension_numbers = #tpu.dot_dimension_numbers<[1], [1], [0], [0], [0, 0, 1, 0], [], []>} : vector<16x8xf32>, vector<16x8xf32>, vector<16x16xf32> -> vector<16x16xf32>
    %cst_43 = arith.constant 0.353553385 : f32
    %112 = vector.broadcast %cst_43 : f32 to vector<16x16xf32>
    %113 = arith.mulf %111, %112 : vector<16x16xf32>
    %114 = arith.addf %113, %5 : vector<16x16xf32>
    %cst_44 = arith.constant dense<0xFF800000> : vector<16xf32>
    %115 = vector.multi_reduction <maximumf>, %114, %cst_44 [1] : vector<16x16xf32> to vector<16xf32>
    %116 = vector.shape_cast %115 : vector<16xf32> to vector<16x1xf32>
    %117 = vector.broadcast %116 : vector<16x1xf32> to vector<16x16xf32>
    %118 = arith.subf %114, %117 : vector<16x16xf32>
    %119 = math.exp %118 : vector<16x16xf32>
    %cst_45 = arith.constant dense<0.000000e+00> : vector<16xf32>
    %120 = vector.multi_reduction <add>, %119, %cst_45 [1] : vector<16x16xf32> to vector<16xf32>
    %121 = vector.shape_cast %120 : vector<16xf32> to vector<16x1xf32>
    %122 = tpu.reciprocal %121 : vector<16x1xf32> -> vector<16x1xf32>
    %123 = vector.broadcast %122 : vector<16x1xf32> to vector<16x16xf32>
    %124 = arith.mulf %119, %123 : vector<16x16xf32>
    %125 = vector.extract_strided_slice %45 {offsets = [0, 24], sizes = [16, 8], strides = [1, 1]} : vector<16x32xf32> to vector<16x8xf32>
    %cst_46 = arith.constant dense<0.000000e+00> : vector<16x8xf32>
    %126 = tpu.matmul %124, %125, %cst_46 {dimension_numbers = #tpu.dot_dimension_numbers<[1], [0], [0], [1], [0, 0, 1, 1], [], []>} : vector<16x16xf32>, vector<16x8xf32>, vector<16x8xf32> -> vector<16x8xf32>
    %127 = vector.extract_strided_slice %46 {offsets = [24, 0], sizes = [8, 32], strides = [1, 1]} : vector<32x32xf32> to vector<8x32xf32>
    %cst_47 = arith.constant dense<0.000000e+00> : vector<16x32xf32>
    %128 = tpu.matmul %126, %127, %cst_47 {dimension_numbers = #tpu.dot_dimension_numbers<[1], [0], [0], [1], [0, 0, 1, 1], [], []>} : vector<16x8xf32>, vector<8x32xf32>, vector<16x32xf32> -> vector<16x32xf32>
    %129 = arith.addf %108, %128 : vector<16x32xf32>
    %130 = vector.broadcast %9 : vector<1x32xf32> to vector<16x32xf32>
    %131 = arith.addf %129, %130 : vector<16x32xf32>
    %132 = arith.addf %1, %131 : vector<16x32xf32>
    %cst_48 = arith.constant dense<0.000000e+00> : vector<16xf32>
    %133 = vector.multi_reduction <add>, %132, %cst_48 [1] : vector<16x32xf32> to vector<16xf32>
    %134 = vector.shape_cast %133 : vector<16xf32> to vector<16x1xf32>
    %cst_49 = arith.constant 3.200000e+01 : f32
    %135 = vector.broadcast %cst_49 : f32 to vector<16x1xf32>
    %136 = arith.divf %134, %135 : vector<16x1xf32>
    %137 = vector.broadcast %136 : vector<16x1xf32> to vector<16x32xf32>
    %138 = arith.subf %132, %137 : vector<16x32xf32>
    %139 = arith.mulf %138, %138 : vector<16x32xf32>
    %cst_50 = arith.constant dense<0.000000e+00> : vector<16xf32>
    %140 = vector.multi_reduction <add>, %139, %cst_50 [1] : vector<16x32xf32> to vector<16xf32>
    %141 = vector.shape_cast %140 : vector<16xf32> to vector<16x1xf32>
    %cst_51 = arith.constant 3.100000e+01 : f32
    %142 = vector.broadcast %cst_51 : f32 to vector<16x1xf32>
    %143 = arith.divf %141, %142 : vector<16x1xf32>
    %144 = math.sqrt %143 : vector<16x1xf32>
    %145 = vector.broadcast %136 : vector<16x1xf32> to vector<16x32xf32>
    %146 = arith.subf %132, %145 : vector<16x32xf32>
    %147 = vector.broadcast %14 : vector<1x32xf32> to vector<16x32xf32>
    %148 = arith.mulf %147, %146 : vector<16x32xf32>
    %cst_52 = arith.constant 9.99999997E-7 : f32
    %149 = vector.broadcast %cst_52 : f32 to vector<16x1xf32>
    %150 = arith.addf %144, %149 : vector<16x1xf32>
    %151 = vector.broadcast %150 : vector<16x1xf32> to vector<16x32xf32>
    %152 = arith.divf %148, %151 : vector<16x32xf32>
    %153 = vector.broadcast %15 : vector<1x32xf32> to vector<16x32xf32>
    %154 = arith.addf %152, %153 : vector<16x32xf32>
    %c0_53 = arith.constant 0 : index
    %c0_54 = arith.constant 0 : index
    %155 = vector.load %arg7[%c0_53, %c0_54] : memref<32x32xf32, #tpu.memory_space<vmem>>, vector<32x32xf32>
    %cst_55 = arith.constant dense<0.000000e+00> : vector<16x32xf32>
    %156 = tpu.matmul %154, %155, %cst_55 {dimension_numbers = #tpu.dot_dimension_numbers<[1], [0], [0], [1], [0, 0, 1, 1], [], []>} : vector<16x32xf32>, vector<32x32xf32>, vector<16x32xf32> -> vector<16x32xf32>
    %c0_56 = arith.constant 0 : index
    %c0_57 = arith.constant 0 : index
    %157 = vector.load %arg8[%c0_56, %c0_57] : memref<32x64xf32, #tpu.memory_space<vmem>>, vector<32x64xf32>
    %cst_58 = arith.constant dense<0.000000e+00> : vector<16x64xf32>
    %158 = tpu.matmul %3, %157, %cst_58 {dimension_numbers = #tpu.dot_dimension_numbers<[1], [0], [0], [1], [0, 0, 1, 1], [], []>} : vector<16x32xf32>, vector<32x64xf32>, vector<16x64xf32> -> vector<16x64xf32>
    %159 = vector.extract_strided_slice %158 {offsets = [0, 0], sizes = [16, 32], strides = [1, 1]} : vector<16x64xf32> to vector<16x32xf32>
    %160 = vector.extract_strided_slice %158 {offsets = [0, 32], sizes = [16, 32], strides = [1, 1]} : vector<16x64xf32> to vector<16x32xf32>
    %c0_59 = arith.constant 0 : index
    %c0_60 = arith.constant 0 : index
    %161 = vector.load %arg9[%c0_59, %c0_60] : memref<32x32xf32, #tpu.memory_space<vmem>>, vector<32x32xf32>
    %162 = vector.extract_strided_slice %156 {offsets = [0, 0], sizes = [16, 8], strides = [1, 1]} : vector<16x32xf32> to vector<16x8xf32>
    %163 = vector.extract_strided_slice %159 {offsets = [0, 0], sizes = [16, 8], strides = [1, 1]} : vector<16x32xf32> to vector<16x8xf32>
    %cst_61 = arith.constant dense<0.000000e+00> : vector<16x16xf32>
    %164 = tpu.matmul %162, %163, %cst_61 {dimension_numbers = #tpu.dot_dimension_numbers<[1], [1], [0], [0], [0, 0, 1, 0], [], []>} : vector<16x8xf32>, vector<16x8xf32>, vector<16x16xf32> -> vector<16x16xf32>
    %cst_62 = arith.constant 0.353553385 : f32
    %165 = vector.broadcast %cst_62 : f32 to vector<16x16xf32>
    %166 = arith.mulf %164, %165 : vector<16x16xf32>
    %167 = arith.addf %166, %7 : vector<16x16xf32>
    %cst_63 = arith.constant dense<0xFF800000> : vector<16xf32>
    %168 = vector.multi_reduction <maximumf>, %167, %cst_63 [1] : vector<16x16xf32> to vector<16xf32>
    %169 = vector.shape_cast %168 : vector<16xf32> to vector<16x1xf32>
    %170 = vector.broadcast %169 : vector<16x1xf32> to vector<16x16xf32>
    %171 = arith.subf %167, %170 : vector<16x16xf32>
    %172 = math.exp %171 : vector<16x16xf32>
    %cst_64 = arith.constant dense<0.000000e+00> : vector<16xf32>
    %173 = vector.multi_reduction <add>, %172, %cst_64 [1] : vector<16x16xf32> to vector<16xf32>
    %174 = vector.shape_cast %173 : vector<16xf32> to vector<16x1xf32>
    %175 = tpu.reciprocal %174 : vector<16x1xf32> -> vector<16x1xf32>
    %176 = vector.broadcast %175 : vector<16x1xf32> to vector<16x16xf32>
    %177 = arith.mulf %172, %176 : vector<16x16xf32>
    %178 = vector.extract_strided_slice %160 {offsets = [0, 0], sizes = [16, 8], strides = [1, 1]} : vector<16x32xf32> to vector<16x8xf32>
    %cst_65 = arith.constant dense<0.000000e+00> : vector<16x8xf32>
    %179 = tpu.matmul %177, %178, %cst_65 {dimension_numbers = #tpu.dot_dimension_numbers<[1], [0], [0], [1], [0, 0, 1, 1], [], []>} : vector<16x16xf32>, vector<16x8xf32>, vector<16x8xf32> -> vector<16x8xf32>
    %180 = vector.extract_strided_slice %161 {offsets = [0, 0], sizes = [8, 32], strides = [1, 1]} : vector<32x32xf32> to vector<8x32xf32>
    %cst_66 = arith.constant dense<0.000000e+00> : vector<16x32xf32>
    %181 = tpu.matmul %179, %180, %cst_66 {dimension_numbers = #tpu.dot_dimension_numbers<[1], [0], [0], [1], [0, 0, 1, 1], [], []>} : vector<16x8xf32>, vector<8x32xf32>, vector<16x32xf32> -> vector<16x32xf32>
    %182 = vector.extract_strided_slice %156 {offsets = [0, 8], sizes = [16, 8], strides = [1, 1]} : vector<16x32xf32> to vector<16x8xf32>
    %183 = vector.extract_strided_slice %159 {offsets = [0, 8], sizes = [16, 8], strides = [1, 1]} : vector<16x32xf32> to vector<16x8xf32>
    %cst_67 = arith.constant dense<0.000000e+00> : vector<16x16xf32>
    %184 = tpu.matmul %182, %183, %cst_67 {dimension_numbers = #tpu.dot_dimension_numbers<[1], [1], [0], [0], [0, 0, 1, 0], [], []>} : vector<16x8xf32>, vector<16x8xf32>, vector<16x16xf32> -> vector<16x16xf32>
    %cst_68 = arith.constant 0.353553385 : f32
    %185 = vector.broadcast %cst_68 : f32 to vector<16x16xf32>
    %186 = arith.mulf %184, %185 : vector<16x16xf32>
    %187 = arith.addf %186, %7 : vector<16x16xf32>
    %cst_69 = arith.constant dense<0xFF800000> : vector<16xf32>
    %188 = vector.multi_reduction <maximumf>, %187, %cst_69 [1] : vector<16x16xf32> to vector<16xf32>
    %189 = vector.shape_cast %188 : vector<16xf32> to vector<16x1xf32>
    %190 = vector.broadcast %189 : vector<16x1xf32> to vector<16x16xf32>
    %191 = arith.subf %187, %190 : vector<16x16xf32>
    %192 = math.exp %191 : vector<16x16xf32>
    %cst_70 = arith.constant dense<0.000000e+00> : vector<16xf32>
    %193 = vector.multi_reduction <add>, %192, %cst_70 [1] : vector<16x16xf32> to vector<16xf32>
    %194 = vector.shape_cast %193 : vector<16xf32> to vector<16x1xf32>
    %195 = tpu.reciprocal %194 : vector<16x1xf32> -> vector<16x1xf32>
    %196 = vector.broadcast %195 : vector<16x1xf32> to vector<16x16xf32>
    %197 = arith.mulf %192, %196 : vector<16x16xf32>
    %198 = vector.extract_strided_slice %160 {offsets = [0, 8], sizes = [16, 8], strides = [1, 1]} : vector<16x32xf32> to vector<16x8xf32>
    %cst_71 = arith.constant dense<0.000000e+00> : vector<16x8xf32>
    %199 = tpu.matmul %197, %198, %cst_71 {dimension_numbers = #tpu.dot_dimension_numbers<[1], [0], [0], [1], [0, 0, 1, 1], [], []>} : vector<16x16xf32>, vector<16x8xf32>, vector<16x8xf32> -> vector<16x8xf32>
    %200 = vector.extract_strided_slice %161 {offsets = [8, 0], sizes = [8, 32], strides = [1, 1]} : vector<32x32xf32> to vector<8x32xf32>
    %cst_72 = arith.constant dense<0.000000e+00> : vector<16x32xf32>
    %201 = tpu.matmul %199, %200, %cst_72 {dimension_numbers = #tpu.dot_dimension_numbers<[1], [0], [0], [1], [0, 0, 1, 1], [], []>} : vector<16x8xf32>, vector<8x32xf32>, vector<16x32xf32> -> vector<16x32xf32>
    %202 = arith.addf %181, %201 : vector<16x32xf32>
    %203 = vector.extract_strided_slice %156 {offsets = [0, 16], sizes = [16, 8], strides = [1, 1]} : vector<16x32xf32> to vector<16x8xf32>
    %204 = vector.extract_strided_slice %159 {offsets = [0, 16], sizes = [16, 8], strides = [1, 1]} : vector<16x32xf32> to vector<16x8xf32>
    %cst_73 = arith.constant dense<0.000000e+00> : vector<16x16xf32>
    %205 = tpu.matmul %203, %204, %cst_73 {dimension_numbers = #tpu.dot_dimension_numbers<[1], [1], [0], [0], [0, 0, 1, 0], [], []>} : vector<16x8xf32>, vector<16x8xf32>, vector<16x16xf32> -> vector<16x16xf32>
    %cst_74 = arith.constant 0.353553385 : f32
    %206 = vector.broadcast %cst_74 : f32 to vector<16x16xf32>
    %207 = arith.mulf %205, %206 : vector<16x16xf32>
    %208 = arith.addf %207, %7 : vector<16x16xf32>
    %cst_75 = arith.constant dense<0xFF800000> : vector<16xf32>
    %209 = vector.multi_reduction <maximumf>, %208, %cst_75 [1] : vector<16x16xf32> to vector<16xf32>
    %210 = vector.shape_cast %209 : vector<16xf32> to vector<16x1xf32>
    %211 = vector.broadcast %210 : vector<16x1xf32> to vector<16x16xf32>
    %212 = arith.subf %208, %211 : vector<16x16xf32>
    %213 = math.exp %212 : vector<16x16xf32>
    %cst_76 = arith.constant dense<0.000000e+00> : vector<16xf32>
    %214 = vector.multi_reduction <add>, %213, %cst_76 [1] : vector<16x16xf32> to vector<16xf32>
    %215 = vector.shape_cast %214 : vector<16xf32> to vector<16x1xf32>
    %216 = tpu.reciprocal %215 : vector<16x1xf32> -> vector<16x1xf32>
    %217 = vector.broadcast %216 : vector<16x1xf32> to vector<16x16xf32>
    %218 = arith.mulf %213, %217 : vector<16x16xf32>
    %219 = vector.extract_strided_slice %160 {offsets = [0, 16], sizes = [16, 8], strides = [1, 1]} : vector<16x32xf32> to vector<16x8xf32>
    %cst_77 = arith.constant dense<0.000000e+00> : vector<16x8xf32>
    %220 = tpu.matmul %218, %219, %cst_77 {dimension_numbers = #tpu.dot_dimension_numbers<[1], [0], [0], [1], [0, 0, 1, 1], [], []>} : vector<16x16xf32>, vector<16x8xf32>, vector<16x8xf32> -> vector<16x8xf32>
    %221 = vector.extract_strided_slice %161 {offsets = [16, 0], sizes = [8, 32], strides = [1, 1]} : vector<32x32xf32> to vector<8x32xf32>
    %cst_78 = arith.constant dense<0.000000e+00> : vector<16x32xf32>
    %222 = tpu.matmul %220, %221, %cst_78 {dimension_numbers = #tpu.dot_dimension_numbers<[1], [0], [0], [1], [0, 0, 1, 1], [], []>} : vector<16x8xf32>, vector<8x32xf32>, vector<16x32xf32> -> vector<16x32xf32>
    %223 = arith.addf %202, %222 : vector<16x32xf32>
    %224 = vector.extract_strided_slice %156 {offsets = [0, 24], sizes = [16, 8], strides = [1, 1]} : vector<16x32xf32> to vector<16x8xf32>
    %225 = vector.extract_strided_slice %159 {offsets = [0, 24], sizes = [16, 8], strides = [1, 1]} : vector<16x32xf32> to vector<16x8xf32>
    %cst_79 = arith.constant dense<0.000000e+00> : vector<16x16xf32>
    %226 = tpu.matmul %224, %225, %cst_79 {dimension_numbers = #tpu.dot_dimension_numbers<[1], [1], [0], [0], [0, 0, 1, 0], [], []>} : vector<16x8xf32>, vector<16x8xf32>, vector<16x16xf32> -> vector<16x16xf32>
    %cst_80 = arith.constant 0.353553385 : f32
    %227 = vector.broadcast %cst_80 : f32 to vector<16x16xf32>
    %228 = arith.mulf %226, %227 : vector<16x16xf32>
    %229 = arith.addf %228, %7 : vector<16x16xf32>
    %cst_81 = arith.constant dense<0xFF800000> : vector<16xf32>
    %230 = vector.multi_reduction <maximumf>, %229, %cst_81 [1] : vector<16x16xf32> to vector<16xf32>
    %231 = vector.shape_cast %230 : vector<16xf32> to vector<16x1xf32>
    %232 = vector.broadcast %231 : vector<16x1xf32> to vector<16x16xf32>
    %233 = arith.subf %229, %232 : vector<16x16xf32>
    %234 = math.exp %233 : vector<16x16xf32>
    %cst_82 = arith.constant dense<0.000000e+00> : vector<16xf32>
    %235 = vector.multi_reduction <add>, %234, %cst_82 [1] : vector<16x16xf32> to vector<16xf32>
    %236 = vector.shape_cast %235 : vector<16xf32> to vector<16x1xf32>
    %237 = tpu.reciprocal %236 : vector<16x1xf32> -> vector<16x1xf32>
    %238 = vector.broadcast %237 : vector<16x1xf32> to vector<16x16xf32>
    %239 = arith.mulf %234, %238 : vector<16x16xf32>
    %240 = vector.extract_strided_slice %160 {offsets = [0, 24], sizes = [16, 8], strides = [1, 1]} : vector<16x32xf32> to vector<16x8xf32>
    %cst_83 = arith.constant dense<0.000000e+00> : vector<16x8xf32>
    %241 = tpu.matmul %239, %240, %cst_83 {dimension_numbers = #tpu.dot_dimension_numbers<[1], [0], [0], [1], [0, 0, 1, 1], [], []>} : vector<16x16xf32>, vector<16x8xf32>, vector<16x8xf32> -> vector<16x8xf32>
    %242 = vector.extract_strided_slice %161 {offsets = [24, 0], sizes = [8, 32], strides = [1, 1]} : vector<32x32xf32> to vector<8x32xf32>
    %cst_84 = arith.constant dense<0.000000e+00> : vector<16x32xf32>
    %243 = tpu.matmul %241, %242, %cst_84 {dimension_numbers = #tpu.dot_dimension_numbers<[1], [0], [0], [1], [0, 0, 1, 1], [], []>} : vector<16x8xf32>, vector<8x32xf32>, vector<16x32xf32> -> vector<16x32xf32>
    %244 = arith.addf %223, %243 : vector<16x32xf32>
    %245 = vector.broadcast %10 : vector<1x32xf32> to vector<16x32xf32>
    %246 = arith.addf %244, %245 : vector<16x32xf32>
    %247 = arith.addf %132, %246 : vector<16x32xf32>
    %cst_85 = arith.constant dense<0.000000e+00> : vector<16xf32>
    %248 = vector.multi_reduction <add>, %247, %cst_85 [1] : vector<16x32xf32> to vector<16xf32>
    %249 = vector.shape_cast %248 : vector<16xf32> to vector<16x1xf32>
    %cst_86 = arith.constant 3.200000e+01 : f32
    %250 = vector.broadcast %cst_86 : f32 to vector<16x1xf32>
    %251 = arith.divf %249, %250 : vector<16x1xf32>
    %252 = vector.broadcast %251 : vector<16x1xf32> to vector<16x32xf32>
    %253 = arith.subf %247, %252 : vector<16x32xf32>
    %254 = arith.mulf %253, %253 : vector<16x32xf32>
    %cst_87 = arith.constant dense<0.000000e+00> : vector<16xf32>
    %255 = vector.multi_reduction <add>, %254, %cst_87 [1] : vector<16x32xf32> to vector<16xf32>
    %256 = vector.shape_cast %255 : vector<16xf32> to vector<16x1xf32>
    %cst_88 = arith.constant 3.100000e+01 : f32
    %257 = vector.broadcast %cst_88 : f32 to vector<16x1xf32>
    %258 = arith.divf %256, %257 : vector<16x1xf32>
    %259 = math.sqrt %258 : vector<16x1xf32>
    %260 = vector.broadcast %251 : vector<16x1xf32> to vector<16x32xf32>
    %261 = arith.subf %247, %260 : vector<16x32xf32>
    %262 = vector.broadcast %16 : vector<1x32xf32> to vector<16x32xf32>
    %263 = arith.mulf %262, %261 : vector<16x32xf32>
    %cst_89 = arith.constant 9.99999997E-7 : f32
    %264 = vector.broadcast %cst_89 : f32 to vector<16x1xf32>
    %265 = arith.addf %259, %264 : vector<16x1xf32>
    %266 = vector.broadcast %265 : vector<16x1xf32> to vector<16x32xf32>
    %267 = arith.divf %263, %266 : vector<16x32xf32>
    %268 = vector.broadcast %17 : vector<1x32xf32> to vector<16x32xf32>
    %269 = arith.addf %267, %268 : vector<16x32xf32>
    %c0_90 = arith.constant 0 : index
    %c0_91 = arith.constant 0 : index
    %270 = vector.load %arg10[%c0_90, %c0_91] : memref<32x64xf32, #tpu.memory_space<vmem>>, vector<32x64xf32>
    %cst_92 = arith.constant dense<0.000000e+00> : vector<16x64xf32>
    %271 = tpu.matmul %269, %270, %cst_92 {dimension_numbers = #tpu.dot_dimension_numbers<[1], [0], [0], [1], [0, 0, 1, 1], [], []>} : vector<16x32xf32>, vector<32x64xf32>, vector<16x64xf32> -> vector<16x64xf32>
    %272 = vector.broadcast %18 : vector<1x64xf32> to vector<16x64xf32>
    %273 = arith.addf %271, %272 : vector<16x64xf32>
    %cst_93 = arith.constant 0.000000e+00 : f32
    %274 = vector.broadcast %cst_93 : f32 to vector<16x64xf32>
    %275 = arith.maximumf %273, %274 : vector<16x64xf32>
    %c0_94 = arith.constant 0 : index
    %c0_95 = arith.constant 0 : index
    %276 = vector.load %arg12[%c0_94, %c0_95] : memref<64x32xf32, #tpu.memory_space<vmem>>, vector<64x32xf32>
    %cst_96 = arith.constant dense<0.000000e+00> : vector<16x32xf32>
    %277 = tpu.matmul %275, %276, %cst_96 {dimension_numbers = #tpu.dot_dimension_numbers<[1], [0], [0], [1], [0, 0, 1, 1], [], []>} : vector<16x64xf32>, vector<64x32xf32>, vector<16x32xf32> -> vector<16x32xf32>
    %278 = arith.addf %247, %277 : vector<16x32xf32>
    %279 = vector.broadcast %11 : vector<1x32xf32> to vector<16x32xf32>
    %280 = arith.addf %278, %279 : vector<16x32xf32>
    %c0_97 = arith.constant 0 : index
    %c0_98 = arith.constant 0 : index
    %c0_99 = arith.constant 0 : index
    %281 = vector.load %arg14[%c0_97, %c0_98, %c0_99] : memref<1x16x32xf32, #tpu.memory_space<vmem>>, vector<1x16x32xf32>
    %282 = vector.shape_cast %281 : vector<1x16x32xf32> to vector<16x32xf32>
    %283 = vector.shape_cast %280 : vector<16x32xf32> to vector<1x16x32xf32>
    tpu.vector_store %arg14[%c0_97, %c0_98, %c0_99], %283 {strides = array<i32>} : memref<1x16x32xf32, #tpu.memory_space<vmem>>, vector<1x16x32xf32>,
    return
  }
  func.func @transform_0(%arg0: i32) -> (i32, i32, i32) {
    %c0_i32 = arith.constant 0 : i32
    %c0_i32_0 = arith.constant 0 : i32
    %c0_i32_1 = arith.constant 0 : i32
    return %arg0, %c0_i32, %c0_i32_0 : i32, i32, i32
  }
  func.func @transform_1(%arg0: i32) -> (i32, i32, i32) {
    %c0_i32 = arith.constant 0 : i32
    %c0_i32_0 = arith.constant 0 : i32
    %c0_i32_1 = arith.constant 0 : i32
    return %arg0, %c0_i32, %c0_i32_0 : i32, i32, i32
  }
  func.func @transform_2(%arg0: i32) -> (i32, i32, i32) {
    %c0_i32 = arith.constant 0 : i32
    %c0_i32_0 = arith.constant 0 : i32
    %c0_i32_1 = arith.constant 0 : i32
    return %arg0, %c0_i32, %c0_i32_0 : i32, i32, i32
  }
  func.func @transform_3(%arg0: i32) -> (i32, i32, i32) {
    %c0_i32 = arith.constant 0 : i32
    %c0_i32_0 = arith.constant 0 : i32
    %c0_i32_1 = arith.constant 0 : i32
    return %arg0, %c0_i32, %c0_i32_0 : i32, i32, i32
  }
  func.func @transform_4(%arg0: i32) -> (i32, i32) {
    %c0_i32 = arith.constant 0 : i32
    %c0_i32_0 = arith.constant 0 : i32
    %c0_i32_1 = arith.constant 0 : i32
    return %c0_i32, %c0_i32_0 : i32, i32
  }
  func.func @transform_5(%arg0: i32) -> (i32, i32) {
    %c0_i32 = arith.constant 0 : i32
    %c0_i32_0 = arith.constant 0 : i32
    %c0_i32_1 = arith.constant 0 : i32
    return %c0_i32, %c0_i32_0 : i32, i32
  }
  func.func @transform_6(%arg0: i32) -> (i32, i32) {
    %c0_i32 = arith.constant 0 : i32
    %c0_i32_0 = arith.constant 0 : i32
    %c0_i32_1 = arith.constant 0 : i32
    return %c0_i32, %c0_i32_0 : i32, i32
  }
  func.func @transform_7(%arg0: i32) -> (i32, i32) {
    %c0_i32 = arith.constant 0 : i32
    %c0_i32_0 = arith.constant 0 : i32
    %c0_i32_1 = arith.constant 0 : i32
    return %c0_i32, %c0_i32_0 : i32, i32
  }
  func.func @transform_8(%arg0: i32) -> (i32, i32) {
    %c0_i32 = arith.constant 0 : i32
    %c0_i32_0 = arith.constant 0 : i32
    %c0_i32_1 = arith.constant 0 : i32
    return %c0_i32, %c0_i32_0 : i32, i32
  }
  func.func @transform_9(%arg0: i32) -> (i32, i32) {
    %c0_i32 = arith.constant 0 : i32
    %c0_i32_0 = arith.constant 0 : i32
    %c0_i32_1 = arith.constant 0 : i32
    return %c0_i32, %c0_i32_0 : i32, i32
  }
  func.func @transform_10(%arg0: i32) -> (i32, i32) {
    %c0_i32 = arith.constant 0 : i32
    %c0_i32_0 = arith.constant 0 : i32
    %c0_i32_1 = arith.constant 0 : i32
    return %c0_i32, %c0_i32_0 : i32, i32
  }
  func.func @transform_11(%arg0: i32) -> (i32, i32) {
    %c0_i32 = arith.constant 0 : i32
    %c0_i32_0 = arith.constant 0 : i32
    %c0_i32_1 = arith.constant 0 : i32
    return %c0_i32, %c0_i32_0 : i32, i32
  }
  func.func @transform_12(%arg0: i32) -> (i32, i32) {
    %c0_i32 = arith.constant 0 : i32
    %c0_i32_0 = arith.constant 0 : i32
    %c0_i32_1 = arith.constant 0 : i32
    return %c0_i32, %c0_i32_0 : i32, i32
  }
  func.func @transform_13(%arg0: i32) -> (i32, i32, i32) {
    %c0_i32 = arith.constant 0 : i32
    %c0_i32_0 = arith.constant 0 : i32
    %c0_i32_1 = arith.constant 0 : i32
    return %arg0, %c0_i32, %c0_i32_0 : i32, i32, i32
  }
}

</mosaic_0001>

<llo_original>
// kernel: tpu_custom_call.1
$region0: #{tpu_custom_call.1}
  #allocation0 [shape = 'u32[]', space=smem, size = 0x4, offset = 0x4, fixed_abs, tag = 'smem constant byte address 0x4 - core index']
  #allocation1 [shape = 'u32[144,128]{1,0:T(1,128)}', space=vmem, size = 0x12000, scoped, tag = 'internal scratch']
  %s0 = inlined_call_operand.hbm [shape: f32[1,16,32], index: 0, kind: input, shape index: {}]
  %s1 = inlined_call_operand.hbm [shape: f32[1,16,32], index: 1, kind: input, shape index: {}]
  %s2 = inlined_call_operand.hbm [shape: f32[1,16,16], index: 2, kind: input, shape index: {}]
  %s3 = inlined_call_operand.hbm [shape: f32[1,16,16], index: 3, kind: input, shape index: {}]
  %s4 = inlined_call_operand.vmem [shape: f32[32,96], index: 4, kind: input, shape index: {}]
  %s5 = inlined_call_operand.vmem [shape: f32[32,32], index: 5, kind: input, shape index: {}]
  %s6 = inlined_call_operand.vmem [shape: f32[32,32], index: 6, kind: input, shape index: {}]
  %s7 = inlined_call_operand.hbm [shape: f32[32,64], index: 7, kind: input, shape index: {}]
  %s8 = inlined_call_operand.hbm [shape: f32[32,32], index: 8, kind: input, shape index: {}]
  %s9 = inlined_call_operand.hbm [shape: f32[32,64], index: 9, kind: input, shape index: {}]
  %s10 = inlined_call_operand.vmem [shape: f32[1,64], index: 10, kind: input, shape index: {}]
  %s11 = inlined_call_operand.vmem [shape: f32[64,32], index: 11, kind: input, shape index: {}]
  %s12 = inlined_call_operand.hbm [shape: f32[9,32], index: 12, kind: input, shape index: {}]
  %s13 = inlined_call_operand.hbm [shape: f32[1,16,32], index: 13, kind: output, shape index: {}]
  %s14 = sld [smem:[#allocation0]]
  $region94: #{tpu_custom_call.1} parent=0
    _
  %s16 = ssub.s32 1, %s14
  %s17 = scalar_select 0, %s16, %s14
  $region1: #{tpu_custom_call.1} parent=0
    #allocation2 [shape = 'u8[8192]{0}', space=vmem, size = 0x2000, scoped, tag = 'input window, operand 0, single buffered']
    #allocation3 [shape = 's32[1]{0}', space=sflag, size = 0x4, scoped, tag = 'scoped memory for tpu_custom_call.1']
    #allocation4 [shape = 's32[1]{0}', space=sflag, size = 0x4, scoped, tag = 'scoped memory for tpu_custom_call.1']
    #allocation5 [shape = 'u8[8192]{0}', space=vmem, size = 0x2000, scoped, tag = 'input window, operand 1, single buffered']
    #allocation6 [shape = 's32[1]{0}', space=sflag, size = 0x4, scoped, tag = 'scoped memory for tpu_custom_call.1']
    #allocation7 [shape = 'u8[8192]{0}', space=vmem, size = 0x2000, scoped, tag = 'input window, operand 2, single buffered']
    #allocation8 [shape = 'u8[8192]{0}', space=vmem, size = 0x2000, scoped, tag = 'input window, operand 3, single buffered']
    #allocation9 [shape = 's32[1]{0}', space=sflag, size = 0x4, scoped, tag = 'scoped memory for tpu_custom_call.1']
    #allocation10 [shape = 'u8[16384]{0}', space=vmem, size = 0x4000, scoped, tag = 'input window, operand 7, single buffered']
    #allocation11 [shape = 'u8[16384]{0}', space=vmem, size = 0x4000, scoped, tag = 'input window, operand 8, single buffered']
    #allocation12 [shape = 's32[1]{0}', space=sflag, size = 0x4, scoped, tag = 'scoped memory for tpu_custom_call.1']
    #allocation13 [shape = 'u8[16384]{0}', space=vmem, size = 0x4000, scoped, tag = 'input window, operand 9, single buffered']
    #allocation14 [shape = 'u8[8192]{0}', space=vmem, size = 0x2000, scoped, tag = 'input window, operand 12, single buffered']
    #allocation15 [shape = 's32[1]{0}', space=sflag, size = 0x4, scoped, tag = 'scoped memory for tpu_custom_call.1']
    #allocation16 [shape = 'u8[8192]{0}', space=vmem, size = 0x2000, scoped, tag = 'output window, operand 0, single buffered']
    %18 = vsyncpa [#allocation3], 0
    %19 = vsyncpa [#allocation6], 0
    %20 = vsyncpa [#allocation9], 0
    %21 = vsyncpa [#allocation12], 0
    %22 = vsyncpa [#allocation15], 0
    %23 = vsyncpa [#allocation4], 0
    // Predicated region
    $region2: #{tpu_custom_call.1} parent=1 // pred_check
      _
    $region3: #{tpu_custom_call.1} parent=1 // pred_check_branch
      %25 = sbr.rel (0) target = $region5
    $region4: #{tpu_custom_call.1} parent=1 // pred_region
      %s27 = ssub.s32 256, 256
      %28 = vsyncadd [#allocation3], %s27
      %s29 = sshll.u32 [#allocation2], 4
      %s30 = int_to_ptr.vmem [resolvable:$true] %s29
      %35 = dma.hbm_to_vmem [thread:$0]  %s0, 256, %s30, [#allocation3], 128, 128, 8
    $region5: #{tpu_custom_call.1} parent=1 // pred_fallthru
      _
    // Predicated region
    $region6: #{tpu_custom_call.1} parent=1 // pred_check
      _
    $region7: #{tpu_custom_call.1} parent=1 // pred_check_branch
      %37 = sbr.rel (0) target = $region9
    $region8: #{tpu_custom_call.1} parent=1 // pred_region
      %s39 = ssub.s32 256, 256
      %40 = vsyncadd [#allocation6], %s39
      %s41 = sshll.u32 [#allocation5], 4
      %s42 = int_to_ptr.vmem [resolvable:$true] %s41
      %47 = dma.hbm_to_vmem [thread:$0]  %s1, 256, %s42, [#allocation6], 128, 128, 8
    $region9: #{tpu_custom_call.1} parent=1 // pred_fallthru
      _
    // Predicated region
    $region10: #{tpu_custom_call.1} parent=1 // pred_check
      _
    $region11: #{tpu_custom_call.1} parent=1 // pred_check_branch
      %49 = sbr.rel (0) target = $region13
    $region12: #{tpu_custom_call.1} parent=1 // pred_region
      %s51 = ssub.s32 256, 256
      %52 = vsyncadd [#allocation6], %s51
      %s53 = sshll.u32 [#allocation7], 4
      %s54 = int_to_ptr.vmem [resolvable:$true] %s53
      %59 = dma.hbm_to_vmem [thread:$0]  %s2, 256, %s54, [#allocation6], 128, 128, 8
    $region13: #{tpu_custom_call.1} parent=1 // pred_fallthru
      _
    // Predicated region
    $region14: #{tpu_custom_call.1} parent=1 // pred_check
      _
    $region15: #{tpu_custom_call.1} parent=1 // pred_check_branch
      %61 = sbr.rel (0) target = $region17
    $region16: #{tpu_custom_call.1} parent=1 // pred_region
      %s63 = ssub.s32 256, 256
      %64 = vsyncadd [#allocation9], %s63
      %s65 = sshll.u32 [#allocation8], 4
      %s66 = int_to_ptr.vmem [resolvable:$true] %s65
      %71 = dma.hbm_to_vmem [thread:$0]  %s3, 256, %s66, [#allocation9], 128, 128, 8
    $region17: #{tpu_custom_call.1} parent=1 // pred_fallthru
      _
    // Predicated region
    $region18: #{tpu_custom_call.1} parent=1 // pred_check
      _
    $region19: #{tpu_custom_call.1} parent=1 // pred_check_branch
      %73 = sbr.rel (0) target = $region21
    $region20: #{tpu_custom_call.1} parent=1 // pred_region
      _
    $region21: #{tpu_custom_call.1} parent=1 // pred_fallthru
      _
    // Predicated region
    $region22: #{tpu_custom_call.1} parent=1 // pred_check
      _
    $region23: #{tpu_custom_call.1} parent=1 // pred_check_branch
      %75 = sbr.rel (0) target = $region25
    $region24: #{tpu_custom_call.1} parent=1 // pred_region
      _
    $region25: #{tpu_custom_call.1} parent=1 // pred_fallthru
      _
    // Predicated region
    $region26: #{tpu_custom_call.1} parent=1 // pred_check
      _
    $region27: #{tpu_custom_call.1} parent=1 // pred_check_branch
      %77 = sbr.rel (0) target = $region29
    $region28: #{tpu_custom_call.1} parent=1 // pred_region
      _
    $region29: #{tpu_custom_call.1} parent=1 // pred_fallthru
      _
    // Predicated region
    $region30: #{tpu_custom_call.1} parent=1 // pred_check
      _
    $region31: #{tpu_custom_call.1} parent=1 // pred_check_branch
      %79 = sbr.rel (0) target = $region33
    $region32: #{tpu_custom_call.1} parent=1 // pred_region
      %s81 = ssub.s32 512, 512
      %82 = vsyncadd [#allocation9], %s81
      %s83 = sshll.u32 [#allocation10], 4
      %s84 = int_to_ptr.vmem [resolvable:$true] %s83
      %89 = dma.hbm_to_vmem [thread:$0]  %s7, 512, %s84, [#allocation9], 128, 128, 8
    $region33: #{tpu_custom_call.1} parent=1 // pred_fallthru
      _
    // Predicated region
    $region34: #{tpu_custom_call.1} parent=1 // pred_check
      _
    $region35: #{tpu_custom_call.1} parent=1 // pred_check_branch
      %91 = sbr.rel (0) target = $region37
    $region36: #{tpu_custom_call.1} parent=1 // pred_region
      %s93 = ssub.s32 512, 512
      %94 = vsyncadd [#allocation12], %s93
      %s95 = sshll.u32 [#allocation11], 4
      %s96 = int_to_ptr.vmem [resolvable:$true] %s95
      %101 = dma.hbm_to_vmem [thread:$0]  %s8, 512, %s96, [#allocation12], 128, 128, 8
    $region37: #{tpu_custom_call.1} parent=1 // pred_fallthru
      _
    // Predicated region
    $region38: #{tpu_custom_call.1} parent=1 // pred_check
      _
    $region39: #{tpu_custom_call.1} parent=1 // pred_check_branch
      %103 = sbr.rel (0) target = $region41
    $region40: #{tpu_custom_call.1} parent=1 // pred_region
      %s105 = ssub.s32 512, 512
      %106 = vsyncadd [#allocation12], %s105
      %s107 = sshll.u32 [#allocation13], 4
      %s108 = int_to_ptr.vmem [resolvable:$true] %s107
      %113 = dma.hbm_to_vmem [thread:$0]  %s9, 512, %s108, [#allocation12], 128, 128, 8
    $region41: #{tpu_custom_call.1} parent=1 // pred_fallthru
      _
    // Predicated region
    $region42: #{tpu_custom_call.1} parent=1 // pred_check
      _
    $region43: #{tpu_custom_call.1} parent=1 // pred_check_branch
      %115 = sbr.rel (0) target = $region45
    $region44: #{tpu_custom_call.1} parent=1 // pred_region
      _
    $region45: #{tpu_custom_call.1} parent=1 // pred_fallthru
      _
    // Predicated region
    $region46: #{tpu_custom_call.1} parent=1 // pred_check
      _
    $region47: #{tpu_custom_call.1} parent=1 // pred_check_branch
      %117 = sbr.rel (0) target = $region49
    $region48: #{tpu_custom_call.1} parent=1 // pred_region
      _
    $region49: #{tpu_custom_call.1} parent=1 // pred_fallthru
      _
    // Predicated region
    $region50: #{tpu_custom_call.1} parent=1 // pred_check
      _
    $region51: #{tpu_custom_call.1} parent=1 // pred_check_branch
      %119 = sbr.rel (0) target = $region53
    $region52: #{tpu_custom_call.1} parent=1 // pred_region
      %s121 = ssub.s32 256, 256
      %122 = vsyncadd [#allocation15], %s121
      %s123 = sshll.u32 [#allocation14], 4
      %s124 = int_to_ptr.vmem [resolvable:$true] %s123
      %129 = dma.hbm_to_vmem [thread:$0]  %s12, 256, %s124, [#allocation15], 128, 128, 8
    $region53: #{tpu_custom_call.1} parent=1 // pred_fallthru
      _
    // Predicated region
    $region54: #{tpu_custom_call.1} parent=1 // pred_check
      _
    $region55: #{tpu_custom_call.1} parent=1 // pred_check_branch
      %131 = sbr.rel (0) target = $region57
    $region56: #{tpu_custom_call.1} parent=1 // pred_region
      %132 = dma.done [#allocation3], 256
    $region57: #{tpu_custom_call.1} parent=1 // pred_fallthru
      _
    // Predicated region
    $region58: #{tpu_custom_call.1} parent=1 // pred_check
      _
    $region59: #{tpu_custom_call.1} parent=1 // pred_check_branch
      %134 = sbr.rel (0) target = $region61
    $region60: #{tpu_custom_call.1} parent=1 // pred_region
      %135 = dma.done [#allocation6], 256
    $region61: #{tpu_custom_call.1} parent=1 // pred_fallthru
      _
    // Predicated region
    $region62: #{tpu_custom_call.1} parent=1 // pred_check
      _
    $region63: #{tpu_custom_call.1} parent=1 // pred_check_branch
      %137 = sbr.rel (0) target = $region65
    $region64: #{tpu_custom_call.1} parent=1 // pred_region
      %138 = dma.done [#allocation6], 256
    $region65: #{tpu_custom_call.1} parent=1 // pred_fallthru
      _
    // Predicated region
    $region66: #{tpu_custom_call.1} parent=1 // pred_check
      _
    $region67: #{tpu_custom_call.1} parent=1 // pred_check_branch
      %140 = sbr.rel (0) target = $region69
    $region68: #{tpu_custom_call.1} parent=1 // pred_region
      %141 = dma.done [#allocation9], 256
    $region69: #{tpu_custom_call.1} parent=1 // pred_fallthru
      _
    // Predicated region
    $region70: #{tpu_custom_call.1} parent=1 // pred_check
      _
    $region71: #{tpu_custom_call.1} parent=1 // pred_check_branch
      %143 = sbr.rel (0) target = $region73
    $region72: #{tpu_custom_call.1} parent=1 // pred_region
      %144 = dma.done [#allocation9], 512
    $region73: #{tpu_custom_call.1} parent=1 // pred_fallthru
      _
    // Predicated region
    $region74: #{tpu_custom_call.1} parent=1 // pred_check
      _
    $region75: #{tpu_custom_call.1} parent=1 // pred_check_branch
      %146 = sbr.rel (0) target = $region77
    $region76: #{tpu_custom_call.1} parent=1 // pred_region
      %147 = dma.done [#allocation12], 512
    $region77: #{tpu_custom_call.1} parent=1 // pred_fallthru
      _
    // Predicated region
    $region78: #{tpu_custom_call.1} parent=1 // pred_check
      _
    $region79: #{tpu_custom_call.1} parent=1 // pred_check_branch
      %149 = sbr.rel (0) target = $region81
    $region80: #{tpu_custom_call.1} parent=1 // pred_region
      %150 = dma.done [#allocation12], 512
    $region81: #{tpu_custom_call.1} parent=1 // pred_fallthru
      _
    // Predicated region
    $region82: #{tpu_custom_call.1} parent=1 // pred_check
      _
    $region83: #{tpu_custom_call.1} parent=1 // pred_check_branch
      %152 = sbr.rel (0) target = $region85
    $region84: #{tpu_custom_call.1} parent=1 // pred_region
      %153 = dma.done [#allocation15], 256
    $region85: #{tpu_custom_call.1} parent=1 // pred_fallthru
      _
    %v154 = vld [vmem:[#allocation2] sm:$0xff]
    %v155 = vld [vmem:[#allocation2 + $0x8] sm:$0xff]
    %v156 = vld [vmem:[#allocation5] sm:$0xff]
    %v157 = vld [vmem:[#allocation5 + $0x8] sm:$0xff]
    %v158 = vld [vmem:[#allocation7] sm:$0xff]
    %v159 = vld [vmem:[#allocation7 + $0x8] sm:$0xff]
    %v160 = vld [vmem:[#allocation8] sm:$0xff]
    %v161 = vld [vmem:[#allocation8 + $0x8] sm:$0xff]
    %v162 = vld [vmem:[#allocation14] sm:$0xff]
    %v163 = vld [vmem:[#allocation14 + $0x8] sm:$0x1]
    %v164 = vld [vmem:[%s10] sm:$0x1]
    %vm165 = vcmask 261120
    %v166 = vsel %vm165, %v154, 0.0
    %167 = vadd.xlane.f32.xlu0 %v166
    %v168 = vpop.xlane.xlu0 %167
    %v169 = vsel %vm165, %v155, 0.0
    %170 = vadd.xlane.f32.xlu0 %v169
    %v171 = vpop.xlane.xlu0 %170
    %v172 = vrcp.pop 32.0
    %v173 = vmul.f32 %v168, %v172
    %v174 = vmul.f32 %v171, %v172
    %v175 = vsub.f32 %v154, %v173
    %v176 = vsub.f32 %v155, %v174
    %v177 = vmul.f32 %v175, %v175
    %v178 = vmul.f32 %v176, %v176
    %v179 = vsel %vm165, %v177, 0.0
    %180 = vadd.xlane.f32.xlu0 %v179
    %v181 = vpop.xlane.xlu0 %180
    %v182 = vsel %vm165, %v178, 0.0
    %183 = vadd.xlane.f32.xlu0 %v182
    %v184 = vpop.xlane.xlu0 %183
    %v185 = vrcp.pop 31.0
    %v186 = vmul.f32 %v181, %v185
    %v187 = vmul.f32 %v184, %v185
    %v188 = vrsqrt.pop %v186
    %v189 = vmul.f32 %v186, %v188
    %vm190 = vcmp.eq.f32.partialorder %v186, inf
    %v191 = vsel %vm190, %v186, %v189
    %vm192 = vcmp.eq.f32.partialorder %v186, 0.0
    %v193 = vand.u32 %v186, 2147483648
    %v194 = vsel %vm192, %v193, %v191
    %v195 = vrsqrt.pop %v187
    %v196 = vmul.f32 %v187, %v195
    %vm197 = vcmp.eq.f32.partialorder %v187, inf
    %v198 = vsel %vm197, %v187, %v196
    %vm199 = vcmp.eq.f32.partialorder %v187, 0.0
    %v200 = vand.u32 %v187, 2147483648
    %v201 = vsel %vm199, %v200, %v198
    %v202 = vlaneseq
    %v203 = vshrl.u32 %v202, 7
    %v204 = vsub.s32 3, %v203
    %v205 = vrot.slane %v162, %v204
    %v206 = vmul.f32 %v205, %v175
    %v207 = vmul.f32 %v205, %v176
    %v208 = vadd.f32 %v194, 1e-06
    %v209 = vadd.f32 %v201, 1e-06
    %v210 = vrcp.pop %v208
    %v211 = vmul.f32 %v206, %v210
    %v212 = vrcp.pop %v209
    %v213 = vmul.f32 %v207, %v212
    %v214 = vlaneseq
    %v215 = vshrl.u32 %v214, 7
    %v216 = vsub.s32 4, %v215
    %v217 = vrot.slane %v162, %v216
    %v218 = vadd.f32 %v211, %v217
    %v219 = vadd.f32 %v213, %v217
    %v220 = vld [vmem:[%s4] sm:$0xff]
    %v221 = vld [vmem:[%s4 + $0x8] sm:$0xff]
    %v222 = vld [vmem:[%s4 + $0x10] sm:$0xff]
    %v223 = vld [vmem:[%s4 + $0x18] sm:$0xff]
    %v225 = vsel %vm165, %v218, 0
    %v228 = vsel %vm165, %v219, 0
    %230 = vmatprep.subr.mxu0 0.0
    %231 = vmatpush1.msra.mxu0 %v220
    %232 = vmatprep.subr.mxu0 0.0
    %233 = vmatpush1.msra.mxu0 %v221
    %234 = vmatprep.subr.mxu0 0.0
    %235 = vmatpush1.msra.mxu0 %v222
    %236 = vmatprep.subr.mxu0 0.0
    %237 = vmatpush1.msra.mxu0 %v223
    %238 = vmatprep.subr.mxu0 0.0
    %239 = vmatpush1.msra.mxu0 0.0
    %240 = vmatprep.subr.mxu0 0.0
    %241 = vmatpush1.msra.mxu0 0.0
    %242 = vmatprep.subr.mxu0 0.0
    %243 = vmatpush1.msra.mxu0 0.0
    %244 = vmatprep.subr.mxu0 0.0
    %245 = vmatpush1.msra.mxu0 0.0
    %246 = vmatprep.subr.mxu0 0.0
    %247 = vmatpush1.msra.mxu0 0.0
    %248 = vmatprep.subr.mxu0 0.0
    %249 = vmatpush1.msra.mxu0 0.0
    %250 = vmatprep.subr.mxu0 0.0
    %251 = vmatpush1.msra.mxu0 0.0
    %252 = vmatprep.subr.mxu0 0.0
    %253 = vmatpush1.msra.mxu0 0.0
    %254 = vmatprep.subr.mxu0 0.0
    %255 = vmatpush1.msra.mxu0 0.0
    %256 = vmatprep.subr.mxu0 0.0
    %257 = vmatpush1.msra.mxu0 0.0
    %258 = vmatprep.subr.mxu0 0.0
    %259 = vmatpush1.msra.mxu0 0.0
    %260 = vmatprep.subr.mxu0 0.0
    %261 = vmatpush1.msra.mxu0 0.0
    %262 = vmatprep.subr.mxu0 0.0
    %263 = vmatpush1.msra.mxu0 0.0
    %264 = vmatprep.subr.mxu0 0.0
    %265 = vmatpush1.msra.mxu0 0.0
    %266 = vmatprep.subr.mxu0 0.0
    %267 = vmatpush1.msra.mxu0 0.0
    %268 = vmatprep.subr.mxu0 0.0
    %269 = vmatpush1.msra.mxu0 0.0
    %270 = vmatprep.subr.mxu0 0.0
    %271 = vmatpush1.msra.mxu0 0.0
    %272 = vmatprep.subr.mxu0 0.0
    %273 = vmatpush1.msra.mxu0 0.0
    %274 = vmatprep.subr.mxu0 0.0
    %275 = vmatpush1.msra.mxu0 0.0
    %276 = vmatprep.subr.mxu0 0.0
    %277 = vmatpush1.msra.mxu0 0.0
    %278 = vmatprep.subr.mxu0 0.0
    %279 = vmatpush1.msra.mxu0 0.0
    %280 = vmatprep.subr.mxu0 0.0
    %281 = vmatpush1.msra.mxu0 0.0
    %282 = vmatprep.subr.mxu0 0.0
    %283 = vmatpush1.msra.mxu0 0.0
    %284 = vmatprep.subr.mxu0 0.0
    %285 = vmatpush1.msra.mxu0 0.0
    %286 = vmatprep.subr.mxu0 0.0
    %287 = vmatpush1.msra.mxu0 0.0
    %288 = vmatprep.subr.mxu0 0.0
    %289 = vmatpush1.msra.mxu0 0.0
    %290 = vmatprep.subr.mxu0 0.0
    %291 = vmatpush1.msra.mxu0 0.0
    %292 = vmatprep.subr.mxu0 0.0
    %293 = vmatpush1.msra.mxu0 0.0
    %294 = vmatprep.mubr.f32.mxu0 0.0
    %295 = vmatmul.mubr.f32.gmra.mrb[0].mxu0 %v225
    %v296 = vpop.f32.mrb[0].mxu0
    %v297 = vadd.f32 0.0, %v296
    %v298 = vpop.f32.mrb[0].mxu0
    %299 = vmatprep.mubr.f32.mxu0 0.0
    %300 = vmatmul.mubr.f32.gmra.mrb[0].mxu0 %v228
    %v301 = vpop.f32.mrb[0].mxu0
    %v302 = vadd.f32 0.0, %v301
    %v303 = vpop.f32.mrb[0].mxu0
    %304 = vdwg.mxu0
    %v305 = vld [vmem:[%s5] sm:$0xff]
    %v306 = vld [vmem:[%s5 + $0x8] sm:$0xff]
    %v307 = vld [vmem:[%s5 + $0x10] sm:$0xff]
    %v308 = vld [vmem:[%s5 + $0x18] sm:$0xff]
    %311 = vrot.lane.b32.xlu0 %v297, 96
    %v312 = vpop.permute.xlu0 %311
    %313 = vrot.lane.b32.xlu0 %v302, 96
    %v314 = vpop.permute.xlu0 %313
    %vm315 = vcmask 64512
    %v316 = vsel %vm315, %v297, 0
    %v318 = vsel %vm315, %v302, 0
    %v320 = vsel %vm315, %v312, 0
    %v322 = vsel %vm315, %v314, 0
    %324 = vmatprep.subr.mxu0 0.0
    %325 = vmatpush1.xpose.msra.mxu0 %v320
    %326 = vmatprep.subr.mxu0 0.0
    %327 = vmatpush1.xpose.msra.mxu0 %v322
    %328 = vmatprep.subr.mxu0 0.0
    %329 = vmatpush1.xpose.msra.mxu0 0.0
    %330 = vmatprep.subr.mxu0 0.0
    %331 = vmatpush1.xpose.msra.mxu0 0.0
    %332 = vmatprep.subr.mxu0 0.0
    %333 = vmatpush1.xpose.msra.mxu0 0.0
    %334 = vmatprep.subr.mxu0 0.0
    %335 = vmatpush1.xpose.msra.mxu0 0.0
    %336 = vmatprep.subr.mxu0 0.0
    %337 = vmatpush1.xpose.msra.mxu0 0.0
    %338 = vmatprep.subr.mxu0 0.0
    %339 = vmatpush1.xpose.msra.mxu0 0.0
    %340 = vmatprep.subr.mxu0 0.0
    %341 = vmatpush1.xpose.msra.mxu0 0.0
    %342 = vmatprep.subr.mxu0 0.0
    %343 = vmatpush1.xpose.msra.mxu0 0.0
    %344 = vmatprep.subr.mxu0 0.0
    %345 = vmatpush1.xpose.msra.mxu0 0.0
    %346 = vmatprep.subr.mxu0 0.0
    %347 = vmatpush1.xpose.msra.mxu0 0.0
    %348 = vmatprep.subr.mxu0 0.0
    %349 = vmatpush1.xpose.msra.mxu0 0.0
    %350 = vmatprep.subr.mxu0 0.0
    %351 = vmatpush1.xpose.msra.mxu0 0.0
    %352 = vmatprep.subr.mxu0 0.0
    %353 = vmatpush1.xpose.msra.mxu0 0.0
    %354 = vmatprep.subr.mxu0 0.0
    %355 = vmatpush1.xpose.msra.mxu0 0.0
    %356 = vmatprep.subr.mxu0 0.0
    %357 = vmatpush1.xpose.msra.mxu0 0.0
    %358 = vmatprep.subr.mxu0 0.0
    %359 = vmatpush1.xpose.msra.mxu0 0.0
    %360 = vmatprep.subr.mxu0 0.0
    %361 = vmatpush1.xpose.msra.mxu0 0.0
    %362 = vmatprep.subr.mxu0 0.0
    %363 = vmatpush1.xpose.msra.mxu0 0.0
    %364 = vmatprep.subr.mxu0 0.0
    %365 = vmatpush1.xpose.msra.mxu0 0.0
    %366 = vmatprep.subr.mxu0 0.0
    %367 = vmatpush1.xpose.msra.mxu0 0.0
    %368 = vmatprep.subr.mxu0 0.0
    %369 = vmatpush1.xpose.msra.mxu0 0.0
    %370 = vmatprep.subr.mxu0 0.0
    %371 = vmatpush1.xpose.msra.mxu0 0.0
    %372 = vmatprep.subr.mxu0 0.0
    %373 = vmatpush1.xpose.msra.mxu0 0.0
    %374 = vmatprep.subr.mxu0 0.0
    %375 = vmatpush1.xpose.msra.mxu0 0.0
    %376 = vmatprep.subr.mxu0 0.0
    %377 = vmatpush1.xpose.msra.mxu0 0.0
    %378 = vmatprep.subr.mxu0 0.0
    %379 = vmatpush1.xpose.msra.mxu0 0.0
    %380 = vmatprep.subr.mxu0 0.0
    %381 = vmatpush1.xpose.msra.mxu0 0.0
    %382 = vmatprep.subr.mxu0 0.0
    %383 = vmatpush1.xpose.msra.mxu0 0.0
    %384 = vmatprep.subr.mxu0 0.0
    %385 = vmatpush1.xpose.msra.mxu0 0.0
    %386 = vmatprep.subr.mxu0 0.0
    %387 = vmatpush1.xpose.msra.mxu0 0.0
    %388 = vmatprep.mubr.f32.mxu0 0.0
    %389 = vmatmul.mubr.f32.gmra.mrb[0].mxu0 %v316
    %v390 = vpop.f32.mrb[0].mxu0
    %v391 = vadd.f32 0.0, %v390
    %v392 = vpop.f32.mrb[0].mxu0
    %393 = vmatprep.mubr.f32.mxu0 0.0
    %394 = vmatmul.mubr.f32.gmra.mrb[0].mxu0 %v318
    %v395 = vpop.f32.mrb[0].mxu0
    %v396 = vadd.f32 0.0, %v395
    %v397 = vpop.f32.mrb[0].mxu0
    %398 = vdwg.mxu0
    %v399 = vmul.f32 %v391, 0.35355338
    %v400 = vmul.f32 %v396, 0.35355338
    %v401 = vadd.f32 %v399, %v158
    %v402 = vadd.f32 %v400, %v159
    %vm403 = vcmask 130048
    %v404 = vsel %vm403, %v401, -inf
    %405 = vmax.xlane.f32.xlu0 %v404
    %v406 = vpop.xlane.xlu0 %405
    %v407 = vsel %vm403, %v402, -inf
    %408 = vmax.xlane.f32.xlu0 %v407
    %v409 = vpop.xlane.xlu0 %408
    %v410 = vsub.f32 %v401, %v406
    %v411 = vsub.f32 %v402, %v409
    %v412 = vmul.f32 %v410, 1.442695
    %v413 = vpow.pop %v412
    %v414 = vmul.f32 %v411, 1.442695
    %v415 = vpow.pop %v414
    %v416 = vsel %vm403, %v413, 0.0
    %417 = vadd.xlane.f32.xlu0 %v416
    %v418 = vpop.xlane.xlu0 %417
    %v419 = vsel %vm403, %v415, 0.0
    %420 = vadd.xlane.f32.xlu0 %v419
    %v421 = vpop.xlane.xlu0 %420
    %v422 = vrcp.pop %v418
    %v423 = vrcp.pop %v421
    %v424 = vmul.f32 %v413, %v422
    %v425 = vmul.f32 %v415, %v423
    %426 = vrot.lane.b32.xlu0 %v297, 64
    %v427 = vpop.permute.xlu0 %426
    %428 = vrot.lane.b32.xlu0 %v302, 64
    %v429 = vpop.permute.xlu0 %428
    %v433 = vsel %vm403, %v424, 0
    %v436 = vsel %vm403, %v425, 0
    %438 = vmatprep.subr.mxu0 0.0
    %439 = vmatpush1.msra.mxu0 %v427
    %440 = vmatprep.subr.mxu0 0.0
    %441 = vmatpush1.msra.mxu0 %v429
    %442 = vmatprep.subr.mxu0 0.0
    %443 = vmatpush1.msra.mxu0 0.0
    %444 = vmatprep.subr.mxu0 0.0
    %445 = vmatpush1.msra.mxu0 0.0
    %446 = vmatprep.subr.mxu0 0.0
    %447 = vmatpush1.msra.mxu0 0.0
    %448 = vmatprep.subr.mxu0 0.0
    %449 = vmatpush1.msra.mxu0 0.0
    %450 = vmatprep.subr.mxu0 0.0
    %451 = vmatpush1.msra.mxu0 0.0
    %452 = vmatprep.subr.mxu0 0.0
    %453 = vmatpush1.msra.mxu0 0.0
    %454 = vmatprep.subr.mxu0 0.0
    %455 = vmatpush1.msra.mxu0 0.0
    %456 = vmatprep.subr.mxu0 0.0
    %457 = vmatpush1.msra.mxu0 0.0
    %458 = vmatprep.subr.mxu0 0.0
    %459 = vmatpush1.msra.mxu0 0.0
    %460 = vmatprep.subr.mxu0 0.0
    %461 = vmatpush1.msra.mxu0 0.0
    %462 = vmatprep.subr.mxu0 0.0
    %463 = vmatpush1.msra.mxu0 0.0
    %464 = vmatprep.subr.mxu0 0.0
    %465 = vmatpush1.msra.mxu0 0.0
    %466 = vmatprep.subr.mxu0 0.0
    %467 = vmatpush1.msra.mxu0 0.0
    %468 = vmatprep.subr.mxu0 0.0
    %469 = vmatpush1.msra.mxu0 0.0
    %470 = vmatprep.subr.mxu0 0.0
    %471 = vmatpush1.msra.mxu0 0.0
    %472 = vmatprep.subr.mxu0 0.0
    %473 = vmatpush1.msra.mxu0 0.0
    %474 = vmatprep.subr.mxu0 0.0
    %475 = vmatpush1.msra.mxu0 0.0
    %476 = vmatprep.subr.mxu0 0.0
    %477 = vmatpush1.msra.mxu0 0.0
    %478 = vmatprep.subr.mxu0 0.0
    %479 = vmatpush1.msra.mxu0 0.0
    %480 = vmatprep.subr.mxu0 0.0
    %481 = vmatpush1.msra.mxu0 0.0
    %482 = vmatprep.subr.mxu0 0.0
    %483 = vmatpush1.msra.mxu0 0.0
    %484 = vmatprep.subr.mxu0 0.0
    %485 = vmatpush1.msra.mxu0 0.0
    %486 = vmatprep.subr.mxu0 0.0
    %487 = vmatpush1.msra.mxu0 0.0
    %488 = vmatprep.subr.mxu0 0.0
    %489 = vmatpush1.msra.mxu0 0.0
    %490 = vmatprep.subr.mxu0 0.0
    %491 = vmatpush1.msra.mxu0 0.0
    %492 = vmatprep.subr.mxu0 0.0
    %493 = vmatpush1.msra.mxu0 0.0
    %494 = vmatprep.subr.mxu0 0.0
    %495 = vmatpush1.msra.mxu0 0.0
    %496 = vmatprep.subr.mxu0 0.0
    %497 = vmatpush1.msra.mxu0 0.0
    %498 = vmatprep.subr.mxu0 0.0
    %499 = vmatpush1.msra.mxu0 0.0
    %500 = vmatprep.subr.mxu0 0.0
    %501 = vmatpush1.msra.mxu0 0.0
    %502 = vmatprep.mubr.f32.mxu0 0.0
    %503 = vmatmul.mubr.f32.gmra.mrb[0].mxu0 %v433
    %v504 = vpop.f32.mrb[0].mxu0
    %v505 = vadd.f32 0.0, %v504
    %v506 = vpop.f32.mrb[0].mxu0
    %507 = vmatprep.mubr.f32.mxu0 0.0
    %508 = vmatmul.mubr.f32.gmra.mrb[0].mxu0 %v436
    %v509 = vpop.f32.mrb[0].mxu0
    %v510 = vadd.f32 0.0, %v509
    %v511 = vpop.f32.mrb[0].mxu0
    %512 = vdwg.mxu0
    %513 = vrot.lane.b32.xlu0 %v297, 120
    %v514 = vpop.permute.xlu0 %513
    %515 = vrot.lane.b32.xlu0 %v302, 120
    %v516 = vpop.permute.xlu0 %515
    %517 = vrot.lane.b32.xlu0 %v297, 88
    %v518 = vpop.permute.xlu0 %517
    %519 = vrot.lane.b32.xlu0 %v302, 88
    %v520 = vpop.permute.xlu0 %519
    %v521 = vsel %vm315, %v514, 0
    %v523 = vsel %vm315, %v516, 0
    %v525 = vsel %vm315, %v518, 0
    %v527 = vsel %vm315, %v520, 0
    %529 = vmatprep.subr.mxu0 0.0
    %530 = vmatpush1.xpose.msra.mxu0 %v525
    %531 = vmatprep.subr.mxu0 0.0
    %532 = vmatpush1.xpose.msra.mxu0 %v527
    %533 = vmatprep.subr.mxu0 0.0
    %534 = vmatpush1.xpose.msra.mxu0 0.0
    %535 = vmatprep.subr.mxu0 0.0
    %536 = vmatpush1.xpose.msra.mxu0 0.0
    %537 = vmatprep.subr.mxu0 0.0
    %538 = vmatpush1.xpose.msra.mxu0 0.0
    %539 = vmatprep.subr.mxu0 0.0
    %540 = vmatpush1.xpose.msra.mxu0 0.0
    %541 = vmatprep.subr.mxu0 0.0
    %542 = vmatpush1.xpose.msra.mxu0 0.0
    %543 = vmatprep.subr.mxu0 0.0
    %544 = vmatpush1.xpose.msra.mxu0 0.0
    %545 = vmatprep.subr.mxu0 0.0
    %546 = vmatpush1.xpose.msra.mxu0 0.0
    %547 = vmatprep.subr.mxu0 0.0
    %548 = vmatpush1.xpose.msra.mxu0 0.0
    %549 = vmatprep.subr.mxu0 0.0
    %550 = vmatpush1.xpose.msra.mxu0 0.0
    %551 = vmatprep.subr.mxu0 0.0
    %552 = vmatpush1.xpose.msra.mxu0 0.0
    %553 = vmatprep.subr.mxu0 0.0
    %554 = vmatpush1.xpose.msra.mxu0 0.0
    %555 = vmatprep.subr.mxu0 0.0
    %556 = vmatpush1.xpose.msra.mxu0 0.0
    %557 = vmatprep.subr.mxu0 0.0
    %558 = vmatpush1.xpose.msra.mxu0 0.0
    %559 = vmatprep.subr.mxu0 0.0
    %560 = vmatpush1.xpose.msra.mxu0 0.0
    %561 = vmatprep.subr.mxu0 0.0
    %562 = vmatpush1.xpose.msra.mxu0 0.0
    %563 = vmatprep.subr.mxu0 0.0
    %564 = vmatpush1.xpose.msra.mxu0 0.0
    %565 = vmatprep.subr.mxu0 0.0
    %566 = vmatpush1.xpose.msra.mxu0 0.0
    %567 = vmatprep.subr.mxu0 0.0
    %568 = vmatpush1.xpose.msra.mxu0 0.0
    %569 = vmatprep.subr.mxu0 0.0
    %570 = vmatpush1.xpose.msra.mxu0 0.0
    %571 = vmatprep.subr.mxu0 0.0
    %572 = vmatpush1.xpose.msra.mxu0 0.0
    %573 = vmatprep.subr.mxu0 0.0
    %574 = vmatpush1.xpose.msra.mxu0 0.0
    %575 = vmatprep.subr.mxu0 0.0
    %576 = vmatpush1.xpose.msra.mxu0 0.0
    %577 = vmatprep.subr.mxu0 0.0
    %578 = vmatpush1.xpose.msra.mxu0 0.0
    %579 = vmatprep.subr.mxu0 0.0
    %580 = vmatpush1.xpose.msra.mxu0 0.0
    %581 = vmatprep.subr.mxu0 0.0
    %582 = vmatpush1.xpose.msra.mxu0 0.0
    %583 = vmatprep.subr.mxu0 0.0
    %584 = vmatpush1.xpose.msra.mxu0 0.0
    %585 = vmatprep.subr.mxu0 0.0
    %586 = vmatpush1.xpose.msra.mxu0 0.0
    %587 = vmatprep.subr.mxu0 0.0
    %588 = vmatpush1.xpose.msra.mxu0 0.0
    %589 = vmatprep.subr.mxu0 0.0
    %590 = vmatpush1.xpose.msra.mxu0 0.0
    %591 = vmatprep.subr.mxu0 0.0
    %592 = vmatpush1.xpose.msra.mxu0 0.0
    %593 = vmatprep.mubr.f32.mxu0 0.0
    %594 = vmatmul.mubr.f32.gmra.mrb[0].mxu0 %v521
    %v595 = vpop.f32.mrb[0].mxu0
    %v596 = vadd.f32 0.0, %v595
    %v597 = vpop.f32.mrb[0].mxu0
    %598 = vmatprep.mubr.f32.mxu0 0.0
    %599 = vmatmul.mubr.f32.gmra.mrb[0].mxu0 %v523
    %v600 = vpop.f32.mrb[0].mxu0
    %v601 = vadd.f32 0.0, %v600
    %v602 = vpop.f32.mrb[0].mxu0
    %603 = vdwg.mxu0
    %v604 = vmul.f32 %v596, 0.35355338
    %v605 = vmul.f32 %v601, 0.35355338
    %v606 = vadd.f32 %v604, %v158
    %v607 = vadd.f32 %v605, %v159
    %v608 = vsel %vm403, %v606, -inf
    %609 = vmax.xlane.f32.xlu0 %v608
    %v610 = vpop.xlane.xlu0 %609
    %v611 = vsel %vm403, %v607, -inf
    %612 = vmax.xlane.f32.xlu0 %v611
    %v613 = vpop.xlane.xlu0 %612
    %v614 = vsub.f32 %v606, %v610
    %v615 = vsub.f32 %v607, %v613
    %v616 = vmul.f32 %v614, 1.442695
    %v617 = vpow.pop %v616
    %v618 = vmul.f32 %v615, 1.442695
    %v619 = vpow.pop %v618
    %v620 = vsel %vm403, %v617, 0.0
    %621 = vadd.xlane.f32.xlu0 %v620
    %v622 = vpop.xlane.xlu0 %621
    %v623 = vsel %vm403, %v619, 0.0
    %624 = vadd.xlane.f32.xlu0 %v623
    %v625 = vpop.xlane.xlu0 %624
    %v626 = vrcp.pop %v622
    %v627 = vrcp.pop %v625
    %v628 = vmul.f32 %v617, %v626
    %v629 = vmul.f32 %v619, %v627
    %630 = vrot.lane.b32.xlu0 %v297, 56
    %v631 = vpop.permute.xlu0 %630
    %632 = vrot.lane.b32.xlu0 %v302, 56
    %v633 = vpop.permute.xlu0 %632
    %v637 = vsel %vm403, %v628, 0
    %v640 = vsel %vm403, %v629, 0
    %642 = vmatprep.subr.mxu0 0.0
    %643 = vmatpush1.msra.mxu0 %v631
    %644 = vmatprep.subr.mxu0 0.0
    %645 = vmatpush1.msra.mxu0 %v633
    %646 = vmatprep.subr.mxu0 0.0
    %647 = vmatpush1.msra.mxu0 0.0
    %648 = vmatprep.subr.mxu0 0.0
    %649 = vmatpush1.msra.mxu0 0.0
    %650 = vmatprep.subr.mxu0 0.0
    %651 = vmatpush1.msra.mxu0 0.0
    %652 = vmatprep.subr.mxu0 0.0
    %653 = vmatpush1.msra.mxu0 0.0
    %654 = vmatprep.subr.mxu0 0.0
    %655 = vmatpush1.msra.mxu0 0.0
    %656 = vmatprep.subr.mxu0 0.0
    %657 = vmatpush1.msra.mxu0 0.0
    %658 = vmatprep.subr.mxu0 0.0
    %659 = vmatpush1.msra.mxu0 0.0
    %660 = vmatprep.subr.mxu0 0.0
    %661 = vmatpush1.msra.mxu0 0.0
    %662 = vmatprep.subr.mxu0 0.0
    %663 = vmatpush1.msra.mxu0 0.0
    %664 = vmatprep.subr.mxu0 0.0
    %665 = vmatpush1.msra.mxu0 0.0
    %666 = vmatprep.subr.mxu0 0.0
    %667 = vmatpush1.msra.mxu0 0.0
    %668 = vmatprep.subr.mxu0 0.0
    %669 = vmatpush1.msra.mxu0 0.0
    %670 = vmatprep.subr.mxu0 0.0
    %671 = vmatpush1.msra.mxu0 0.0
    %672 = vmatprep.subr.mxu0 0.0
    %673 = vmatpush1.msra.mxu0 0.0
    %674 = vmatprep.subr.mxu0 0.0
    %675 = vmatpush1.msra.mxu0 0.0
    %676 = vmatprep.subr.mxu0 0.0
    %677 = vmatpush1.msra.mxu0 0.0
    %678 = vmatprep.subr.mxu0 0.0
    %679 = vmatpush1.msra.mxu0 0.0
    %680 = vmatprep.subr.mxu0 0.0
    %681 = vmatpush1.msra.mxu0 0.0
    %682 = vmatprep.subr.mxu0 0.0
    %683 = vmatpush1.msra.mxu0 0.0
    %684 = vmatprep.subr.mxu0 0.0
    %685 = vmatpush1.msra.mxu0 0.0
    %686 = vmatprep.subr.mxu0 0.0
    %687 = vmatpush1.msra.mxu0 0.0
    %688 = vmatprep.subr.mxu0 0.0
    %689 = vmatpush1.msra.mxu0 0.0
    %690 = vmatprep.subr.mxu0 0.0
    %691 = vmatpush1.msra.mxu0 0.0
    %692 = vmatprep.subr.mxu0 0.0
    %693 = vmatpush1.msra.mxu0 0.0
    %694 = vmatprep.subr.mxu0 0.0
    %695 = vmatpush1.msra.mxu0 0.0
    %696 = vmatprep.subr.mxu0 0.0
    %697 = vmatpush1.msra.mxu0 0.0
    %698 = vmatprep.subr.mxu0 0.0
    %699 = vmatpush1.msra.mxu0 0.0
    %700 = vmatprep.subr.mxu0 0.0
    %701 = vmatpush1.msra.mxu0 0.0
    %702 = vmatprep.subr.mxu0 0.0
    %703 = vmatpush1.msra.mxu0 0.0
    %704 = vmatprep.subr.mxu0 0.0
    %705 = vmatpush1.msra.mxu0 0.0
    %706 = vmatprep.mubr.f32.mxu0 0.0
    %707 = vmatmul.mubr.f32.gmra.mrb[0].mxu0 %v637
    %v708 = vpop.f32.mrb[0].mxu0
    %v709 = vadd.f32 0.0, %v708
    %v710 = vpop.f32.mrb[0].mxu0
    %711 = vmatprep.mubr.f32.mxu0 0.0
    %712 = vmatmul.mubr.f32.gmra.mrb[0].mxu0 %v640
    %v713 = vpop.f32.mrb[0].mxu0
    %v714 = vadd.f32 0.0, %v713
    %v715 = vpop.f32.mrb[0].mxu0
    %716 = vdwg.mxu0
    %v718 = vsel %vm315, %v709, 0
    %v721 = vsel %vm315, %v714, 0
    %723 = vmatprep.subr.mxu0 0.0
    %724 = vmatpush1.msra.mxu0 %v306
    %725 = vmatprep.subr.mxu0 0.0
    %726 = vmatpush1.msra.mxu0 0.0
    %727 = vmatprep.subr.mxu0 0.0
    %728 = vmatpush1.msra.mxu0 0.0
    %729 = vmatprep.subr.mxu0 0.0
    %730 = vmatpush1.msra.mxu0 0.0
    %731 = vmatprep.subr.mxu0 0.0
    %732 = vmatpush1.msra.mxu0 0.0
    %733 = vmatprep.subr.mxu0 0.0
    %734 = vmatpush1.msra.mxu0 0.0
    %735 = vmatprep.subr.mxu0 0.0
    %736 = vmatpush1.msra.mxu0 0.0
    %737 = vmatprep.subr.mxu0 0.0
    %738 = vmatpush1.msra.mxu0 0.0
    %739 = vmatprep.subr.mxu0 0.0
    %740 = vmatpush1.msra.mxu0 0.0
    %741 = vmatprep.subr.mxu0 0.0
    %742 = vmatpush1.msra.mxu0 0.0
    %743 = vmatprep.subr.mxu0 0.0
    %744 = vmatpush1.msra.mxu0 0.0
    %745 = vmatprep.subr.mxu0 0.0
    %746 = vmatpush1.msra.mxu0 0.0
    %747 = vmatprep.subr.mxu0 0.0
    %748 = vmatpush1.msra.mxu0 0.0
    %749 = vmatprep.subr.mxu0 0.0
    %750 = vmatpush1.msra.mxu0 0.0
    %751 = vmatprep.subr.mxu0 0.0
    %752 = vmatpush1.msra.mxu0 0.0
    %753 = vmatprep.subr.mxu0 0.0
    %754 = vmatpush1.msra.mxu0 0.0
    %755 = vmatprep.subr.mxu0 0.0
    %756 = vmatpush1.msra.mxu0 0.0
    %757 = vmatprep.subr.mxu0 0.0
    %758 = vmatpush1.msra.mxu0 0.0
    %759 = vmatprep.subr.mxu0 0.0
    %760 = vmatpush1.msra.mxu0 0.0
    %761 = vmatprep.subr.mxu0 0.0
    %762 = vmatpush1.msra.mxu0 0.0
    %763 = vmatprep.subr.mxu0 0.0
    %764 = vmatpush1.msra.mxu0 0.0
    %765 = vmatprep.subr.mxu0 0.0
    %766 = vmatpush1.msra.mxu0 0.0
    %767 = vmatprep.subr.mxu0 0.0
    %768 = vmatpush1.msra.mxu0 0.0
    %769 = vmatprep.subr.mxu0 0.0
    %770 = vmatpush1.msra.mxu0 0.0
    %771 = vmatprep.subr.mxu0 0.0
    %772 = vmatpush1.msra.mxu0 0.0
    %773 = vmatprep.subr.mxu0 0.0
    %774 = vmatpush1.msra.mxu0 0.0
    %775 = vmatprep.subr.mxu0 0.0
    %776 = vmatpush1.msra.mxu0 0.0
    %777 = vmatprep.subr.mxu0 0.0
    %778 = vmatpush1.msra.mxu0 0.0
    %779 = vmatprep.subr.mxu0 0.0
    %780 = vmatpush1.msra.mxu0 0.0
    %781 = vmatprep.subr.mxu0 0.0
    %782 = vmatpush1.msra.mxu0 0.0
    %783 = vmatprep.subr.mxu0 0.0
    %784 = vmatpush1.msra.mxu0 0.0
    %785 = vmatprep.subr.mxu0 0.0
    %786 = vmatpush1.msra.mxu0 0.0
    %787 = vmatprep.mubr.f32.mxu0 0.0
    %788 = vmatmul.mubr.f32.gmra.mrb[0].mxu0 %v718
    %v789 = vpop.f32.mrb[0].mxu0
    %v790 = vadd.f32 0.0, %v789
    %v791 = vpop.f32.mrb[0].mxu0
    %792 = vmatprep.mubr.f32.mxu0 0.0
    %793 = vmatmul.mubr.f32.gmra.mrb[0].mxu0 %v721
    %v794 = vpop.f32.mrb[0].mxu0
    %v795 = vadd.f32 0.0, %v794
    %v796 = vpop.f32.mrb[0].mxu0
    %797 = vdwg.mxu0
    %v799 = vsel %vm315, %v505, 0
    %v802 = vsel %vm315, %v510, 0
    %804 = vmatprep.subr.mxu0 0.0
    %805 = vmatpush1.msra.mxu0 %v305
    %806 = vmatprep.subr.mxu0 0.0
    %807 = vmatpush1.msra.mxu0 0.0
    %808 = vmatprep.subr.mxu0 0.0
    %809 = vmatpush1.msra.mxu0 0.0
    %810 = vmatprep.subr.mxu0 0.0
    %811 = vmatpush1.msra.mxu0 0.0
    %812 = vmatprep.subr.mxu0 0.0
    %813 = vmatpush1.msra.mxu0 0.0
    %814 = vmatprep.subr.mxu0 0.0
    %815 = vmatpush1.msra.mxu0 0.0
    %816 = vmatprep.subr.mxu0 0.0
    %817 = vmatpush1.msra.mxu0 0.0
    %818 = vmatprep.subr.mxu0 0.0
    %819 = vmatpush1.msra.mxu0 0.0
    %820 = vmatprep.subr.mxu0 0.0
    %821 = vmatpush1.msra.mxu0 0.0
    %822 = vmatprep.subr.mxu0 0.0
    %823 = vmatpush1.msra.mxu0 0.0
    %824 = vmatprep.subr.mxu0 0.0
    %825 = vmatpush1.msra.mxu0 0.0
    %826 = vmatprep.subr.mxu0 0.0
    %827 = vmatpush1.msra.mxu0 0.0
    %828 = vmatprep.subr.mxu0 0.0
    %829 = vmatpush1.msra.mxu0 0.0
    %830 = vmatprep.subr.mxu0 0.0
    %831 = vmatpush1.msra.mxu0 0.0
    %832 = vmatprep.subr.mxu0 0.0
    %833 = vmatpush1.msra.mxu0 0.0
    %834 = vmatprep.subr.mxu0 0.0
    %835 = vmatpush1.msra.mxu0 0.0
    %836 = vmatprep.subr.mxu0 0.0
    %837 = vmatpush1.msra.mxu0 0.0
    %838 = vmatprep.subr.mxu0 0.0
    %839 = vmatpush1.msra.mxu0 0.0
    %840 = vmatprep.subr.mxu0 0.0
    %841 = vmatpush1.msra.mxu0 0.0
    %842 = vmatprep.subr.mxu0 0.0
    %843 = vmatpush1.msra.mxu0 0.0
    %844 = vmatprep.subr.mxu0 0.0
    %845 = vmatpush1.msra.mxu0 0.0
    %846 = vmatprep.subr.mxu0 0.0
    %847 = vmatpush1.msra.mxu0 0.0
    %848 = vmatprep.subr.mxu0 0.0
    %849 = vmatpush1.msra.mxu0 0.0
    %850 = vmatprep.subr.mxu0 0.0
    %851 = vmatpush1.msra.mxu0 0.0
    %852 = vmatprep.subr.mxu0 0.0
    %853 = vmatpush1.msra.mxu0 0.0
    %854 = vmatprep.subr.mxu0 0.0
    %855 = vmatpush1.msra.mxu0 0.0
    %856 = vmatprep.subr.mxu0 0.0
    %857 = vmatpush1.msra.mxu0 0.0
    %858 = vmatprep.subr.mxu0 0.0
    %859 = vmatpush1.msra.mxu0 0.0
    %860 = vmatprep.subr.mxu0 0.0
    %861 = vmatpush1.msra.mxu0 0.0
    %862 = vmatprep.subr.mxu0 0.0
    %863 = vmatpush1.msra.mxu0 0.0
    %864 = vmatprep.subr.mxu0 0.0
    %865 = vmatpush1.msra.mxu0 0.0
    %866 = vmatprep.subr.mxu0 0.0
    %867 = vmatpush1.msra.mxu0 0.0
    %868 = vmatprep.mubr.f32.mxu0 0.0
    %869 = vmatmul.mubr.f32.gmra.mrb[0].mxu0 %v799
    %v870 = vpop.f32.mrb[0].mxu0
    %v871 = vadd.f32 %v790, %v870
    %v872 = vpop.f32.mrb[0].mxu0
    %873 = vmatprep.mubr.f32.mxu0 0.0
    %874 = vmatmul.mubr.f32.gmra.mrb[0].mxu0 %v802
    %v875 = vpop.f32.mrb[0].mxu0
    %v876 = vadd.f32 %v795, %v875
    %v877 = vpop.f32.mrb[0].mxu0
    %878 = vdwg.mxu0
    %879 = vrot.lane.b32.xlu0 %v297, 112
    %v880 = vpop.permute.xlu0 %879
    %881 = vrot.lane.b32.xlu0 %v302, 112
    %v882 = vpop.permute.xlu0 %881
    %883 = vrot.lane.b32.xlu0 %v297, 80
    %v884 = vpop.permute.xlu0 %883
    %885 = vrot.lane.b32.xlu0 %v302, 80
    %v886 = vpop.permute.xlu0 %885
    %v887 = vsel %vm315, %v880, 0
    %v889 = vsel %vm315, %v882, 0
    %v891 = vsel %vm315, %v884, 0
    %v893 = vsel %vm315, %v886, 0
    %895 = vmatprep.subr.mxu0 0.0
    %896 = vmatpush1.xpose.msra.mxu0 %v891
    %897 = vmatprep.subr.mxu0 0.0
    %898 = vmatpush1.xpose.msra.mxu0 %v893
    %899 = vmatprep.subr.mxu0 0.0
    %900 = vmatpush1.xpose.msra.mxu0 0.0
    %901 = vmatprep.subr.mxu0 0.0
    %902 = vmatpush1.xpose.msra.mxu0 0.0
    %903 = vmatprep.subr.mxu0 0.0
    %904 = vmatpush1.xpose.msra.mxu0 0.0
    %905 = vmatprep.subr.mxu0 0.0
    %906 = vmatpush1.xpose.msra.mxu0 0.0
    %907 = vmatprep.subr.mxu0 0.0
    %908 = vmatpush1.xpose.msra.mxu0 0.0
    %909 = vmatprep.subr.mxu0 0.0
    %910 = vmatpush1.xpose.msra.mxu0 0.0
    %911 = vmatprep.subr.mxu0 0.0
    %912 = vmatpush1.xpose.msra.mxu0 0.0
    %913 = vmatprep.subr.mxu0 0.0
    %914 = vmatpush1.xpose.msra.mxu0 0.0
    %915 = vmatprep.subr.mxu0 0.0
    %916 = vmatpush1.xpose.msra.mxu0 0.0
    %917 = vmatprep.subr.mxu0 0.0
    %918 = vmatpush1.xpose.msra.mxu0 0.0
    %919 = vmatprep.subr.mxu0 0.0
    %920 = vmatpush1.xpose.msra.mxu0 0.0
    %921 = vmatprep.subr.mxu0 0.0
    %922 = vmatpush1.xpose.msra.mxu0 0.0
    %923 = vmatprep.subr.mxu0 0.0
    %924 = vmatpush1.xpose.msra.mxu0 0.0
    %925 = vmatprep.subr.mxu0 0.0
    %926 = vmatpush1.xpose.msra.mxu0 0.0
    %927 = vmatprep.subr.mxu0 0.0
    %928 = vmatpush1.xpose.msra.mxu0 0.0
    %929 = vmatprep.subr.mxu0 0.0
    %930 = vmatpush1.xpose.msra.mxu0 0.0
    %931 = vmatprep.subr.mxu0 0.0
    %932 = vmatpush1.xpose.msra.mxu0 0.0
    %933 = vmatprep.subr.mxu0 0.0
    %934 = vmatpush1.xpose.msra.mxu0 0.0
    %935 = vmatprep.subr.mxu0 0.0
    %936 = vmatpush1.xpose.msra.mxu0 0.0
    %937 = vmatprep.subr.mxu0 0.0
    %938 = vmatpush1.xpose.msra.mxu0 0.0
    %939 = vmatprep.subr.mxu0 0.0
    %940 = vmatpush1.xpose.msra.mxu0 0.0
    %941 = vmatprep.subr.mxu0 0.0
    %942 = vmatpush1.xpose.msra.mxu0 0.0
    %943 = vmatprep.subr.mxu0 0.0
    %944 = vmatpush1.xpose.msra.mxu0 0.0
    %945 = vmatprep.subr.mxu0 0.0
    %946 = vmatpush1.xpose.msra.mxu0 0.0
    %947 = vmatprep.subr.mxu0 0.0
    %948 = vmatpush1.xpose.msra.mxu0 0.0
    %949 = vmatprep.subr.mxu0 0.0
    %950 = vmatpush1.xpose.msra.mxu0 0.0
    %951 = vmatprep.subr.mxu0 0.0
    %952 = vmatpush1.xpose.msra.mxu0 0.0
    %953 = vmatprep.subr.mxu0 0.0
    %954 = vmatpush1.xpose.msra.mxu0 0.0
    %955 = vmatprep.subr.mxu0 0.0
    %956 = vmatpush1.xpose.msra.mxu0 0.0
    %957 = vmatprep.subr.mxu0 0.0
    %958 = vmatpush1.xpose.msra.mxu0 0.0
    %959 = vmatprep.mubr.f32.mxu0 0.0
    %960 = vmatmul.mubr.f32.gmra.mrb[0].mxu0 %v887
    %v961 = vpop.f32.mrb[0].mxu0
    %v962 = vadd.f32 0.0, %v961
    %v963 = vpop.f32.mrb[0].mxu0
    %964 = vmatprep.mubr.f32.mxu0 0.0
    %965 = vmatmul.mubr.f32.gmra.mrb[0].mxu0 %v889
    %v966 = vpop.f32.mrb[0].mxu0
    %v967 = vadd.f32 0.0, %v966
    %v968 = vpop.f32.mrb[0].mxu0
    %969 = vdwg.mxu0
    %v970 = vmul.f32 %v962, 0.35355338
    %v971 = vmul.f32 %v967, 0.35355338
    %v972 = vadd.f32 %v970, %v158
    %v973 = vadd.f32 %v971, %v159
    %v974 = vsel %vm403, %v972, -inf
    %975 = vmax.xlane.f32.xlu0 %v974
    %v976 = vpop.xlane.xlu0 %975
    %v977 = vsel %vm403, %v973, -inf
    %978 = vmax.xlane.f32.xlu0 %v977
    %v979 = vpop.xlane.xlu0 %978
    %v980 = vsub.f32 %v972, %v976
    %v981 = vsub.f32 %v973, %v979
    %v982 = vmul.f32 %v980, 1.442695
    %v983 = vpow.pop %v982
    %v984 = vmul.f32 %v981, 1.442695
    %v985 = vpow.pop %v984
    %v986 = vsel %vm403, %v983, 0.0
    %987 = vadd.xlane.f32.xlu0 %v986
    %v988 = vpop.xlane.xlu0 %987
    %v989 = vsel %vm403, %v985, 0.0
    %990 = vadd.xlane.f32.xlu0 %v989
    %v991 = vpop.xlane.xlu0 %990
    %v992 = vrcp.pop %v988
    %v993 = vrcp.pop %v991
    %v994 = vmul.f32 %v983, %v992
    %v995 = vmul.f32 %v985, %v993
    %996 = vrot.lane.b32.xlu0 %v297, 48
    %v997 = vpop.permute.xlu0 %996
    %998 = vrot.lane.b32.xlu0 %v302, 48
    %v999 = vpop.permute.xlu0 %998
    %v1003 = vsel %vm403, %v994, 0
    %v1006 = vsel %vm403, %v995, 0
    %1008 = vmatprep.subr.mxu0 0.0
    %1009 = vmatpush1.msra.mxu0 %v997
    %1010 = vmatprep.subr.mxu0 0.0
    %1011 = vmatpush1.msra.mxu0 %v999
    %1012 = vmatprep.subr.mxu0 0.0
    %1013 = vmatpush1.msra.mxu0 0.0
    %1014 = vmatprep.subr.mxu0 0.0
    %1015 = vmatpush1.msra.mxu0 0.0
    %1016 = vmatprep.subr.mxu0 0.0
    %1017 = vmatpush1.msra.mxu0 0.0
    %1018 = vmatprep.subr.mxu0 0.0
    %1019 = vmatpush1.msra.mxu0 0.0
    %1020 = vmatprep.subr.mxu0 0.0
    %1021 = vmatpush1.msra.mxu0 0.0
    %1022 = vmatprep.subr.mxu0 0.0
    %1023 = vmatpush1.msra.mxu0 0.0
    %1024 = vmatprep.subr.mxu0 0.0
    %1025 = vmatpush1.msra.mxu0 0.0
    %1026 = vmatprep.subr.mxu0 0.0
    %1027 = vmatpush1.msra.mxu0 0.0
    %1028 = vmatprep.subr.mxu0 0.0
    %1029 = vmatpush1.msra.mxu0 0.0
    %1030 = vmatprep.subr.mxu0 0.0
    %1031 = vmatpush1.msra.mxu0 0.0
    %1032 = vmatprep.subr.mxu0 0.0
    %1033 = vmatpush1.msra.mxu0 0.0
    %1034 = vmatprep.subr.mxu0 0.0
    %1035 = vmatpush1.msra.mxu0 0.0
    %1036 = vmatprep.subr.mxu0 0.0
    %1037 = vmatpush1.msra.mxu0 0.0
    %1038 = vmatprep.subr.mxu0 0.0
    %1039 = vmatpush1.msra.mxu0 0.0
    %1040 = vmatprep.subr.mxu0 0.0
    %1041 = vmatpush1.msra.mxu0 0.0
    %1042 = vmatprep.subr.mxu0 0.0
    %1043 = vmatpush1.msra.mxu0 0.0
    %1044 = vmatprep.subr.mxu0 0.0
    %1045 = vmatpush1.msra.mxu0 0.0
    %1046 = vmatprep.subr.mxu0 0.0
    %1047 = vmatpush1.msra.mxu0 0.0
    %1048 = vmatprep.subr.mxu0 0.0
    %1049 = vmatpush1.msra.mxu0 0.0
    %1050 = vmatprep.subr.mxu0 0.0
    %1051 = vmatpush1.msra.mxu0 0.0
    %1052 = vmatprep.subr.mxu0 0.0
    %1053 = vmatpush1.msra.mxu0 0.0
    %1054 = vmatprep.subr.mxu0 0.0
    %1055 = vmatpush1.msra.mxu0 0.0
    %1056 = vmatprep.subr.mxu0 0.0
    %1057 = vmatpush1.msra.mxu0 0.0
    %1058 = vmatprep.subr.mxu0 0.0
    %1059 = vmatpush1.msra.mxu0 0.0
    %1060 = vmatprep.subr.mxu0 0.0
    %1061 = vmatpush1.msra.mxu0 0.0
    %1062 = vmatprep.subr.mxu0 0.0
    %1063 = vmatpush1.msra.mxu0 0.0
    %1064 = vmatprep.subr.mxu0 0.0
    %1065 = vmatpush1.msra.mxu0 0.0
    %1066 = vmatprep.subr.mxu0 0.0
    %1067 = vmatpush1.msra.mxu0 0.0
    %1068 = vmatprep.subr.mxu0 0.0
    %1069 = vmatpush1.msra.mxu0 0.0
    %1070 = vmatprep.subr.mxu0 0.0
    %1071 = vmatpush1.msra.mxu0 0.0
    %1072 = vmatprep.mubr.f32.mxu0 0.0
    %1073 = vmatmul.mubr.f32.gmra.mrb[0].mxu0 %v1003
    %v1074 = vpop.f32.mrb[0].mxu0
    %v1075 = vadd.f32 0.0, %v1074
    %v1076 = vpop.f32.mrb[0].mxu0
    %1077 = vmatprep.mubr.f32.mxu0 0.0
    %1078 = vmatmul.mubr.f32.gmra.mrb[0].mxu0 %v1006
    %v1079 = vpop.f32.mrb[0].mxu0
    %v1080 = vadd.f32 0.0, %v1079
    %v1081 = vpop.f32.mrb[0].mxu0
    %1082 = vdwg.mxu0
    %v1084 = vsel %vm315, %v1075, 0
    %v1087 = vsel %vm315, %v1080, 0
    %1089 = vmatprep.subr.mxu0 0.0
    %1090 = vmatpush1.msra.mxu0 %v307
    %1091 = vmatprep.subr.mxu0 0.0
    %1092 = vmatpush1.msra.mxu0 0.0
    %1093 = vmatprep.subr.mxu0 0.0
    %1094 = vmatpush1.msra.mxu0 0.0
    %1095 = vmatprep.subr.mxu0 0.0
    %1096 = vmatpush1.msra.mxu0 0.0
    %1097 = vmatprep.subr.mxu0 0.0
    %1098 = vmatpush1.msra.mxu0 0.0
    %1099 = vmatprep.subr.mxu0 0.0
    %1100 = vmatpush1.msra.mxu0 0.0
    %1101 = vmatprep.subr.mxu0 0.0
    %1102 = vmatpush1.msra.mxu0 0.0
    %1103 = vmatprep.subr.mxu0 0.0
    %1104 = vmatpush1.msra.mxu0 0.0
    %1105 = vmatprep.subr.mxu0 0.0
    %1106 = vmatpush1.msra.mxu0 0.0
    %1107 = vmatprep.subr.mxu0 0.0
    %1108 = vmatpush1.msra.mxu0 0.0
    %1109 = vmatprep.subr.mxu0 0.0
    %1110 = vmatpush1.msra.mxu0 0.0
    %1111 = vmatprep.subr.mxu0 0.0
    %1112 = vmatpush1.msra.mxu0 0.0
    %1113 = vmatprep.subr.mxu0 0.0
    %1114 = vmatpush1.msra.mxu0 0.0
    %1115 = vmatprep.subr.mxu0 0.0
    %1116 = vmatpush1.msra.mxu0 0.0
    %1117 = vmatprep.subr.mxu0 0.0
    %1118 = vmatpush1.msra.mxu0 0.0
    %1119 = vmatprep.subr.mxu0 0.0
    %1120 = vmatpush1.msra.mxu0 0.0
    %1121 = vmatprep.subr.mxu0 0.0
    %1122 = vmatpush1.msra.mxu0 0.0
    %1123 = vmatprep.subr.mxu0 0.0
    %1124 = vmatpush1.msra.mxu0 0.0
    %1125 = vmatprep.subr.mxu0 0.0
    %1126 = vmatpush1.msra.mxu0 0.0
    %1127 = vmatprep.subr.mxu0 0.0
    %1128 = vmatpush1.msra.mxu0 0.0
    %1129 = vmatprep.subr.mxu0 0.0
    %1130 = vmatpush1.msra.mxu0 0.0
    %1131 = vmatprep.subr.mxu0 0.0
    %1132 = vmatpush1.msra.mxu0 0.0
    %1133 = vmatprep.subr.mxu0 0.0
    %1134 = vmatpush1.msra.mxu0 0.0
    %1135 = vmatprep.subr.mxu0 0.0
    %1136 = vmatpush1.msra.mxu0 0.0
    %1137 = vmatprep.subr.mxu0 0.0
    %1138 = vmatpush1.msra.mxu0 0.0
    %1139 = vmatprep.subr.mxu0 0.0
    %1140 = vmatpush1.msra.mxu0 0.0
    %1141 = vmatprep.subr.mxu0 0.0
    %1142 = vmatpush1.msra.mxu0 0.0
    %1143 = vmatprep.subr.mxu0 0.0
    %1144 = vmatpush1.msra.mxu0 0.0
    %1145 = vmatprep.subr.mxu0 0.0
    %1146 = vmatpush1.msra.mxu0 0.0
    %1147 = vmatprep.subr.mxu0 0.0
    %1148 = vmatpush1.msra.mxu0 0.0
    %1149 = vmatprep.subr.mxu0 0.0
    %1150 = vmatpush1.msra.mxu0 0.0
    %1151 = vmatprep.subr.mxu0 0.0
    %1152 = vmatpush1.msra.mxu0 0.0
    %1153 = vmatprep.mubr.f32.mxu0 0.0
    %1154 = vmatmul.mubr.f32.gmra.mrb[0].mxu0 %v1084
    %v1155 = vpop.f32.mrb[0].mxu0
    %v1156 = vadd.f32 0.0, %v1155
    %v1157 = vpop.f32.mrb[0].mxu0
    %1158 = vmatprep.mubr.f32.mxu0 0.0
    %1159 = vmatmul.mubr.f32.gmra.mrb[0].mxu0 %v1087
    %v1160 = vpop.f32.mrb[0].mxu0
    %v1161 = vadd.f32 0.0, %v1160
    %v1162 = vpop.f32.mrb[0].mxu0
    %1163 = vdwg.mxu0
    %v1164 = vadd.f32 %v871, %v1156
    %v1165 = vadd.f32 %v876, %v1161
    %1166 = vrot.lane.b32.xlu0 %v297, 104
    %v1167 = vpop.permute.xlu0 %1166
    %1168 = vrot.lane.b32.xlu0 %v302, 104
    %v1169 = vpop.permute.xlu0 %1168
    %1170 = vrot.lane.b32.xlu0 %v297, 72
    %v1171 = vpop.permute.xlu0 %1170
    %1172 = vrot.lane.b32.xlu0 %v302, 72
    %v1173 = vpop.permute.xlu0 %1172
    %v1174 = vsel %vm315, %v1167, 0
    %v1176 = vsel %vm315, %v1169, 0
    %v1178 = vsel %vm315, %v1171, 0
    %v1180 = vsel %vm315, %v1173, 0
    %1182 = vmatprep.subr.mxu0 0.0
    %1183 = vmatpush1.xpose.msra.mxu0 %v1178
    %1184 = vmatprep.subr.mxu0 0.0
    %1185 = vmatpush1.xpose.msra.mxu0 %v1180
    %1186 = vmatprep.subr.mxu0 0.0
    %1187 = vmatpush1.xpose.msra.mxu0 0.0
    %1188 = vmatprep.subr.mxu0 0.0
    %1189 = vmatpush1.xpose.msra.mxu0 0.0
    %1190 = vmatprep.subr.mxu0 0.0
    %1191 = vmatpush1.xpose.msra.mxu0 0.0
    %1192 = vmatprep.subr.mxu0 0.0
    %1193 = vmatpush1.xpose.msra.mxu0 0.0
    %1194 = vmatprep.subr.mxu0 0.0
    %1195 = vmatpush1.xpose.msra.mxu0 0.0
    %1196 = vmatprep.subr.mxu0 0.0
    %1197 = vmatpush1.xpose.msra.mxu0 0.0
    %1198 = vmatprep.subr.mxu0 0.0
    %1199 = vmatpush1.xpose.msra.mxu0 0.0
    %1200 = vmatprep.subr.mxu0 0.0
    %1201 = vmatpush1.xpose.msra.mxu0 0.0
    %1202 = vmatprep.subr.mxu0 0.0
    %1203 = vmatpush1.xpose.msra.mxu0 0.0
    %1204 = vmatprep.subr.mxu0 0.0
    %1205 = vmatpush1.xpose.msra.mxu0 0.0
    %1206 = vmatprep.subr.mxu0 0.0
    %1207 = vmatpush1.xpose.msra.mxu0 0.0
    %1208 = vmatprep.subr.mxu0 0.0
    %1209 = vmatpush1.xpose.msra.mxu0 0.0
    %1210 = vmatprep.subr.mxu0 0.0
    %1211 = vmatpush1.xpose.msra.mxu0 0.0
    %1212 = vmatprep.subr.mxu0 0.0
    %1213 = vmatpush1.xpose.msra.mxu0 0.0
    %1214 = vmatprep.subr.mxu0 0.0
    %1215 = vmatpush1.xpose.msra.mxu0 0.0
    %1216 = vmatprep.subr.mxu0 0.0
    %1217 = vmatpush1.xpose.msra.mxu0 0.0
    %1218 = vmatprep.subr.mxu0 0.0
    %1219 = vmatpush1.xpose.msra.mxu0 0.0
    %1220 = vmatprep.subr.mxu0 0.0
    %1221 = vmatpush1.xpose.msra.mxu0 0.0
    %1222 = vmatprep.subr.mxu0 0.0
    %1223 = vmatpush1.xpose.msra.mxu0 0.0
    %1224 = vmatprep.subr.mxu0 0.0
    %1225 = vmatpush1.xpose.msra.mxu0 0.0
    %1226 = vmatprep.subr.mxu0 0.0
    %1227 = vmatpush1.xpose.msra.mxu0 0.0
    %1228 = vmatprep.subr.mxu0 0.0
    %1229 = vmatpush1.xpose.msra.mxu0 0.0
    %1230 = vmatprep.subr.mxu0 0.0
    %1231 = vmatpush1.xpose.msra.mxu0 0.0
    %1232 = vmatprep.subr.mxu0 0.0
    %1233 = vmatpush1.xpose.msra.mxu0 0.0
    %1234 = vmatprep.subr.mxu0 0.0
    %1235 = vmatpush1.xpose.msra.mxu0 0.0
    %1236 = vmatprep.subr.mxu0 0.0
    %1237 = vmatpush1.xpose.msra.mxu0 0.0
    %1238 = vmatprep.subr.mxu0 0.0
    %1239 = vmatpush1.xpose.msra.mxu0 0.0
    %1240 = vmatprep.subr.mxu0 0.0
    %1241 = vmatpush1.xpose.msra.mxu0 0.0
    %1242 = vmatprep.subr.mxu0 0.0
    %1243 = vmatpush1.xpose.msra.mxu0 0.0
    %1244 = vmatprep.subr.mxu0 0.0
    %1245 = vmatpush1.xpose.msra.mxu0 0.0
    %1246 = vmatprep.mubr.f32.mxu0 0.0
    %1247 = vmatmul.mubr.f32.gmra.mrb[0].mxu0 %v1174
    %v1248 = vpop.f32.mrb[0].mxu0
    %v1249 = vadd.f32 0.0, %v1248
    %v1250 = vpop.f32.mrb[0].mxu0
    %1251 = vmatprep.mubr.f32.mxu0 0.0
    %1252 = vmatmul.mubr.f32.gmra.mrb[0].mxu0 %v1176
    %v1253 = vpop.f32.mrb[0].mxu0
    %v1254 = vadd.f32 0.0, %v1253
    %v1255 = vpop.f32.mrb[0].mxu0
    %1256 = vdwg.mxu0
    %v1257 = vmul.f32 %v1249, 0.35355338
    %v1258 = vmul.f32 %v1254, 0.35355338
    %v1259 = vadd.f32 %v1257, %v158
    %v1260 = vadd.f32 %v1258, %v159
    %v1261 = vsel %vm403, %v1259, -inf
    %1262 = vmax.xlane.f32.xlu0 %v1261
    %v1263 = vpop.xlane.xlu0 %1262
    %v1264 = vsel %vm403, %v1260, -inf
    %1265 = vmax.xlane.f32.xlu0 %v1264
    %v1266 = vpop.xlane.xlu0 %1265
    %v1267 = vsub.f32 %v1259, %v1263
    %v1268 = vsub.f32 %v1260, %v1266
    %v1269 = vmul.f32 %v1267, 1.442695
    %v1270 = vpow.pop %v1269
    %v1271 = vmul.f32 %v1268, 1.442695
    %v1272 = vpow.pop %v1271
    %v1273 = vsel %vm403, %v1270, 0.0
    %1274 = vadd.xlane.f32.xlu0 %v1273
    %v1275 = vpop.xlane.xlu0 %1274
    %v1276 = vsel %vm403, %v1272, 0.0
    %1277 = vadd.xlane.f32.xlu0 %v1276
    %v1278 = vpop.xlane.xlu0 %1277
    %v1279 = vrcp.pop %v1275
    %v1280 = vrcp.pop %v1278
    %v1281 = vmul.f32 %v1270, %v1279
    %v1282 = vmul.f32 %v1272, %v1280
    %1283 = vrot.lane.b32.xlu0 %v297, 40
    %v1284 = vpop.permute.xlu0 %1283
    %1285 = vrot.lane.b32.xlu0 %v302, 40
    %v1286 = vpop.permute.xlu0 %1285
    %v1290 = vsel %vm403, %v1281, 0
    %v1293 = vsel %vm403, %v1282, 0
    %1295 = vmatprep.subr.mxu0 0.0
    %1296 = vmatpush1.msra.mxu0 %v1284
    %1297 = vmatprep.subr.mxu0 0.0
    %1298 = vmatpush1.msra.mxu0 %v1286
    %1299 = vmatprep.subr.mxu0 0.0
    %1300 = vmatpush1.msra.mxu0 0.0
    %1301 = vmatprep.subr.mxu0 0.0
    %1302 = vmatpush1.msra.mxu0 0.0
    %1303 = vmatprep.subr.mxu0 0.0
    %1304 = vmatpush1.msra.mxu0 0.0
    %1305 = vmatprep.subr.mxu0 0.0
    %1306 = vmatpush1.msra.mxu0 0.0
    %1307 = vmatprep.subr.mxu0 0.0
    %1308 = vmatpush1.msra.mxu0 0.0
    %1309 = vmatprep.subr.mxu0 0.0
    %1310 = vmatpush1.msra.mxu0 0.0
    %1311 = vmatprep.subr.mxu0 0.0
    %1312 = vmatpush1.msra.mxu0 0.0
    %1313 = vmatprep.subr.mxu0 0.0
    %1314 = vmatpush1.msra.mxu0 0.0
    %1315 = vmatprep.subr.mxu0 0.0
    %1316 = vmatpush1.msra.mxu0 0.0
    %1317 = vmatprep.subr.mxu0 0.0
    %1318 = vmatpush1.msra.mxu0 0.0
    %1319 = vmatprep.subr.mxu0 0.0
    %1320 = vmatpush1.msra.mxu0 0.0
    %1321 = vmatprep.subr.mxu0 0.0
    %1322 = vmatpush1.msra.mxu0 0.0
    %1323 = vmatprep.subr.mxu0 0.0
    %1324 = vmatpush1.msra.mxu0 0.0
    %1325 = vmatprep.subr.mxu0 0.0
    %1326 = vmatpush1.msra.mxu0 0.0
    %1327 = vmatprep.subr.mxu0 0.0
    %1328 = vmatpush1.msra.mxu0 0.0
    %1329 = vmatprep.subr.mxu0 0.0
    %1330 = vmatpush1.msra.mxu0 0.0
    %1331 = vmatprep.subr.mxu0 0.0
    %1332 = vmatpush1.msra.mxu0 0.0
    %1333 = vmatprep.subr.mxu0 0.0
    %1334 = vmatpush1.msra.mxu0 0.0
    %1335 = vmatprep.subr.mxu0 0.0
    %1336 = vmatpush1.msra.mxu0 0.0
    %1337 = vmatprep.subr.mxu0 0.0
    %1338 = vmatpush1.msra.mxu0 0.0
    %1339 = vmatprep.subr.mxu0 0.0
    %1340 = vmatpush1.msra.mxu0 0.0
    %1341 = vmatprep.subr.mxu0 0.0
    %1342 = vmatpush1.msra.mxu0 0.0
    %1343 = vmatprep.subr.mxu0 0.0
    %1344 = vmatpush1.msra.mxu0 0.0
    %1345 = vmatprep.subr.mxu0 0.0
    %1346 = vmatpush1.msra.mxu0 0.0
    %1347 = vmatprep.subr.mxu0 0.0
    %1348 = vmatpush1.msra.mxu0 0.0
    %1349 = vmatprep.subr.mxu0 0.0
    %1350 = vmatpush1.msra.mxu0 0.0
    %1351 = vmatprep.subr.mxu0 0.0
    %1352 = vmatpush1.msra.mxu0 0.0
    %1353 = vmatprep.subr.mxu0 0.0
    %1354 = vmatpush1.msra.mxu0 0.0
    %1355 = vmatprep.subr.mxu0 0.0
    %1356 = vmatpush1.msra.mxu0 0.0
    %1357 = vmatprep.subr.mxu0 0.0
    %1358 = vmatpush1.msra.mxu0 0.0
    %1359 = vmatprep.mubr.f32.mxu0 0.0
    %1360 = vmatmul.mubr.f32.gmra.mrb[0].mxu0 %v1290
    %v1361 = vpop.f32.mrb[0].mxu0
    %v1362 = vadd.f32 0.0, %v1361
    %v1363 = vpop.f32.mrb[0].mxu0
    %1364 = vmatprep.mubr.f32.mxu0 0.0
    %1365 = vmatmul.mubr.f32.gmra.mrb[0].mxu0 %v1293
    %v1366 = vpop.f32.mrb[0].mxu0
    %v1367 = vadd.f32 0.0, %v1366
    %v1368 = vpop.f32.mrb[0].mxu0
    %1369 = vdwg.mxu0
    %v1371 = vsel %vm315, %v1362, 0
    %v1374 = vsel %vm315, %v1367, 0
    %1376 = vmatprep.subr.mxu0 0.0
    %1377 = vmatpush1.msra.mxu0 %v308
    %1378 = vmatprep.subr.mxu0 0.0
    %1379 = vmatpush1.msra.mxu0 0.0
    %1380 = vmatprep.subr.mxu0 0.0
    %1381 = vmatpush1.msra.mxu0 0.0
    %1382 = vmatprep.subr.mxu0 0.0
    %1383 = vmatpush1.msra.mxu0 0.0
    %1384 = vmatprep.subr.mxu0 0.0
    %1385 = vmatpush1.msra.mxu0 0.0
    %1386 = vmatprep.subr.mxu0 0.0
    %1387 = vmatpush1.msra.mxu0 0.0
    %1388 = vmatprep.subr.mxu0 0.0
    %1389 = vmatpush1.msra.mxu0 0.0
    %1390 = vmatprep.subr.mxu0 0.0
    %1391 = vmatpush1.msra.mxu0 0.0
    %1392 = vmatprep.subr.mxu0 0.0
    %1393 = vmatpush1.msra.mxu0 0.0
    %1394 = vmatprep.subr.mxu0 0.0
    %1395 = vmatpush1.msra.mxu0 0.0
    %1396 = vmatprep.subr.mxu0 0.0
    %1397 = vmatpush1.msra.mxu0 0.0
    %1398 = vmatprep.subr.mxu0 0.0
    %1399 = vmatpush1.msra.mxu0 0.0
    %1400 = vmatprep.subr.mxu0 0.0
    %1401 = vmatpush1.msra.mxu0 0.0
    %1402 = vmatprep.subr.mxu0 0.0
    %1403 = vmatpush1.msra.mxu0 0.0
    %1404 = vmatprep.subr.mxu0 0.0
    %1405 = vmatpush1.msra.mxu0 0.0
    %1406 = vmatprep.subr.mxu0 0.0
    %1407 = vmatpush1.msra.mxu0 0.0
    %1408 = vmatprep.subr.mxu0 0.0
    %1409 = vmatpush1.msra.mxu0 0.0
    %1410 = vmatprep.subr.mxu0 0.0
    %1411 = vmatpush1.msra.mxu0 0.0
    %1412 = vmatprep.subr.mxu0 0.0
    %1413 = vmatpush1.msra.mxu0 0.0
    %1414 = vmatprep.subr.mxu0 0.0
    %1415 = vmatpush1.msra.mxu0 0.0
    %1416 = vmatprep.subr.mxu0 0.0
    %1417 = vmatpush1.msra.mxu0 0.0
    %1418 = vmatprep.subr.mxu0 0.0
    %1419 = vmatpush1.msra.mxu0 0.0
    %1420 = vmatprep.subr.mxu0 0.0
    %1421 = vmatpush1.msra.mxu0 0.0
    %1422 = vmatprep.subr.mxu0 0.0
    %1423 = vmatpush1.msra.mxu0 0.0
    %1424 = vmatprep.subr.mxu0 0.0
    %1425 = vmatpush1.msra.mxu0 0.0
    %1426 = vmatprep.subr.mxu0 0.0
    %1427 = vmatpush1.msra.mxu0 0.0
    %1428 = vmatprep.subr.mxu0 0.0
    %1429 = vmatpush1.msra.mxu0 0.0
    %1430 = vmatprep.subr.mxu0 0.0
    %1431 = vmatpush1.msra.mxu0 0.0
    %1432 = vmatprep.subr.mxu0 0.0
    %1433 = vmatpush1.msra.mxu0 0.0
    %1434 = vmatprep.subr.mxu0 0.0
    %1435 = vmatpush1.msra.mxu0 0.0
    %1436 = vmatprep.subr.mxu0 0.0
    %1437 = vmatpush1.msra.mxu0 0.0
    %1438 = vmatprep.subr.mxu0 0.0
    %1439 = vmatpush1.msra.mxu0 0.0
    %1440 = vmatprep.mubr.f32.mxu0 0.0
    %1441 = vmatmul.mubr.f32.gmra.mrb[0].mxu0 %v1371
    %v1442 = vpop.f32.mrb[0].mxu0
    %v1443 = vadd.f32 0.0, %v1442
    %v1444 = vpop.f32.mrb[0].mxu0
    %1445 = vmatprep.mubr.f32.mxu0 0.0
    %1446 = vmatmul.mubr.f32.gmra.mrb[0].mxu0 %v1374
    %v1447 = vpop.f32.mrb[0].mxu0
    %v1448 = vadd.f32 0.0, %v1447
    %v1449 = vpop.f32.mrb[0].mxu0
    %1450 = vdwg.mxu0
    %v1451 = vadd.f32 %v1164, %v1443
    %v1452 = vadd.f32 %v1165, %v1448
    %v1453 = vlaneseq
    %v1454 = vshrl.u32 %v1453, 7
    %v1455 = vsub.s32 0, %v1454
    %v1456 = vrot.slane %v162, %v1455
    %v1457 = vadd.f32 %v1451, %v1456
    %v1458 = vadd.f32 %v1452, %v1456
    %v1459 = vadd.f32 %v154, %v1457
    %v1460 = vadd.f32 %v155, %v1458
    %v1461 = vsel %vm165, %v1459, 0.0
    %1462 = vadd.xlane.f32.xlu0 %v1461
    %v1463 = vpop.xlane.xlu0 %1462
    %v1464 = vsel %vm165, %v1460, 0.0
    %1465 = vadd.xlane.f32.xlu0 %v1464
    %v1466 = vpop.xlane.xlu0 %1465
    %v1467 = vmul.f32 %v1463, %v172
    %v1468 = vmul.f32 %v1466, %v172
    %v1469 = vsub.f32 %v1459, %v1467
    %v1470 = vsub.f32 %v1460, %v1468
    %v1471 = vmul.f32 %v1469, %v1469
    %v1472 = vmul.f32 %v1470, %v1470
    %v1473 = vsel %vm165, %v1471, 0.0
    %1474 = vadd.xlane.f32.xlu0 %v1473
    %v1475 = vpop.xlane.xlu0 %1474
    %v1476 = vsel %vm165, %v1472, 0.0
    %1477 = vadd.xlane.f32.xlu0 %v1476
    %v1478 = vpop.xlane.xlu0 %1477
    %v1479 = vmul.f32 %v1475, %v185
    %v1480 = vmul.f32 %v1478, %v185
    %v1481 = vrsqrt.pop %v1479
    %v1482 = vmul.f32 %v1479, %v1481
    %vm1483 = vcmp.eq.f32.partialorder %v1479, inf
    %v1484 = vsel %vm1483, %v1479, %v1482
    %vm1485 = vcmp.eq.f32.partialorder %v1479, 0.0
    %v1486 = vand.u32 %v1479, 2147483648
    %v1487 = vsel %vm1485, %v1486, %v1484
    %v1488 = vrsqrt.pop %v1480
    %v1489 = vmul.f32 %v1480, %v1488
    %vm1490 = vcmp.eq.f32.partialorder %v1480, inf
    %v1491 = vsel %vm1490, %v1480, %v1489
    %vm1492 = vcmp.eq.f32.partialorder %v1480, 0.0
    %v1493 = vand.u32 %v1480, 2147483648
    %v1494 = vsel %vm1492, %v1493, %v1491
    %v1495 = vlaneseq
    %v1496 = vshrl.u32 %v1495, 7
    %v1497 = vsub.s32 5, %v1496
    %v1498 = vrot.slane %v162, %v1497
    %v1499 = vmul.f32 %v1498, %v1469
    %v1500 = vmul.f32 %v1498, %v1470
    %v1501 = vadd.f32 %v1487, 1e-06
    %v1502 = vadd.f32 %v1494, 1e-06
    %v1503 = vrcp.pop %v1501
    %v1504 = vmul.f32 %v1499, %v1503
    %v1505 = vrcp.pop %v1502
    %v1506 = vmul.f32 %v1500, %v1505
    %v1507 = vlaneseq
    %v1508 = vshrl.u32 %v1507, 7
    %v1509 = vsub.s32 6, %v1508
    %v1510 = vrot.slane %v162, %v1509
    %v1511 = vadd.f32 %v1504, %v1510
    %v1512 = vadd.f32 %v1506, %v1510
    %v1513 = vld [vmem:[%s6] sm:$0xff]
    %v1514 = vld [vmem:[%s6 + $0x8] sm:$0xff]
    %v1515 = vld [vmem:[%s6 + $0x10] sm:$0xff]
    %v1516 = vld [vmem:[%s6 + $0x18] sm:$0xff]
    %v1518 = vsel %vm165, %v1511, 0
    %v1521 = vsel %vm165, %v1512, 0
    %1523 = vmatprep.subr.mxu0 0.0
    %1524 = vmatpush1.msra.mxu0 %v1513
    %1525 = vmatprep.subr.mxu0 0.0
    %1526 = vmatpush1.msra.mxu0 %v1514
    %1527 = vmatprep.subr.mxu0 0.0
    %1528 = vmatpush1.msra.mxu0 %v1515
    %1529 = vmatprep.subr.mxu0 0.0
    %1530 = vmatpush1.msra.mxu0 %v1516
    %1531 = vmatprep.subr.mxu0 0.0
    %1532 = vmatpush1.msra.mxu0 0.0
    %1533 = vmatprep.subr.mxu0 0.0
    %1534 = vmatpush1.msra.mxu0 0.0
    %1535 = vmatprep.subr.mxu0 0.0
    %1536 = vmatpush1.msra.mxu0 0.0
    %1537 = vmatprep.subr.mxu0 0.0
    %1538 = vmatpush1.msra.mxu0 0.0
    %1539 = vmatprep.subr.mxu0 0.0
    %1540 = vmatpush1.msra.mxu0 0.0
    %1541 = vmatprep.subr.mxu0 0.0
    %1542 = vmatpush1.msra.mxu0 0.0
    %1543 = vmatprep.subr.mxu0 0.0
    %1544 = vmatpush1.msra.mxu0 0.0
    %1545 = vmatprep.subr.mxu0 0.0
    %1546 = vmatpush1.msra.mxu0 0.0
    %1547 = vmatprep.subr.mxu0 0.0
    %1548 = vmatpush1.msra.mxu0 0.0
    %1549 = vmatprep.subr.mxu0 0.0
    %1550 = vmatpush1.msra.mxu0 0.0
    %1551 = vmatprep.subr.mxu0 0.0
    %1552 = vmatpush1.msra.mxu0 0.0
    %1553 = vmatprep.subr.mxu0 0.0
    %1554 = vmatpush1.msra.mxu0 0.0
    %1555 = vmatprep.subr.mxu0 0.0
    %1556 = vmatpush1.msra.mxu0 0.0
    %1557 = vmatprep.subr.mxu0 0.0
    %1558 = vmatpush1.msra.mxu0 0.0
    %1559 = vmatprep.subr.mxu0 0.0
    %1560 = vmatpush1.msra.mxu0 0.0
    %1561 = vmatprep.subr.mxu0 0.0
    %1562 = vmatpush1.msra.mxu0 0.0
    %1563 = vmatprep.subr.mxu0 0.0
    %1564 = vmatpush1.msra.mxu0 0.0
    %1565 = vmatprep.subr.mxu0 0.0
    %1566 = vmatpush1.msra.mxu0 0.0
    %1567 = vmatprep.subr.mxu0 0.0
    %1568 = vmatpush1.msra.mxu0 0.0
    %1569 = vmatprep.subr.mxu0 0.0
    %1570 = vmatpush1.msra.mxu0 0.0
    %1571 = vmatprep.subr.mxu0 0.0
    %1572 = vmatpush1.msra.mxu0 0.0
    %1573 = vmatprep.subr.mxu0 0.0
    %1574 = vmatpush1.msra.mxu0 0.0
    %1575 = vmatprep.subr.mxu0 0.0
    %1576 = vmatpush1.msra.mxu0 0.0
    %1577 = vmatprep.subr.mxu0 0.0
    %1578 = vmatpush1.msra.mxu0 0.0
    %1579 = vmatprep.subr.mxu0 0.0
    %1580 = vmatpush1.msra.mxu0 0.0
    %1581 = vmatprep.subr.mxu0 0.0
    %1582 = vmatpush1.msra.mxu0 0.0
    %1583 = vmatprep.subr.mxu0 0.0
    %1584 = vmatpush1.msra.mxu0 0.0
    %1585 = vmatprep.subr.mxu0 0.0
    %1586 = vmatpush1.msra.mxu0 0.0
    %1587 = vmatprep.mubr.f32.mxu0 0.0
    %1588 = vmatmul.mubr.f32.gmra.mrb[0].mxu0 %v1518
    %v1589 = vpop.f32.mrb[0].mxu0
    %v1590 = vadd.f32 0.0, %v1589
    %v1591 = vpop.f32.mrb[0].mxu0
    %1592 = vmatprep.mubr.f32.mxu0 0.0
    %1593 = vmatmul.mubr.f32.gmra.mrb[0].mxu0 %v1521
    %v1594 = vpop.f32.mrb[0].mxu0
    %v1595 = vadd.f32 0.0, %v1594
    %v1596 = vpop.f32.mrb[0].mxu0
    %1597 = vdwg.mxu0
    %v1598 = vld [vmem:[#allocation10] sm:$0xff]
    %v1599 = vld [vmem:[#allocation10 + $0x8] sm:$0xff]
    %v1600 = vld [vmem:[#allocation10 + $0x10] sm:$0xff]
    %v1601 = vld [vmem:[#allocation10 + $0x18] sm:$0xff]
    %v1603 = vsel %vm165, %v156, 0
    %v1606 = vsel %vm165, %v157, 0
    %1608 = vmatprep.subr.mxu0 0.0
    %1609 = vmatpush1.msra.mxu0 %v1598
    %1610 = vmatprep.subr.mxu0 0.0
    %1611 = vmatpush1.msra.mxu0 %v1599
    %1612 = vmatprep.subr.mxu0 0.0
    %1613 = vmatpush1.msra.mxu0 %v1600
    %1614 = vmatprep.subr.mxu0 0.0
    %1615 = vmatpush1.msra.mxu0 %v1601
    %1616 = vmatprep.subr.mxu0 0.0
    %1617 = vmatpush1.msra.mxu0 0.0
    %1618 = vmatprep.subr.mxu0 0.0
    %1619 = vmatpush1.msra.mxu0 0.0
    %1620 = vmatprep.subr.mxu0 0.0
    %1621 = vmatpush1.msra.mxu0 0.0
    %1622 = vmatprep.subr.mxu0 0.0
    %1623 = vmatpush1.msra.mxu0 0.0
    %1624 = vmatprep.subr.mxu0 0.0
    %1625 = vmatpush1.msra.mxu0 0.0
    %1626 = vmatprep.subr.mxu0 0.0
    %1627 = vmatpush1.msra.mxu0 0.0
    %1628 = vmatprep.subr.mxu0 0.0
    %1629 = vmatpush1.msra.mxu0 0.0
    %1630 = vmatprep.subr.mxu0 0.0
    %1631 = vmatpush1.msra.mxu0 0.0
    %1632 = vmatprep.subr.mxu0 0.0
    %1633 = vmatpush1.msra.mxu0 0.0
    %1634 = vmatprep.subr.mxu0 0.0
    %1635 = vmatpush1.msra.mxu0 0.0
    %1636 = vmatprep.subr.mxu0 0.0
    %1637 = vmatpush1.msra.mxu0 0.0
    %1638 = vmatprep.subr.mxu0 0.0
    %1639 = vmatpush1.msra.mxu0 0.0
    %1640 = vmatprep.subr.mxu0 0.0
    %1641 = vmatpush1.msra.mxu0 0.0
    %1642 = vmatprep.subr.mxu0 0.0
    %1643 = vmatpush1.msra.mxu0 0.0
    %1644 = vmatprep.subr.mxu0 0.0
    %1645 = vmatpush1.msra.mxu0 0.0
    %1646 = vmatprep.subr.mxu0 0.0
    %1647 = vmatpush1.msra.mxu0 0.0
    %1648 = vmatprep.subr.mxu0 0.0
    %1649 = vmatpush1.msra.mxu0 0.0
    %1650 = vmatprep.subr.mxu0 0.0
    %1651 = vmatpush1.msra.mxu0 0.0
    %1652 = vmatprep.subr.mxu0 0.0
    %1653 = vmatpush1.msra.mxu0 0.0
    %1654 = vmatprep.subr.mxu0 0.0
    %1655 = vmatpush1.msra.mxu0 0.0
    %1656 = vmatprep.subr.mxu0 0.0
    %1657 = vmatpush1.msra.mxu0 0.0
    %1658 = vmatprep.subr.mxu0 0.0
    %1659 = vmatpush1.msra.mxu0 0.0
    %1660 = vmatprep.subr.mxu0 0.0
    %1661 = vmatpush1.msra.mxu0 0.0
    %1662 = vmatprep.subr.mxu0 0.0
    %1663 = vmatpush1.msra.mxu0 0.0
    %1664 = vmatprep.subr.mxu0 0.0
    %1665 = vmatpush1.msra.mxu0 0.0
    %1666 = vmatprep.subr.mxu0 0.0
    %1667 = vmatpush1.msra.mxu0 0.0
    %1668 = vmatprep.subr.mxu0 0.0
    %1669 = vmatpush1.msra.mxu0 0.0
    %1670 = vmatprep.subr.mxu0 0.0
    %1671 = vmatpush1.msra.mxu0 0.0
    %1672 = vmatprep.mubr.f32.mxu0 0.0
    %1673 = vmatmul.mubr.f32.gmra.mrb[0].mxu0 %v1603
    %v1674 = vpop.f32.mrb[0].mxu0
    %v1675 = vadd.f32 0.0, %v1674
    %v1676 = vpop.f32.mrb[0].mxu0
    %1677 = vmatprep.mubr.f32.mxu0 0.0
    %1678 = vmatmul.mubr.f32.gmra.mrb[0].mxu0 %v1606
    %v1679 = vpop.f32.mrb[0].mxu0
    %v1680 = vadd.f32 0.0, %v1679
    %v1681 = vpop.f32.mrb[0].mxu0
    %1682 = vdwg.mxu0
    %v1683 = vld [vmem:[#allocation11] sm:$0xff]
    %v1684 = vld [vmem:[#allocation11 + $0x8] sm:$0xff]
    %v1685 = vld [vmem:[#allocation11 + $0x10] sm:$0xff]
    %v1686 = vld [vmem:[#allocation11 + $0x18] sm:$0xff]
    %v1688 = vsel %vm315, %v1590, 0
    %v1691 = vsel %vm315, %v1595, 0
    %v1694 = vsel %vm315, %v1675, 0
    %v1697 = vsel %vm315, %v1680, 0
    %1699 = vmatprep.subr.mxu0 0.0
    %1700 = vmatpush1.xpose.msra.mxu0 %v1694
    %1701 = vmatprep.subr.mxu0 0.0
    %1702 = vmatpush1.xpose.msra.mxu0 %v1697
    %1703 = vmatprep.subr.mxu0 0.0
    %1704 = vmatpush1.xpose.msra.mxu0 0.0
    %1705 = vmatprep.subr.mxu0 0.0
    %1706 = vmatpush1.xpose.msra.mxu0 0.0
    %1707 = vmatprep.subr.mxu0 0.0
    %1708 = vmatpush1.xpose.msra.mxu0 0.0
    %1709 = vmatprep.subr.mxu0 0.0
    %1710 = vmatpush1.xpose.msra.mxu0 0.0
    %1711 = vmatprep.subr.mxu0 0.0
    %1712 = vmatpush1.xpose.msra.mxu0 0.0
    %1713 = vmatprep.subr.mxu0 0.0
    %1714 = vmatpush1.xpose.msra.mxu0 0.0
    %1715 = vmatprep.subr.mxu0 0.0
    %1716 = vmatpush1.xpose.msra.mxu0 0.0
    %1717 = vmatprep.subr.mxu0 0.0
    %1718 = vmatpush1.xpose.msra.mxu0 0.0
    %1719 = vmatprep.subr.mxu0 0.0
    %1720 = vmatpush1.xpose.msra.mxu0 0.0
    %1721 = vmatprep.subr.mxu0 0.0
    %1722 = vmatpush1.xpose.msra.mxu0 0.0
    %1723 = vmatprep.subr.mxu0 0.0
    %1724 = vmatpush1.xpose.msra.mxu0 0.0
    %1725 = vmatprep.subr.mxu0 0.0
    %1726 = vmatpush1.xpose.msra.mxu0 0.0
    %1727 = vmatprep.subr.mxu0 0.0
    %1728 = vmatpush1.xpose.msra.mxu0 0.0
    %1729 = vmatprep.subr.mxu0 0.0
    %1730 = vmatpush1.xpose.msra.mxu0 0.0
    %1731 = vmatprep.subr.mxu0 0.0
    %1732 = vmatpush1.xpose.msra.mxu0 0.0
    %1733 = vmatprep.subr.mxu0 0.0
    %1734 = vmatpush1.xpose.msra.mxu0 0.0
    %1735 = vmatprep.subr.mxu0 0.0
    %1736 = vmatpush1.xpose.msra.mxu0 0.0
    %1737 = vmatprep.subr.mxu0 0.0
    %1738 = vmatpush1.xpose.msra.mxu0 0.0
    %1739 = vmatprep.subr.mxu0 0.0
    %1740 = vmatpush1.xpose.msra.mxu0 0.0
    %1741 = vmatprep.subr.mxu0 0.0
    %1742 = vmatpush1.xpose.msra.mxu0 0.0
    %1743 = vmatprep.subr.mxu0 0.0
    %1744 = vmatpush1.xpose.msra.mxu0 0.0
    %1745 = vmatprep.subr.mxu0 0.0
    %1746 = vmatpush1.xpose.msra.mxu0 0.0
    %1747 = vmatprep.subr.mxu0 0.0
    %1748 = vmatpush1.xpose.msra.mxu0 0.0
    %1749 = vmatprep.subr.mxu0 0.0
    %1750 = vmatpush1.xpose.msra.mxu0 0.0
    %1751 = vmatprep.subr.mxu0 0.0
    %1752 = vmatpush1.xpose.msra.mxu0 0.0
    %1753 = vmatprep.subr.mxu0 0.0
    %1754 = vmatpush1.xpose.msra.mxu0 0.0
    %1755 = vmatprep.subr.mxu0 0.0
    %1756 = vmatpush1.xpose.msra.mxu0 0.0
    %1757 = vmatprep.subr.mxu0 0.0
    %1758 = vmatpush1.xpose.msra.mxu0 0.0
    %1759 = vmatprep.subr.mxu0 0.0
    %1760 = vmatpush1.xpose.msra.mxu0 0.0
    %1761 = vmatprep.subr.mxu0 0.0
    %1762 = vmatpush1.xpose.msra.mxu0 0.0
    %1763 = vmatprep.mubr.f32.mxu0 0.0
    %1764 = vmatmul.mubr.f32.gmra.mrb[0].mxu0 %v1688
    %v1765 = vpop.f32.mrb[0].mxu0
    %v1766 = vadd.f32 0.0, %v1765
    %v1767 = vpop.f32.mrb[0].mxu0
    %1768 = vmatprep.mubr.f32.mxu0 0.0
    %1769 = vmatmul.mubr.f32.gmra.mrb[0].mxu0 %v1691
    %v1770 = vpop.f32.mrb[0].mxu0
    %v1771 = vadd.f32 0.0, %v1770
    %v1772 = vpop.f32.mrb[0].mxu0
    %1773 = vdwg.mxu0
    %v1774 = vmul.f32 %v1766, 0.35355338
    %v1775 = vmul.f32 %v1771, 0.35355338
    %v1776 = vadd.f32 %v1774, %v160
    %v1777 = vadd.f32 %v1775, %v161
    %v1778 = vsel %vm403, %v1776, -inf
    %1779 = vmax.xlane.f32.xlu0 %v1778
    %v1780 = vpop.xlane.xlu0 %1779
    %v1781 = vsel %vm403, %v1777, -inf
    %1782 = vmax.xlane.f32.xlu0 %v1781
    %v1783 = vpop.xlane.xlu0 %1782
    %v1784 = vsub.f32 %v1776, %v1780
    %v1785 = vsub.f32 %v1777, %v1783
    %v1786 = vmul.f32 %v1784, 1.442695
    %v1787 = vpow.pop %v1786
    %v1788 = vmul.f32 %v1785, 1.442695
    %v1789 = vpow.pop %v1788
    %v1790 = vsel %vm403, %v1787, 0.0
    %1791 = vadd.xlane.f32.xlu0 %v1790
    %v1792 = vpop.xlane.xlu0 %1791
    %v1793 = vsel %vm403, %v1789, 0.0
    %1794 = vadd.xlane.f32.xlu0 %v1793
    %v1795 = vpop.xlane.xlu0 %1794
    %v1796 = vrcp.pop %v1792
    %v1797 = vrcp.pop %v1795
    %v1798 = vmul.f32 %v1787, %v1796
    %v1799 = vmul.f32 %v1789, %v1797
    %1800 = vrot.lane.b32.xlu0 %v1675, 96
    %v1801 = vpop.permute.xlu0 %1800
    %1802 = vrot.lane.b32.xlu0 %v1680, 96
    %v1803 = vpop.permute.xlu0 %1802
    %v1807 = vsel %vm403, %v1798, 0
    %v1810 = vsel %vm403, %v1799, 0
    %1812 = vmatprep.subr.mxu0 0.0
    %1813 = vmatpush1.msra.mxu0 %v1801
    %1814 = vmatprep.subr.mxu0 0.0
    %1815 = vmatpush1.msra.mxu0 %v1803
    %1816 = vmatprep.subr.mxu0 0.0
    %1817 = vmatpush1.msra.mxu0 0.0
    %1818 = vmatprep.subr.mxu0 0.0
    %1819 = vmatpush1.msra.mxu0 0.0
    %1820 = vmatprep.subr.mxu0 0.0
    %1821 = vmatpush1.msra.mxu0 0.0
    %1822 = vmatprep.subr.mxu0 0.0
    %1823 = vmatpush1.msra.mxu0 0.0
    %1824 = vmatprep.subr.mxu0 0.0
    %1825 = vmatpush1.msra.mxu0 0.0
    %1826 = vmatprep.subr.mxu0 0.0
    %1827 = vmatpush1.msra.mxu0 0.0
    %1828 = vmatprep.subr.mxu0 0.0
    %1829 = vmatpush1.msra.mxu0 0.0
    %1830 = vmatprep.subr.mxu0 0.0
    %1831 = vmatpush1.msra.mxu0 0.0
    %1832 = vmatprep.subr.mxu0 0.0
    %1833 = vmatpush1.msra.mxu0 0.0
    %1834 = vmatprep.subr.mxu0 0.0
    %1835 = vmatpush1.msra.mxu0 0.0
    %1836 = vmatprep.subr.mxu0 0.0
    %1837 = vmatpush1.msra.mxu0 0.0
    %1838 = vmatprep.subr.mxu0 0.0
    %1839 = vmatpush1.msra.mxu0 0.0
    %1840 = vmatprep.subr.mxu0 0.0
    %1841 = vmatpush1.msra.mxu0 0.0
    %1842 = vmatprep.subr.mxu0 0.0
    %1843 = vmatpush1.msra.mxu0 0.0
    %1844 = vmatprep.subr.mxu0 0.0
    %1845 = vmatpush1.msra.mxu0 0.0
    %1846 = vmatprep.subr.mxu0 0.0
    %1847 = vmatpush1.msra.mxu0 0.0
    %1848 = vmatprep.subr.mxu0 0.0
    %1849 = vmatpush1.msra.mxu0 0.0
    %1850 = vmatprep.subr.mxu0 0.0
    %1851 = vmatpush1.msra.mxu0 0.0
    %1852 = vmatprep.subr.mxu0 0.0
    %1853 = vmatpush1.msra.mxu0 0.0
    %1854 = vmatprep.subr.mxu0 0.0
    %1855 = vmatpush1.msra.mxu0 0.0
    %1856 = vmatprep.subr.mxu0 0.0
    %1857 = vmatpush1.msra.mxu0 0.0
    %1858 = vmatprep.subr.mxu0 0.0
    %1859 = vmatpush1.msra.mxu0 0.0
    %1860 = vmatprep.subr.mxu0 0.0
    %1861 = vmatpush1.msra.mxu0 0.0
    %1862 = vmatprep.subr.mxu0 0.0
    %1863 = vmatpush1.msra.mxu0 0.0
    %1864 = vmatprep.subr.mxu0 0.0
    %1865 = vmatpush1.msra.mxu0 0.0
    %1866 = vmatprep.subr.mxu0 0.0
    %1867 = vmatpush1.msra.mxu0 0.0
    %1868 = vmatprep.subr.mxu0 0.0
    %1869 = vmatpush1.msra.mxu0 0.0
    %1870 = vmatprep.subr.mxu0 0.0
    %1871 = vmatpush1.msra.mxu0 0.0
    %1872 = vmatprep.subr.mxu0 0.0
    %1873 = vmatpush1.msra.mxu0 0.0
    %1874 = vmatprep.subr.mxu0 0.0
    %1875 = vmatpush1.msra.mxu0 0.0
    %1876 = vmatprep.mubr.f32.mxu0 0.0
    %1877 = vmatmul.mubr.f32.gmra.mrb[0].mxu0 %v1807
    %v1878 = vpop.f32.mrb[0].mxu0
    %v1879 = vadd.f32 0.0, %v1878
    %v1880 = vpop.f32.mrb[0].mxu0
    %1881 = vmatprep.mubr.f32.mxu0 0.0
    %1882 = vmatmul.mubr.f32.gmra.mrb[0].mxu0 %v1810
    %v1883 = vpop.f32.mrb[0].mxu0
    %v1884 = vadd.f32 0.0, %v1883
    %v1885 = vpop.f32.mrb[0].mxu0
    %1886 = vdwg.mxu0
    %1887 = vrot.lane.b32.xlu0 %v1590, 120
    %v1888 = vpop.permute.xlu0 %1887
    %1889 = vrot.lane.b32.xlu0 %v1595, 120
    %v1890 = vpop.permute.xlu0 %1889
    %1891 = vrot.lane.b32.xlu0 %v1675, 120
    %v1892 = vpop.permute.xlu0 %1891
    %1893 = vrot.lane.b32.xlu0 %v1680, 120
    %v1894 = vpop.permute.xlu0 %1893
    %v1895 = vsel %vm315, %v1888, 0
    %v1897 = vsel %vm315, %v1890, 0
    %v1899 = vsel %vm315, %v1892, 0
    %v1901 = vsel %vm315, %v1894, 0
    %1903 = vmatprep.subr.mxu0 0.0
    %1904 = vmatpush1.xpose.msra.mxu0 %v1899
    %1905 = vmatprep.subr.mxu0 0.0
    %1906 = vmatpush1.xpose.msra.mxu0 %v1901
    %1907 = vmatprep.subr.mxu0 0.0
    %1908 = vmatpush1.xpose.msra.mxu0 0.0
    %1909 = vmatprep.subr.mxu0 0.0
    %1910 = vmatpush1.xpose.msra.mxu0 0.0
    %1911 = vmatprep.subr.mxu0 0.0
    %1912 = vmatpush1.xpose.msra.mxu0 0.0
    %1913 = vmatprep.subr.mxu0 0.0
    %1914 = vmatpush1.xpose.msra.mxu0 0.0
    %1915 = vmatprep.subr.mxu0 0.0
    %1916 = vmatpush1.xpose.msra.mxu0 0.0
    %1917 = vmatprep.subr.mxu0 0.0
    %1918 = vmatpush1.xpose.msra.mxu0 0.0
    %1919 = vmatprep.subr.mxu0 0.0
    %1920 = vmatpush1.xpose.msra.mxu0 0.0
    %1921 = vmatprep.subr.mxu0 0.0
    %1922 = vmatpush1.xpose.msra.mxu0 0.0
    %1923 = vmatprep.subr.mxu0 0.0
    %1924 = vmatpush1.xpose.msra.mxu0 0.0
    %1925 = vmatprep.subr.mxu0 0.0
    %1926 = vmatpush1.xpose.msra.mxu0 0.0
    %1927 = vmatprep.subr.mxu0 0.0
    %1928 = vmatpush1.xpose.msra.mxu0 0.0
    %1929 = vmatprep.subr.mxu0 0.0
    %1930 = vmatpush1.xpose.msra.mxu0 0.0
    %1931 = vmatprep.subr.mxu0 0.0
    %1932 = vmatpush1.xpose.msra.mxu0 0.0
    %1933 = vmatprep.subr.mxu0 0.0
    %1934 = vmatpush1.xpose.msra.mxu0 0.0
    %1935 = vmatprep.subr.mxu0 0.0
    %1936 = vmatpush1.xpose.msra.mxu0 0.0
    %1937 = vmatprep.subr.mxu0 0.0
    %1938 = vmatpush1.xpose.msra.mxu0 0.0
    %1939 = vmatprep.subr.mxu0 0.0
    %1940 = vmatpush1.xpose.msra.mxu0 0.0
    %1941 = vmatprep.subr.mxu0 0.0
    %1942 = vmatpush1.xpose.msra.mxu0 0.0
    %1943 = vmatprep.subr.mxu0 0.0
    %1944 = vmatpush1.xpose.msra.mxu0 0.0
    %1945 = vmatprep.subr.mxu0 0.0
    %1946 = vmatpush1.xpose.msra.mxu0 0.0
    %1947 = vmatprep.subr.mxu0 0.0
    %1948 = vmatpush1.xpose.msra.mxu0 0.0
    %1949 = vmatprep.subr.mxu0 0.0
    %1950 = vmatpush1.xpose.msra.mxu0 0.0
    %1951 = vmatprep.subr.mxu0 0.0
    %1952 = vmatpush1.xpose.msra.mxu0 0.0
    %1953 = vmatprep.subr.mxu0 0.0
    %1954 = vmatpush1.xpose.msra.mxu0 0.0
    %1955 = vmatprep.subr.mxu0 0.0
    %1956 = vmatpush1.xpose.msra.mxu0 0.0
    %1957 = vmatprep.subr.mxu0 0.0
    %1958 = vmatpush1.xpose.msra.mxu0 0.0
    %1959 = vmatprep.subr.mxu0 0.0
    %1960 = vmatpush1.xpose.msra.mxu0 0.0
    %1961 = vmatprep.subr.mxu0 0.0
    %1962 = vmatpush1.xpose.msra.mxu0 0.0
    %1963 = vmatprep.subr.mxu0 0.0
    %1964 = vmatpush1.xpose.msra.mxu0 0.0
    %1965 = vmatprep.subr.mxu0 0.0
    %1966 = vmatpush1.xpose.msra.mxu0 0.0
    %1967 = vmatprep.mubr.f32.mxu0 0.0
    %1968 = vmatmul.mubr.f32.gmra.mrb[0].mxu0 %v1895
    %v1969 = vpop.f32.mrb[0].mxu0
    %v1970 = vadd.f32 0.0, %v1969
    %v1971 = vpop.f32.mrb[0].mxu0
    %1972 = vmatprep.mubr.f32.mxu0 0.0
    %1973 = vmatmul.mubr.f32.gmra.mrb[0].mxu0 %v1897
    %v1974 = vpop.f32.mrb[0].mxu0
    %v1975 = vadd.f32 0.0, %v1974
    %v1976 = vpop.f32.mrb[0].mxu0
    %1977 = vdwg.mxu0
    %v1978 = vmul.f32 %v1970, 0.35355338
    %v1979 = vmul.f32 %v1975, 0.35355338
    %v1980 = vadd.f32 %v1978, %v160
    %v1981 = vadd.f32 %v1979, %v161
    %v1982 = vsel %vm403, %v1980, -inf
    %1983 = vmax.xlane.f32.xlu0 %v1982
    %v1984 = vpop.xlane.xlu0 %1983
    %v1985 = vsel %vm403, %v1981, -inf
    %1986 = vmax.xlane.f32.xlu0 %v1985
    %v1987 = vpop.xlane.xlu0 %1986
    %v1988 = vsub.f32 %v1980, %v1984
    %v1989 = vsub.f32 %v1981, %v1987
    %v1990 = vmul.f32 %v1988, 1.442695
    %v1991 = vpow.pop %v1990
    %v1992 = vmul.f32 %v1989, 1.442695
    %v1993 = vpow.pop %v1992
    %v1994 = vsel %vm403, %v1991, 0.0
    %1995 = vadd.xlane.f32.xlu0 %v1994
    %v1996 = vpop.xlane.xlu0 %1995
    %v1997 = vsel %vm403, %v1993, 0.0
    %1998 = vadd.xlane.f32.xlu0 %v1997
    %v1999 = vpop.xlane.xlu0 %1998
    %v2000 = vrcp.pop %v1996
    %v2001 = vrcp.pop %v1999
    %v2002 = vmul.f32 %v1991, %v2000
    %v2003 = vmul.f32 %v1993, %v2001
    %2004 = vrot.lane.b32.xlu0 %v1675, 88
    %v2005 = vpop.permute.xlu0 %2004
    %2006 = vrot.lane.b32.xlu0 %v1680, 88
    %v2007 = vpop.permute.xlu0 %2006
    %v2011 = vsel %vm403, %v2002, 0
    %v2014 = vsel %vm403, %v2003, 0
    %2016 = vmatprep.subr.mxu0 0.0
    %2017 = vmatpush1.msra.mxu0 %v2005
    %2018 = vmatprep.subr.mxu0 0.0
    %2019 = vmatpush1.msra.mxu0 %v2007
    %2020 = vmatprep.subr.mxu0 0.0
    %2021 = vmatpush1.msra.mxu0 0.0
    %2022 = vmatprep.subr.mxu0 0.0
    %2023 = vmatpush1.msra.mxu0 0.0
    %2024 = vmatprep.subr.mxu0 0.0
    %2025 = vmatpush1.msra.mxu0 0.0
    %2026 = vmatprep.subr.mxu0 0.0
    %2027 = vmatpush1.msra.mxu0 0.0
    %2028 = vmatprep.subr.mxu0 0.0
    %2029 = vmatpush1.msra.mxu0 0.0
    %2030 = vmatprep.subr.mxu0 0.0
    %2031 = vmatpush1.msra.mxu0 0.0
    %2032 = vmatprep.subr.mxu0 0.0
    %2033 = vmatpush1.msra.mxu0 0.0
    %2034 = vmatprep.subr.mxu0 0.0
    %2035 = vmatpush1.msra.mxu0 0.0
    %2036 = vmatprep.subr.mxu0 0.0
    %2037 = vmatpush1.msra.mxu0 0.0
    %2038 = vmatprep.subr.mxu0 0.0
    %2039 = vmatpush1.msra.mxu0 0.0
    %2040 = vmatprep.subr.mxu0 0.0
    %2041 = vmatpush1.msra.mxu0 0.0
    %2042 = vmatprep.subr.mxu0 0.0
    %2043 = vmatpush1.msra.mxu0 0.0
    %2044 = vmatprep.subr.mxu0 0.0
    %2045 = vmatpush1.msra.mxu0 0.0
    %2046 = vmatprep.subr.mxu0 0.0
    %2047 = vmatpush1.msra.mxu0 0.0
    %2048 = vmatprep.subr.mxu0 0.0
    %2049 = vmatpush1.msra.mxu0 0.0
    %2050 = vmatprep.subr.mxu0 0.0
    %2051 = vmatpush1.msra.mxu0 0.0
    %2052 = vmatprep.subr.mxu0 0.0
    %2053 = vmatpush1.msra.mxu0 0.0
    %2054 = vmatprep.subr.mxu0 0.0
    %2055 = vmatpush1.msra.mxu0 0.0
    %2056 = vmatprep.subr.mxu0 0.0
    %2057 = vmatpush1.msra.mxu0 0.0
    %2058 = vmatprep.subr.mxu0 0.0
    %2059 = vmatpush1.msra.mxu0 0.0
    %2060 = vmatprep.subr.mxu0 0.0
    %2061 = vmatpush1.msra.mxu0 0.0
    %2062 = vmatprep.subr.mxu0 0.0
    %2063 = vmatpush1.msra.mxu0 0.0
    %2064 = vmatprep.subr.mxu0 0.0
    %2065 = vmatpush1.msra.mxu0 0.0
    %2066 = vmatprep.subr.mxu0 0.0
    %2067 = vmatpush1.msra.mxu0 0.0
    %2068 = vmatprep.subr.mxu0 0.0
    %2069 = vmatpush1.msra.mxu0 0.0
    %2070 = vmatprep.subr.mxu0 0.0
    %2071 = vmatpush1.msra.mxu0 0.0
    %2072 = vmatprep.subr.mxu0 0.0
    %2073 = vmatpush1.msra.mxu0 0.0
    %2074 = vmatprep.subr.mxu0 0.0
    %2075 = vmatpush1.msra.mxu0 0.0
    %2076 = vmatprep.subr.mxu0 0.0
    %2077 = vmatpush1.msra.mxu0 0.0
    %2078 = vmatprep.subr.mxu0 0.0
    %2079 = vmatpush1.msra.mxu0 0.0
    %2080 = vmatprep.mubr.f32.mxu0 0.0
    %2081 = vmatmul.mubr.f32.gmra.mrb[0].mxu0 %v2011
    %v2082 = vpop.f32.mrb[0].mxu0
    %v2083 = vadd.f32 0.0, %v2082
    %v2084 = vpop.f32.mrb[0].mxu0
    %2085 = vmatprep.mubr.f32.mxu0 0.0
    %2086 = vmatmul.mubr.f32.gmra.mrb[0].mxu0 %v2014
    %v2087 = vpop.f32.mrb[0].mxu0
    %v2088 = vadd.f32 0.0, %v2087
    %v2089 = vpop.f32.mrb[0].mxu0
    %2090 = vdwg.mxu0
    %v2092 = vsel %vm315, %v2083, 0
    %v2095 = vsel %vm315, %v2088, 0
    %2097 = vmatprep.subr.mxu0 0.0
    %2098 = vmatpush1.msra.mxu0 %v1684
    %2099 = vmatprep.subr.mxu0 0.0
    %2100 = vmatpush1.msra.mxu0 0.0
    %2101 = vmatprep.subr.mxu0 0.0
    %2102 = vmatpush1.msra.mxu0 0.0
    %2103 = vmatprep.subr.mxu0 0.0
    %2104 = vmatpush1.msra.mxu0 0.0
    %2105 = vmatprep.subr.mxu0 0.0
    %2106 = vmatpush1.msra.mxu0 0.0
    %2107 = vmatprep.subr.mxu0 0.0
    %2108 = vmatpush1.msra.mxu0 0.0
    %2109 = vmatprep.subr.mxu0 0.0
    %2110 = vmatpush1.msra.mxu0 0.0
    %2111 = vmatprep.subr.mxu0 0.0
    %2112 = vmatpush1.msra.mxu0 0.0
    %2113 = vmatprep.subr.mxu0 0.0
    %2114 = vmatpush1.msra.mxu0 0.0
    %2115 = vmatprep.subr.mxu0 0.0
    %2116 = vmatpush1.msra.mxu0 0.0
    %2117 = vmatprep.subr.mxu0 0.0
    %2118 = vmatpush1.msra.mxu0 0.0
    %2119 = vmatprep.subr.mxu0 0.0
    %2120 = vmatpush1.msra.mxu0 0.0
    %2121 = vmatprep.subr.mxu0 0.0
    %2122 = vmatpush1.msra.mxu0 0.0
    %2123 = vmatprep.subr.mxu0 0.0
    %2124 = vmatpush1.msra.mxu0 0.0
    %2125 = vmatprep.subr.mxu0 0.0
    %2126 = vmatpush1.msra.mxu0 0.0
    %2127 = vmatprep.subr.mxu0 0.0
    %2128 = vmatpush1.msra.mxu0 0.0
    %2129 = vmatprep.subr.mxu0 0.0
    %2130 = vmatpush1.msra.mxu0 0.0
    %2131 = vmatprep.subr.mxu0 0.0
    %2132 = vmatpush1.msra.mxu0 0.0
    %2133 = vmatprep.subr.mxu0 0.0
    %2134 = vmatpush1.msra.mxu0 0.0
    %2135 = vmatprep.subr.mxu0 0.0
    %2136 = vmatpush1.msra.mxu0 0.0
    %2137 = vmatprep.subr.mxu0 0.0
    %2138 = vmatpush1.msra.mxu0 0.0
    %2139 = vmatprep.subr.mxu0 0.0
    %2140 = vmatpush1.msra.mxu0 0.0
    %2141 = vmatprep.subr.mxu0 0.0
    %2142 = vmatpush1.msra.mxu0 0.0
    %2143 = vmatprep.subr.mxu0 0.0
    %2144 = vmatpush1.msra.mxu0 0.0
    %2145 = vmatprep.subr.mxu0 0.0
    %2146 = vmatpush1.msra.mxu0 0.0
    %2147 = vmatprep.subr.mxu0 0.0
    %2148 = vmatpush1.msra.mxu0 0.0
    %2149 = vmatprep.subr.mxu0 0.0
    %2150 = vmatpush1.msra.mxu0 0.0
    %2151 = vmatprep.subr.mxu0 0.0
    %2152 = vmatpush1.msra.mxu0 0.0
    %2153 = vmatprep.subr.mxu0 0.0
    %2154 = vmatpush1.msra.mxu0 0.0
    %2155 = vmatprep.subr.mxu0 0.0
    %2156 = vmatpush1.msra.mxu0 0.0
    %2157 = vmatprep.subr.mxu0 0.0
    %2158 = vmatpush1.msra.mxu0 0.0
    %2159 = vmatprep.subr.mxu0 0.0
    %2160 = vmatpush1.msra.mxu0 0.0
    %2161 = vmatprep.mubr.f32.mxu0 0.0
    %2162 = vmatmul.mubr.f32.gmra.mrb[0].mxu0 %v2092
    %v2163 = vpop.f32.mrb[0].mxu0
    %v2164 = vadd.f32 0.0, %v2163
    %v2165 = vpop.f32.mrb[0].mxu0
    %2166 = vmatprep.mubr.f32.mxu0 0.0
    %2167 = vmatmul.mubr.f32.gmra.mrb[0].mxu0 %v2095
    %v2168 = vpop.f32.mrb[0].mxu0
    %v2169 = vadd.f32 0.0, %v2168
    %v2170 = vpop.f32.mrb[0].mxu0
    %2171 = vdwg.mxu0
    %v2173 = vsel %vm315, %v1879, 0
    %v2176 = vsel %vm315, %v1884, 0
    %2178 = vmatprep.subr.mxu0 0.0
    %2179 = vmatpush1.msra.mxu0 %v1683
    %2180 = vmatprep.subr.mxu0 0.0
    %2181 = vmatpush1.msra.mxu0 0.0
    %2182 = vmatprep.subr.mxu0 0.0
    %2183 = vmatpush1.msra.mxu0 0.0
    %2184 = vmatprep.subr.mxu0 0.0
    %2185 = vmatpush1.msra.mxu0 0.0
    %2186 = vmatprep.subr.mxu0 0.0
    %2187 = vmatpush1.msra.mxu0 0.0
    %2188 = vmatprep.subr.mxu0 0.0
    %2189 = vmatpush1.msra.mxu0 0.0
    %2190 = vmatprep.subr.mxu0 0.0
    %2191 = vmatpush1.msra.mxu0 0.0
    %2192 = vmatprep.subr.mxu0 0.0
    %2193 = vmatpush1.msra.mxu0 0.0
    %2194 = vmatprep.subr.mxu0 0.0
    %2195 = vmatpush1.msra.mxu0 0.0
    %2196 = vmatprep.subr.mxu0 0.0
    %2197 = vmatpush1.msra.mxu0 0.0
    %2198 = vmatprep.subr.mxu0 0.0
    %2199 = vmatpush1.msra.mxu0 0.0
    %2200 = vmatprep.subr.mxu0 0.0
    %2201 = vmatpush1.msra.mxu0 0.0
    %2202 = vmatprep.subr.mxu0 0.0
    %2203 = vmatpush1.msra.mxu0 0.0
    %2204 = vmatprep.subr.mxu0 0.0
    %2205 = vmatpush1.msra.mxu0 0.0
    %2206 = vmatprep.subr.mxu0 0.0
    %2207 = vmatpush1.msra.mxu0 0.0
    %2208 = vmatprep.subr.mxu0 0.0
    %2209 = vmatpush1.msra.mxu0 0.0
    %2210 = vmatprep.subr.mxu0 0.0
    %2211 = vmatpush1.msra.mxu0 0.0
    %2212 = vmatprep.subr.mxu0 0.0
    %2213 = vmatpush1.msra.mxu0 0.0
    %2214 = vmatprep.subr.mxu0 0.0
    %2215 = vmatpush1.msra.mxu0 0.0
    %2216 = vmatprep.subr.mxu0 0.0
    %2217 = vmatpush1.msra.mxu0 0.0
    %2218 = vmatprep.subr.mxu0 0.0
    %2219 = vmatpush1.msra.mxu0 0.0
    %2220 = vmatprep.subr.mxu0 0.0
    %2221 = vmatpush1.msra.mxu0 0.0
    %2222 = vmatprep.subr.mxu0 0.0
    %2223 = vmatpush1.msra.mxu0 0.0
    %2224 = vmatprep.subr.mxu0 0.0
    %2225 = vmatpush1.msra.mxu0 0.0
    %2226 = vmatprep.subr.mxu0 0.0
    %2227 = vmatpush1.msra.mxu0 0.0
    %2228 = vmatprep.subr.mxu0 0.0
    %2229 = vmatpush1.msra.mxu0 0.0
    %2230 = vmatprep.subr.mxu0 0.0
    %2231 = vmatpush1.msra.mxu0 0.0
    %2232 = vmatprep.subr.mxu0 0.0
    %2233 = vmatpush1.msra.mxu0 0.0
    %2234 = vmatprep.subr.mxu0 0.0
    %2235 = vmatpush1.msra.mxu0 0.0
    %2236 = vmatprep.subr.mxu0 0.0
    %2237 = vmatpush1.msra.mxu0 0.0
    %2238 = vmatprep.subr.mxu0 0.0
    %2239 = vmatpush1.msra.mxu0 0.0
    %2240 = vmatprep.subr.mxu0 0.0
    %2241 = vmatpush1.msra.mxu0 0.0
    %2242 = vmatprep.mubr.f32.mxu0 0.0
    %2243 = vmatmul.mubr.f32.gmra.mrb[0].mxu0 %v2173
    %v2244 = vpop.f32.mrb[0].mxu0
    %v2245 = vadd.f32 %v2164, %v2244
    %v2246 = vpop.f32.mrb[0].mxu0
    %2247 = vmatprep.mubr.f32.mxu0 0.0
    %2248 = vmatmul.mubr.f32.gmra.mrb[0].mxu0 %v2176
    %v2249 = vpop.f32.mrb[0].mxu0
    %v2250 = vadd.f32 %v2169, %v2249
    %v2251 = vpop.f32.mrb[0].mxu0
    %2252 = vdwg.mxu0
    %2253 = vrot.lane.b32.xlu0 %v1590, 112
    %v2254 = vpop.permute.xlu0 %2253
    %2255 = vrot.lane.b32.xlu0 %v1595, 112
    %v2256 = vpop.permute.xlu0 %2255
    %2257 = vrot.lane.b32.xlu0 %v1675, 112
    %v2258 = vpop.permute.xlu0 %2257
    %2259 = vrot.lane.b32.xlu0 %v1680, 112
    %v2260 = vpop.permute.xlu0 %2259
    %v2261 = vsel %vm315, %v2254, 0
    %v2263 = vsel %vm315, %v2256, 0
    %v2265 = vsel %vm315, %v2258, 0
    %v2267 = vsel %vm315, %v2260, 0
    %2269 = vmatprep.subr.mxu0 0.0
    %2270 = vmatpush1.xpose.msra.mxu0 %v2265
    %2271 = vmatprep.subr.mxu0 0.0
    %2272 = vmatpush1.xpose.msra.mxu0 %v2267
    %2273 = vmatprep.subr.mxu0 0.0
    %2274 = vmatpush1.xpose.msra.mxu0 0.0
    %2275 = vmatprep.subr.mxu0 0.0
    %2276 = vmatpush1.xpose.msra.mxu0 0.0
    %2277 = vmatprep.subr.mxu0 0.0
    %2278 = vmatpush1.xpose.msra.mxu0 0.0
    %2279 = vmatprep.subr.mxu0 0.0
    %2280 = vmatpush1.xpose.msra.mxu0 0.0
    %2281 = vmatprep.subr.mxu0 0.0
    %2282 = vmatpush1.xpose.msra.mxu0 0.0
    %2283 = vmatprep.subr.mxu0 0.0
    %2284 = vmatpush1.xpose.msra.mxu0 0.0
    %2285 = vmatprep.subr.mxu0 0.0
    %2286 = vmatpush1.xpose.msra.mxu0 0.0
    %2287 = vmatprep.subr.mxu0 0.0
    %2288 = vmatpush1.xpose.msra.mxu0 0.0
    %2289 = vmatprep.subr.mxu0 0.0
    %2290 = vmatpush1.xpose.msra.mxu0 0.0
    %2291 = vmatprep.subr.mxu0 0.0
    %2292 = vmatpush1.xpose.msra.mxu0 0.0
    %2293 = vmatprep.subr.mxu0 0.0
    %2294 = vmatpush1.xpose.msra.mxu0 0.0
    %2295 = vmatprep.subr.mxu0 0.0
    %2296 = vmatpush1.xpose.msra.mxu0 0.0
    %2297 = vmatprep.subr.mxu0 0.0
    %2298 = vmatpush1.xpose.msra.mxu0 0.0
    %2299 = vmatprep.subr.mxu0 0.0
    %2300 = vmatpush1.xpose.msra.mxu0 0.0
    %2301 = vmatprep.subr.mxu0 0.0
    %2302 = vmatpush1.xpose.msra.mxu0 0.0
    %2303 = vmatprep.subr.mxu0 0.0
    %2304 = vmatpush1.xpose.msra.mxu0 0.0
    %2305 = vmatprep.subr.mxu0 0.0
    %2306 = vmatpush1.xpose.msra.mxu0 0.0
    %2307 = vmatprep.subr.mxu0 0.0
    %2308 = vmatpush1.xpose.msra.mxu0 0.0
    %2309 = vmatprep.subr.mxu0 0.0
    %2310 = vmatpush1.xpose.msra.mxu0 0.0
    %2311 = vmatprep.subr.mxu0 0.0
    %2312 = vmatpush1.xpose.msra.mxu0 0.0
    %2313 = vmatprep.subr.mxu0 0.0
    %2314 = vmatpush1.xpose.msra.mxu0 0.0
    %2315 = vmatprep.subr.mxu0 0.0
    %2316 = vmatpush1.xpose.msra.mxu0 0.0
    %2317 = vmatprep.subr.mxu0 0.0
    %2318 = vmatpush1.xpose.msra.mxu0 0.0
    %2319 = vmatprep.subr.mxu0 0.0
    %2320 = vmatpush1.xpose.msra.mxu0 0.0
    %2321 = vmatprep.subr.mxu0 0.0
    %2322 = vmatpush1.xpose.msra.mxu0 0.0
    %2323 = vmatprep.subr.mxu0 0.0
    %2324 = vmatpush1.xpose.msra.mxu0 0.0
    %2325 = vmatprep.subr.mxu0 0.0
    %2326 = vmatpush1.xpose.msra.mxu0 0.0
    %2327 = vmatprep.subr.mxu0 0.0
    %2328 = vmatpush1.xpose.msra.mxu0 0.0
    %2329 = vmatprep.subr.mxu0 0.0
    %2330 = vmatpush1.xpose.msra.mxu0 0.0
    %2331 = vmatprep.subr.mxu0 0.0
    %2332 = vmatpush1.xpose.msra.mxu0 0.0
    %2333 = vmatprep.mubr.f32.mxu0 0.0
    %2334 = vmatmul.mubr.f32.gmra.mrb[0].mxu0 %v2261
    %v2335 = vpop.f32.mrb[0].mxu0
    %v2336 = vadd.f32 0.0, %v2335
    %v2337 = vpop.f32.mrb[0].mxu0
    %2338 = vmatprep.mubr.f32.mxu0 0.0
    %2339 = vmatmul.mubr.f32.gmra.mrb[0].mxu0 %v2263
    %v2340 = vpop.f32.mrb[0].mxu0
    %v2341 = vadd.f32 0.0, %v2340
    %v2342 = vpop.f32.mrb[0].mxu0
    %2343 = vdwg.mxu0
    %v2344 = vmul.f32 %v2336, 0.35355338
    %v2345 = vmul.f32 %v2341, 0.35355338
    %v2346 = vadd.f32 %v2344, %v160
    %v2347 = vadd.f32 %v2345, %v161
    %v2348 = vsel %vm403, %v2346, -inf
    %2349 = vmax.xlane.f32.xlu0 %v2348
    %v2350 = vpop.xlane.xlu0 %2349
    %v2351 = vsel %vm403, %v2347, -inf
    %2352 = vmax.xlane.f32.xlu0 %v2351
    %v2353 = vpop.xlane.xlu0 %2352
    %v2354 = vsub.f32 %v2346, %v2350
    %v2355 = vsub.f32 %v2347, %v2353
    %v2356 = vmul.f32 %v2354, 1.442695
    %v2357 = vpow.pop %v2356
    %v2358 = vmul.f32 %v2355, 1.442695
    %v2359 = vpow.pop %v2358
    %v2360 = vsel %vm403, %v2357, 0.0
    %2361 = vadd.xlane.f32.xlu0 %v2360
    %v2362 = vpop.xlane.xlu0 %2361
    %v2363 = vsel %vm403, %v2359, 0.0
    %2364 = vadd.xlane.f32.xlu0 %v2363
    %v2365 = vpop.xlane.xlu0 %2364
    %v2366 = vrcp.pop %v2362
    %v2367 = vrcp.pop %v2365
    %v2368 = vmul.f32 %v2357, %v2366
    %v2369 = vmul.f32 %v2359, %v2367
    %2370 = vrot.lane.b32.xlu0 %v1675, 80
    %v2371 = vpop.permute.xlu0 %2370
    %2372 = vrot.lane.b32.xlu0 %v1680, 80
    %v2373 = vpop.permute.xlu0 %2372
    %v2377 = vsel %vm403, %v2368, 0
    %v2380 = vsel %vm403, %v2369, 0
    %2382 = vmatprep.subr.mxu0 0.0
    %2383 = vmatpush1.msra.mxu0 %v2371
    %2384 = vmatprep.subr.mxu0 0.0
    %2385 = vmatpush1.msra.mxu0 %v2373
    %2386 = vmatprep.subr.mxu0 0.0
    %2387 = vmatpush1.msra.mxu0 0.0
    %2388 = vmatprep.subr.mxu0 0.0
    %2389 = vmatpush1.msra.mxu0 0.0
    %2390 = vmatprep.subr.mxu0 0.0
    %2391 = vmatpush1.msra.mxu0 0.0
    %2392 = vmatprep.subr.mxu0 0.0
    %2393 = vmatpush1.msra.mxu0 0.0
    %2394 = vmatprep.subr.mxu0 0.0
    %2395 = vmatpush1.msra.mxu0 0.0
    %2396 = vmatprep.subr.mxu0 0.0
    %2397 = vmatpush1.msra.mxu0 0.0
    %2398 = vmatprep.subr.mxu0 0.0
    %2399 = vmatpush1.msra.mxu0 0.0
    %2400 = vmatprep.subr.mxu0 0.0
    %2401 = vmatpush1.msra.mxu0 0.0
    %2402 = vmatprep.subr.mxu0 0.0
    %2403 = vmatpush1.msra.mxu0 0.0
    %2404 = vmatprep.subr.mxu0 0.0
    %2405 = vmatpush1.msra.mxu0 0.0
    %2406 = vmatprep.subr.mxu0 0.0
    %2407 = vmatpush1.msra.mxu0 0.0
    %2408 = vmatprep.subr.mxu0 0.0
    %2409 = vmatpush1.msra.mxu0 0.0
    %2410 = vmatprep.subr.mxu0 0.0
    %2411 = vmatpush1.msra.mxu0 0.0
    %2412 = vmatprep.subr.mxu0 0.0
    %2413 = vmatpush1.msra.mxu0 0.0
    %2414 = vmatprep.subr.mxu0 0.0
    %2415 = vmatpush1.msra.mxu0 0.0
    %2416 = vmatprep.subr.mxu0 0.0
    %2417 = vmatpush1.msra.mxu0 0.0
    %2418 = vmatprep.subr.mxu0 0.0
    %2419 = vmatpush1.msra.mxu0 0.0
    %2420 = vmatprep.subr.mxu0 0.0
    %2421 = vmatpush1.msra.mxu0 0.0
    %2422 = vmatprep.subr.mxu0 0.0
    %2423 = vmatpush1.msra.mxu0 0.0
    %2424 = vmatprep.subr.mxu0 0.0
    %2425 = vmatpush1.msra.mxu0 0.0
    %2426 = vmatprep.subr.mxu0 0.0
    %2427 = vmatpush1.msra.mxu0 0.0
    %2428 = vmatprep.subr.mxu0 0.0
    %2429 = vmatpush1.msra.mxu0 0.0
    %2430 = vmatprep.subr.mxu0 0.0
    %2431 = vmatpush1.msra.mxu0 0.0
    %2432 = vmatprep.subr.mxu0 0.0
    %2433 = vmatpush1.msra.mxu0 0.0
    %2434 = vmatprep.subr.mxu0 0.0
    %2435 = vmatpush1.msra.mxu0 0.0
    %2436 = vmatprep.subr.mxu0 0.0
    %2437 = vmatpush1.msra.mxu0 0.0
    %2438 = vmatprep.subr.mxu0 0.0
    %2439 = vmatpush1.msra.mxu0 0.0
    %2440 = vmatprep.subr.mxu0 0.0
    %2441 = vmatpush1.msra.mxu0 0.0
    %2442 = vmatprep.subr.mxu0 0.0
    %2443 = vmatpush1.msra.mxu0 0.0
    %2444 = vmatprep.subr.mxu0 0.0
    %2445 = vmatpush1.msra.mxu0 0.0
    %2446 = vmatprep.mubr.f32.mxu0 0.0
    %2447 = vmatmul.mubr.f32.gmra.mrb[0].mxu0 %v2377
    %v2448 = vpop.f32.mrb[0].mxu0
    %v2449 = vadd.f32 0.0, %v2448
    %v2450 = vpop.f32.mrb[0].mxu0
    %2451 = vmatprep.mubr.f32.mxu0 0.0
    %2452 = vmatmul.mubr.f32.gmra.mrb[0].mxu0 %v2380
    %v2453 = vpop.f32.mrb[0].mxu0
    %v2454 = vadd.f32 0.0, %v2453
    %v2455 = vpop.f32.mrb[0].mxu0
    %2456 = vdwg.mxu0
    %v2458 = vsel %vm315, %v2449, 0
    %v2461 = vsel %vm315, %v2454, 0
    %2463 = vmatprep.subr.mxu0 0.0
    %2464 = vmatpush1.msra.mxu0 %v1685
    %2465 = vmatprep.subr.mxu0 0.0
    %2466 = vmatpush1.msra.mxu0 0.0
    %2467 = vmatprep.subr.mxu0 0.0
    %2468 = vmatpush1.msra.mxu0 0.0
    %2469 = vmatprep.subr.mxu0 0.0
    %2470 = vmatpush1.msra.mxu0 0.0
    %2471 = vmatprep.subr.mxu0 0.0
    %2472 = vmatpush1.msra.mxu0 0.0
    %2473 = vmatprep.subr.mxu0 0.0
    %2474 = vmatpush1.msra.mxu0 0.0
    %2475 = vmatprep.subr.mxu0 0.0
    %2476 = vmatpush1.msra.mxu0 0.0
    %2477 = vmatprep.subr.mxu0 0.0
    %2478 = vmatpush1.msra.mxu0 0.0
    %2479 = vmatprep.subr.mxu0 0.0
    %2480 = vmatpush1.msra.mxu0 0.0
    %2481 = vmatprep.subr.mxu0 0.0
    %2482 = vmatpush1.msra.mxu0 0.0
    %2483 = vmatprep.subr.mxu0 0.0
    %2484 = vmatpush1.msra.mxu0 0.0
    %2485 = vmatprep.subr.mxu0 0.0
    %2486 = vmatpush1.msra.mxu0 0.0
    %2487 = vmatprep.subr.mxu0 0.0
    %2488 = vmatpush1.msra.mxu0 0.0
    %2489 = vmatprep.subr.mxu0 0.0
    %2490 = vmatpush1.msra.mxu0 0.0
    %2491 = vmatprep.subr.mxu0 0.0
    %2492 = vmatpush1.msra.mxu0 0.0
    %2493 = vmatprep.subr.mxu0 0.0
    %2494 = vmatpush1.msra.mxu0 0.0
    %2495 = vmatprep.subr.mxu0 0.0
    %2496 = vmatpush1.msra.mxu0 0.0
    %2497 = vmatprep.subr.mxu0 0.0
    %2498 = vmatpush1.msra.mxu0 0.0
    %2499 = vmatprep.subr.mxu0 0.0
    %2500 = vmatpush1.msra.mxu0 0.0
    %2501 = vmatprep.subr.mxu0 0.0
    %2502 = vmatpush1.msra.mxu0 0.0
    %2503 = vmatprep.subr.mxu0 0.0
    %2504 = vmatpush1.msra.mxu0 0.0
    %2505 = vmatprep.subr.mxu0 0.0
    %2506 = vmatpush1.msra.mxu0 0.0
    %2507 = vmatprep.subr.mxu0 0.0
    %2508 = vmatpush1.msra.mxu0 0.0
    %2509 = vmatprep.subr.mxu0 0.0
    %2510 = vmatpush1.msra.mxu0 0.0
    %2511 = vmatprep.subr.mxu0 0.0
    %2512 = vmatpush1.msra.mxu0 0.0
    %2513 = vmatprep.subr.mxu0 0.0
    %2514 = vmatpush1.msra.mxu0 0.0
    %2515 = vmatprep.subr.mxu0 0.0
    %2516 = vmatpush1.msra.mxu0 0.0
    %2517 = vmatprep.subr.mxu0 0.0
    %2518 = vmatpush1.msra.mxu0 0.0
    %2519 = vmatprep.subr.mxu0 0.0
    %2520 = vmatpush1.msra.mxu0 0.0
    %2521 = vmatprep.subr.mxu0 0.0
    %2522 = vmatpush1.msra.mxu0 0.0
    %2523 = vmatprep.subr.mxu0 0.0
    %2524 = vmatpush1.msra.mxu0 0.0
    %2525 = vmatprep.subr.mxu0 0.0
    %2526 = vmatpush1.msra.mxu0 0.0
    %2527 = vmatprep.mubr.f32.mxu0 0.0
    %2528 = vmatmul.mubr.f32.gmra.mrb[0].mxu0 %v2458
    %v2529 = vpop.f32.mrb[0].mxu0
    %v2530 = vadd.f32 0.0, %v2529
    %v2531 = vpop.f32.mrb[0].mxu0
    %2532 = vmatprep.mubr.f32.mxu0 0.0
    %2533 = vmatmul.mubr.f32.gmra.mrb[0].mxu0 %v2461
    %v2534 = vpop.f32.mrb[0].mxu0
    %v2535 = vadd.f32 0.0, %v2534
    %v2536 = vpop.f32.mrb[0].mxu0
    %2537 = vdwg.mxu0
    %v2538 = vadd.f32 %v2245, %v2530
    %v2539 = vadd.f32 %v2250, %v2535
    %2540 = vrot.lane.b32.xlu0 %v1590, 104
    %v2541 = vpop.permute.xlu0 %2540
    %2542 = vrot.lane.b32.xlu0 %v1595, 104
    %v2543 = vpop.permute.xlu0 %2542
    %2544 = vrot.lane.b32.xlu0 %v1675, 104
    %v2545 = vpop.permute.xlu0 %2544
    %2546 = vrot.lane.b32.xlu0 %v1680, 104
    %v2547 = vpop.permute.xlu0 %2546
    %v2548 = vsel %vm315, %v2541, 0
    %v2550 = vsel %vm315, %v2543, 0
    %v2552 = vsel %vm315, %v2545, 0
    %v2554 = vsel %vm315, %v2547, 0
    %2556 = vmatprep.subr.mxu0 0.0
    %2557 = vmatpush1.xpose.msra.mxu0 %v2552
    %2558 = vmatprep.subr.mxu0 0.0
    %2559 = vmatpush1.xpose.msra.mxu0 %v2554
    %2560 = vmatprep.subr.mxu0 0.0
    %2561 = vmatpush1.xpose.msra.mxu0 0.0
    %2562 = vmatprep.subr.mxu0 0.0
    %2563 = vmatpush1.xpose.msra.mxu0 0.0
    %2564 = vmatprep.subr.mxu0 0.0
    %2565 = vmatpush1.xpose.msra.mxu0 0.0
    %2566 = vmatprep.subr.mxu0 0.0
    %2567 = vmatpush1.xpose.msra.mxu0 0.0
    %2568 = vmatprep.subr.mxu0 0.0
    %2569 = vmatpush1.xpose.msra.mxu0 0.0
    %2570 = vmatprep.subr.mxu0 0.0
    %2571 = vmatpush1.xpose.msra.mxu0 0.0
    %2572 = vmatprep.subr.mxu0 0.0
    %2573 = vmatpush1.xpose.msra.mxu0 0.0
    %2574 = vmatprep.subr.mxu0 0.0
    %2575 = vmatpush1.xpose.msra.mxu0 0.0
    %2576 = vmatprep.subr.mxu0 0.0
    %2577 = vmatpush1.xpose.msra.mxu0 0.0
    %2578 = vmatprep.subr.mxu0 0.0
    %2579 = vmatpush1.xpose.msra.mxu0 0.0
    %2580 = vmatprep.subr.mxu0 0.0
    %2581 = vmatpush1.xpose.msra.mxu0 0.0
    %2582 = vmatprep.subr.mxu0 0.0
    %2583 = vmatpush1.xpose.msra.mxu0 0.0
    %2584 = vmatprep.subr.mxu0 0.0
    %2585 = vmatpush1.xpose.msra.mxu0 0.0
    %2586 = vmatprep.subr.mxu0 0.0
    %2587 = vmatpush1.xpose.msra.mxu0 0.0
    %2588 = vmatprep.subr.mxu0 0.0
    %2589 = vmatpush1.xpose.msra.mxu0 0.0
    %2590 = vmatprep.subr.mxu0 0.0
    %2591 = vmatpush1.xpose.msra.mxu0 0.0
    %2592 = vmatprep.subr.mxu0 0.0
    %2593 = vmatpush1.xpose.msra.mxu0 0.0
    %2594 = vmatprep.subr.mxu0 0.0
    %2595 = vmatpush1.xpose.msra.mxu0 0.0
    %2596 = vmatprep.subr.mxu0 0.0
    %2597 = vmatpush1.xpose.msra.mxu0 0.0
    %2598 = vmatprep.subr.mxu0 0.0
    %2599 = vmatpush1.xpose.msra.mxu0 0.0
    %2600 = vmatprep.subr.mxu0 0.0
    %2601 = vmatpush1.xpose.msra.mxu0 0.0
    %2602 = vmatprep.subr.mxu0 0.0
    %2603 = vmatpush1.xpose.msra.mxu0 0.0
    %2604 = vmatprep.subr.mxu0 0.0
    %2605 = vmatpush1.xpose.msra.mxu0 0.0
    %2606 = vmatprep.subr.mxu0 0.0
    %2607 = vmatpush1.xpose.msra.mxu0 0.0
    %2608 = vmatprep.subr.mxu0 0.0
    %2609 = vmatpush1.xpose.msra.mxu0 0.0
    %2610 = vmatprep.subr.mxu0 0.0
    %2611 = vmatpush1.xpose.msra.mxu0 0.0
    %2612 = vmatprep.subr.mxu0 0.0
    %2613 = vmatpush1.xpose.msra.mxu0 0.0
    %2614 = vmatprep.subr.mxu0 0.0
    %2615 = vmatpush1.xpose.msra.mxu0 0.0
    %2616 = vmatprep.subr.mxu0 0.0
    %2617 = vmatpush1.xpose.msra.mxu0 0.0
    %2618 = vmatprep.subr.mxu0 0.0
    %2619 = vmatpush1.xpose.msra.mxu0 0.0
    %2620 = vmatprep.mubr.f32.mxu0 0.0
    %2621 = vmatmul.mubr.f32.gmra.mrb[0].mxu0 %v2548
    %v2622 = vpop.f32.mrb[0].mxu0
    %v2623 = vadd.f32 0.0, %v2622
    %v2624 = vpop.f32.mrb[0].mxu0
    %2625 = vmatprep.mubr.f32.mxu0 0.0
    %2626 = vmatmul.mubr.f32.gmra.mrb[0].mxu0 %v2550
    %v2627 = vpop.f32.mrb[0].mxu0
    %v2628 = vadd.f32 0.0, %v2627
    %v2629 = vpop.f32.mrb[0].mxu0
    %2630 = vdwg.mxu0
    %v2631 = vmul.f32 %v2623, 0.35355338
    %v2632 = vmul.f32 %v2628, 0.35355338
    %v2633 = vadd.f32 %v2631, %v160
    %v2634 = vadd.f32 %v2632, %v161
    %v2635 = vsel %vm403, %v2633, -inf
    %2636 = vmax.xlane.f32.xlu0 %v2635
    %v2637 = vpop.xlane.xlu0 %2636
    %v2638 = vsel %vm403, %v2634, -inf
    %2639 = vmax.xlane.f32.xlu0 %v2638
    %v2640 = vpop.xlane.xlu0 %2639
    %v2641 = vsub.f32 %v2633, %v2637
    %v2642 = vsub.f32 %v2634, %v2640
    %v2643 = vmul.f32 %v2641, 1.442695
    %v2644 = vpow.pop %v2643
    %v2645 = vmul.f32 %v2642, 1.442695
    %v2646 = vpow.pop %v2645
    %v2647 = vsel %vm403, %v2644, 0.0
    %2648 = vadd.xlane.f32.xlu0 %v2647
    %v2649 = vpop.xlane.xlu0 %2648
    %v2650 = vsel %vm403, %v2646, 0.0
    %2651 = vadd.xlane.f32.xlu0 %v2650
    %v2652 = vpop.xlane.xlu0 %2651
    %v2653 = vrcp.pop %v2649
    %v2654 = vrcp.pop %v2652
    %v2655 = vmul.f32 %v2644, %v2653
    %v2656 = vmul.f32 %v2646, %v2654
    %2657 = vrot.lane.b32.xlu0 %v1675, 72
    %v2658 = vpop.permute.xlu0 %2657
    %2659 = vrot.lane.b32.xlu0 %v1680, 72
    %v2660 = vpop.permute.xlu0 %2659
    %v2664 = vsel %vm403, %v2655, 0
    %v2667 = vsel %vm403, %v2656, 0
    %2669 = vmatprep.subr.mxu0 0.0
    %2670 = vmatpush1.msra.mxu0 %v2658
    %2671 = vmatprep.subr.mxu0 0.0
    %2672 = vmatpush1.msra.mxu0 %v2660
    %2673 = vmatprep.subr.mxu0 0.0
    %2674 = vmatpush1.msra.mxu0 0.0
    %2675 = vmatprep.subr.mxu0 0.0
    %2676 = vmatpush1.msra.mxu0 0.0
    %2677 = vmatprep.subr.mxu0 0.0
    %2678 = vmatpush1.msra.mxu0 0.0
    %2679 = vmatprep.subr.mxu0 0.0
    %2680 = vmatpush1.msra.mxu0 0.0
    %2681 = vmatprep.subr.mxu0 0.0
    %2682 = vmatpush1.msra.mxu0 0.0
    %2683 = vmatprep.subr.mxu0 0.0
    %2684 = vmatpush1.msra.mxu0 0.0
    %2685 = vmatprep.subr.mxu0 0.0
    %2686 = vmatpush1.msra.mxu0 0.0
    %2687 = vmatprep.subr.mxu0 0.0
    %2688 = vmatpush1.msra.mxu0 0.0
    %2689 = vmatprep.subr.mxu0 0.0
    %2690 = vmatpush1.msra.mxu0 0.0
    %2691 = vmatprep.subr.mxu0 0.0
    %2692 = vmatpush1.msra.mxu0 0.0
    %2693 = vmatprep.subr.mxu0 0.0
    %2694 = vmatpush1.msra.mxu0 0.0
    %2695 = vmatprep.subr.mxu0 0.0
    %2696 = vmatpush1.msra.mxu0 0.0
    %2697 = vmatprep.subr.mxu0 0.0
    %2698 = vmatpush1.msra.mxu0 0.0
    %2699 = vmatprep.subr.mxu0 0.0
    %2700 = vmatpush1.msra.mxu0 0.0
    %2701 = vmatprep.subr.mxu0 0.0
    %2702 = vmatpush1.msra.mxu0 0.0
    %2703 = vmatprep.subr.mxu0 0.0
    %2704 = vmatpush1.msra.mxu0 0.0
    %2705 = vmatprep.subr.mxu0 0.0
    %2706 = vmatpush1.msra.mxu0 0.0
    %2707 = vmatprep.subr.mxu0 0.0
    %2708 = vmatpush1.msra.mxu0 0.0
    %2709 = vmatprep.subr.mxu0 0.0
    %2710 = vmatpush1.msra.mxu0 0.0
    %2711 = vmatprep.subr.mxu0 0.0
    %2712 = vmatpush1.msra.mxu0 0.0
    %2713 = vmatprep.subr.mxu0 0.0
    %2714 = vmatpush1.msra.mxu0 0.0
    %2715 = vmatprep.subr.mxu0 0.0
    %2716 = vmatpush1.msra.mxu0 0.0
    %2717 = vmatprep.subr.mxu0 0.0
    %2718 = vmatpush1.msra.mxu0 0.0
    %2719 = vmatprep.subr.mxu0 0.0
    %2720 = vmatpush1.msra.mxu0 0.0
    %2721 = vmatprep.subr.mxu0 0.0
    %2722 = vmatpush1.msra.mxu0 0.0
    %2723 = vmatprep.subr.mxu0 0.0
    %2724 = vmatpush1.msra.mxu0 0.0
    %2725 = vmatprep.subr.mxu0 0.0
    %2726 = vmatpush1.msra.mxu0 0.0
    %2727 = vmatprep.subr.mxu0 0.0
    %2728 = vmatpush1.msra.mxu0 0.0
    %2729 = vmatprep.subr.mxu0 0.0
    %2730 = vmatpush1.msra.mxu0 0.0
    %2731 = vmatprep.subr.mxu0 0.0
    %2732 = vmatpush1.msra.mxu0 0.0
    %2733 = vmatprep.mubr.f32.mxu0 0.0
    %2734 = vmatmul.mubr.f32.gmra.mrb[0].mxu0 %v2664
    %v2735 = vpop.f32.mrb[0].mxu0
    %v2736 = vadd.f32 0.0, %v2735
    %v2737 = vpop.f32.mrb[0].mxu0
    %2738 = vmatprep.mubr.f32.mxu0 0.0
    %2739 = vmatmul.mubr.f32.gmra.mrb[0].mxu0 %v2667
    %v2740 = vpop.f32.mrb[0].mxu0
    %v2741 = vadd.f32 0.0, %v2740
    %v2742 = vpop.f32.mrb[0].mxu0
    %2743 = vdwg.mxu0
    %v2745 = vsel %vm315, %v2736, 0
    %v2748 = vsel %vm315, %v2741, 0
    %2750 = vmatprep.subr.mxu0 0.0
    %2751 = vmatpush1.msra.mxu0 %v1686
    %2752 = vmatprep.subr.mxu0 0.0
    %2753 = vmatpush1.msra.mxu0 0.0
    %2754 = vmatprep.subr.mxu0 0.0
    %2755 = vmatpush1.msra.mxu0 0.0
    %2756 = vmatprep.subr.mxu0 0.0
    %2757 = vmatpush1.msra.mxu0 0.0
    %2758 = vmatprep.subr.mxu0 0.0
    %2759 = vmatpush1.msra.mxu0 0.0
    %2760 = vmatprep.subr.mxu0 0.0
    %2761 = vmatpush1.msra.mxu0 0.0
    %2762 = vmatprep.subr.mxu0 0.0
    %2763 = vmatpush1.msra.mxu0 0.0
    %2764 = vmatprep.subr.mxu0 0.0
    %2765 = vmatpush1.msra.mxu0 0.0
    %2766 = vmatprep.subr.mxu0 0.0
    %2767 = vmatpush1.msra.mxu0 0.0
    %2768 = vmatprep.subr.mxu0 0.0
    %2769 = vmatpush1.msra.mxu0 0.0
    %2770 = vmatprep.subr.mxu0 0.0
    %2771 = vmatpush1.msra.mxu0 0.0
    %2772 = vmatprep.subr.mxu0 0.0
    %2773 = vmatpush1.msra.mxu0 0.0
    %2774 = vmatprep.subr.mxu0 0.0
    %2775 = vmatpush1.msra.mxu0 0.0
    %2776 = vmatprep.subr.mxu0 0.0
    %2777 = vmatpush1.msra.mxu0 0.0
    %2778 = vmatprep.subr.mxu0 0.0
    %2779 = vmatpush1.msra.mxu0 0.0
    %2780 = vmatprep.subr.mxu0 0.0
    %2781 = vmatpush1.msra.mxu0 0.0
    %2782 = vmatprep.subr.mxu0 0.0
    %2783 = vmatpush1.msra.mxu0 0.0
    %2784 = vmatprep.subr.mxu0 0.0
    %2785 = vmatpush1.msra.mxu0 0.0
    %2786 = vmatprep.subr.mxu0 0.0
    %2787 = vmatpush1.msra.mxu0 0.0
    %2788 = vmatprep.subr.mxu0 0.0
    %2789 = vmatpush1.msra.mxu0 0.0
    %2790 = vmatprep.subr.mxu0 0.0
    %2791 = vmatpush1.msra.mxu0 0.0
    %2792 = vmatprep.subr.mxu0 0.0
    %2793 = vmatpush1.msra.mxu0 0.0
    %2794 = vmatprep.subr.mxu0 0.0
    %2795 = vmatpush1.msra.mxu0 0.0
    %2796 = vmatprep.subr.mxu0 0.0
    %2797 = vmatpush1.msra.mxu0 0.0
    %2798 = vmatprep.subr.mxu0 0.0
    %2799 = vmatpush1.msra.mxu0 0.0
    %2800 = vmatprep.subr.mxu0 0.0
    %2801 = vmatpush1.msra.mxu0 0.0
    %2802 = vmatprep.subr.mxu0 0.0
    %2803 = vmatpush1.msra.mxu0 0.0
    %2804 = vmatprep.subr.mxu0 0.0
    %2805 = vmatpush1.msra.mxu0 0.0
    %2806 = vmatprep.subr.mxu0 0.0
    %2807 = vmatpush1.msra.mxu0 0.0
    %2808 = vmatprep.subr.mxu0 0.0
    %2809 = vmatpush1.msra.mxu0 0.0
    %2810 = vmatprep.subr.mxu0 0.0
    %2811 = vmatpush1.msra.mxu0 0.0
    %2812 = vmatprep.subr.mxu0 0.0
    %2813 = vmatpush1.msra.mxu0 0.0
    %2814 = vmatprep.mubr.f32.mxu0 0.0
    %2815 = vmatmul.mubr.f32.gmra.mrb[0].mxu0 %v2745
    %v2816 = vpop.f32.mrb[0].mxu0
    %v2817 = vadd.f32 0.0, %v2816
    %v2818 = vpop.f32.mrb[0].mxu0
    %2819 = vmatprep.mubr.f32.mxu0 0.0
    %2820 = vmatmul.mubr.f32.gmra.mrb[0].mxu0 %v2748
    %v2821 = vpop.f32.mrb[0].mxu0
    %v2822 = vadd.f32 0.0, %v2821
    %v2823 = vpop.f32.mrb[0].mxu0
    %2824 = vdwg.mxu0
    %v2825 = vadd.f32 %v2538, %v2817
    %v2826 = vadd.f32 %v2539, %v2822
    %v2827 = vlaneseq
    %v2828 = vshrl.u32 %v2827, 7
    %v2829 = vsub.s32 1, %v2828
    %v2830 = vrot.slane %v162, %v2829
    %v2831 = vadd.f32 %v2825, %v2830
    %v2832 = vadd.f32 %v2826, %v2830
    %v2833 = vadd.f32 %v1459, %v2831
    %v2834 = vadd.f32 %v1460, %v2832
    %v2835 = vsel %vm165, %v2833, 0.0
    %2836 = vadd.xlane.f32.xlu0 %v2835
    %v2837 = vpop.xlane.xlu0 %2836
    %v2838 = vsel %vm165, %v2834, 0.0
    %2839 = vadd.xlane.f32.xlu0 %v2838
    %v2840 = vpop.xlane.xlu0 %2839
    %v2841 = vmul.f32 %v2837, %v172
    %v2842 = vmul.f32 %v2840, %v172
    %v2843 = vsub.f32 %v2833, %v2841
    %v2844 = vsub.f32 %v2834, %v2842
    %v2845 = vmul.f32 %v2843, %v2843
    %v2846 = vmul.f32 %v2844, %v2844
    %v2847 = vsel %vm165, %v2845, 0.0
    %2848 = vadd.xlane.f32.xlu0 %v2847
    %v2849 = vpop.xlane.xlu0 %2848
    %v2850 = vsel %vm165, %v2846, 0.0
    %2851 = vadd.xlane.f32.xlu0 %v2850
    %v2852 = vpop.xlane.xlu0 %2851
    %v2853 = vmul.f32 %v2849, %v185
    %v2854 = vmul.f32 %v2852, %v185
    %v2855 = vrsqrt.pop %v2853
    %v2856 = vmul.f32 %v2853, %v2855
    %vm2857 = vcmp.eq.f32.partialorder %v2853, inf
    %v2858 = vsel %vm2857, %v2853, %v2856
    %vm2859 = vcmp.eq.f32.partialorder %v2853, 0.0
    %v2860 = vand.u32 %v2853, 2147483648
    %v2861 = vsel %vm2859, %v2860, %v2858
    %v2862 = vrsqrt.pop %v2854
    %v2863 = vmul.f32 %v2854, %v2862
    %vm2864 = vcmp.eq.f32.partialorder %v2854, inf
    %v2865 = vsel %vm2864, %v2854, %v2863
    %vm2866 = vcmp.eq.f32.partialorder %v2854, 0.0
    %v2867 = vand.u32 %v2854, 2147483648
    %v2868 = vsel %vm2866, %v2867, %v2865
    %v2869 = vlaneseq
    %v2870 = vshrl.u32 %v2869, 7
    %v2871 = vsub.s32 7, %v2870
    %v2872 = vrot.slane %v162, %v2871
    %v2873 = vmul.f32 %v2872, %v2843
    %v2874 = vmul.f32 %v2872, %v2844
    %v2875 = vadd.f32 %v2861, 1e-06
    %v2876 = vadd.f32 %v2868, 1e-06
    %v2877 = vrcp.pop %v2875
    %v2878 = vmul.f32 %v2873, %v2877
    %v2879 = vrcp.pop %v2876
    %v2880 = vmul.f32 %v2874, %v2879
    %v2881 = vlaneseq
    %v2882 = vshrl.u32 %v2881, 7
    %v2883 = vsub.s32 0, %v2882
    %v2884 = vrot.slane %v163, %v2883
    %v2885 = vadd.f32 %v2878, %v2884
    %v2886 = vadd.f32 %v2880, %v2884
    %v2887 = vld [vmem:[#allocation13] sm:$0xff]
    %v2888 = vld [vmem:[#allocation13 + $0x8] sm:$0xff]
    %v2889 = vld [vmem:[#allocation13 + $0x10] sm:$0xff]
    %v2890 = vld [vmem:[#allocation13 + $0x18] sm:$0xff]
    %v2892 = vlaneseq
    %v2893 = vshrl.u32 %v2892, 7
    %v2894 = vsub.s32 0, %v2893
    %v2895 = vrot.slane %v164, %v2894
    %v2898 = vsel %vm165, %v2885, 0
    %v2901 = vsel %vm165, %v2886, 0
    %2903 = vmatprep.subr.mxu0 0.0
    %2904 = vmatpush1.msra.mxu0 %v2887
    %2905 = vmatprep.subr.mxu0 0.0
    %2906 = vmatpush1.msra.mxu0 %v2888
    %2907 = vmatprep.subr.mxu0 0.0
    %2908 = vmatpush1.msra.mxu0 %v2889
    %2909 = vmatprep.subr.mxu0 0.0
    %2910 = vmatpush1.msra.mxu0 %v2890
    %2911 = vmatprep.subr.mxu0 0.0
    %2912 = vmatpush1.msra.mxu0 0.0
    %2913 = vmatprep.subr.mxu0 0.0
    %2914 = vmatpush1.msra.mxu0 0.0
    %2915 = vmatprep.subr.mxu0 0.0
    %2916 = vmatpush1.msra.mxu0 0.0
    %2917 = vmatprep.subr.mxu0 0.0
    %2918 = vmatpush1.msra.mxu0 0.0
    %2919 = vmatprep.subr.mxu0 0.0
    %2920 = vmatpush1.msra.mxu0 0.0
    %2921 = vmatprep.subr.mxu0 0.0
    %2922 = vmatpush1.msra.mxu0 0.0
    %2923 = vmatprep.subr.mxu0 0.0
    %2924 = vmatpush1.msra.mxu0 0.0
    %2925 = vmatprep.subr.mxu0 0.0
    %2926 = vmatpush1.msra.mxu0 0.0
    %2927 = vmatprep.subr.mxu0 0.0
    %2928 = vmatpush1.msra.mxu0 0.0
    %2929 = vmatprep.subr.mxu0 0.0
    %2930 = vmatpush1.msra.mxu0 0.0
    %2931 = vmatprep.subr.mxu0 0.0
    %2932 = vmatpush1.msra.mxu0 0.0
    %2933 = vmatprep.subr.mxu0 0.0
    %2934 = vmatpush1.msra.mxu0 0.0
    %2935 = vmatprep.subr.mxu0 0.0
    %2936 = vmatpush1.msra.mxu0 0.0
    %2937 = vmatprep.subr.mxu0 0.0
    %2938 = vmatpush1.msra.mxu0 0.0
    %2939 = vmatprep.subr.mxu0 0.0
    %2940 = vmatpush1.msra.mxu0 0.0
    %2941 = vmatprep.subr.mxu0 0.0
    %2942 = vmatpush1.msra.mxu0 0.0
    %2943 = vmatprep.subr.mxu0 0.0
    %2944 = vmatpush1.msra.mxu0 0.0
    %2945 = vmatprep.subr.mxu0 0.0
    %2946 = vmatpush1.msra.mxu0 0.0
    %2947 = vmatprep.subr.mxu0 0.0
    %2948 = vmatpush1.msra.mxu0 0.0
    %2949 = vmatprep.subr.mxu0 0.0
    %2950 = vmatpush1.msra.mxu0 0.0
    %2951 = vmatprep.subr.mxu0 0.0
    %2952 = vmatpush1.msra.mxu0 0.0
    %2953 = vmatprep.subr.mxu0 0.0
    %2954 = vmatpush1.msra.mxu0 0.0
    %2955 = vmatprep.subr.mxu0 0.0
    %2956 = vmatpush1.msra.mxu0 0.0
    %2957 = vmatprep.subr.mxu0 0.0
    %2958 = vmatpush1.msra.mxu0 0.0
    %2959 = vmatprep.subr.mxu0 0.0
    %2960 = vmatpush1.msra.mxu0 0.0
    %2961 = vmatprep.subr.mxu0 0.0
    %2962 = vmatpush1.msra.mxu0 0.0
    %2963 = vmatprep.subr.mxu0 0.0
    %2964 = vmatpush1.msra.mxu0 0.0
    %2965 = vmatprep.subr.mxu0 0.0
    %2966 = vmatpush1.msra.mxu0 0.0
    %2967 = vmatprep.mubr.f32.mxu0 0.0
    %2968 = vmatmul.mubr.f32.gmra.mrb[0].mxu0 %v2898
    %v2969 = vpop.f32.mrb[0].mxu0
    %v2970 = vadd.f32 %v2895, %v2969
    %v2971 = vpop.f32.mrb[0].mxu0
    %2972 = vmatprep.mubr.f32.mxu0 0.0
    %2973 = vmatmul.mubr.f32.gmra.mrb[0].mxu0 %v2901
    %v2974 = vpop.f32.mrb[0].mxu0
    %v2975 = vadd.f32 %v2895, %v2974
    %v2976 = vpop.f32.mrb[0].mxu0
    %2977 = vdwg.mxu0
    %v2978 = vmax.f32 %v2970, 0.0
    %v2979 = vmax.f32 %v2975, 0.0
    %v2980 = vld [vmem:[%s11] sm:$0xff]
    %v2981 = vld [vmem:[%s11 + $0x8] sm:$0xff]
    %v2982 = vld [vmem:[%s11 + $0x10] sm:$0xff]
    %v2983 = vld [vmem:[%s11 + $0x18] sm:$0xff]
    %v2984 = vld [vmem:[%s11 + $0x20] sm:$0xff]
    %v2985 = vld [vmem:[%s11 + $0x28] sm:$0xff]
    %v2986 = vld [vmem:[%s11 + $0x30] sm:$0xff]
    %v2987 = vld [vmem:[%s11 + $0x38] sm:$0xff]
    %vm2988 = vcmask 523264
    %v2990 = vsel %vm2988, %v2978, 0
    %v2993 = vsel %vm2988, %v2979, 0
    %2995 = vmatprep.subr.mxu0 0.0
    %2996 = vmatpush1.msra.mxu0 %v2980
    %2997 = vmatprep.subr.mxu0 0.0
    %2998 = vmatpush1.msra.mxu0 %v2981
    %2999 = vmatprep.subr.mxu0 0.0
    %3000 = vmatpush1.msra.mxu0 %v2982
    %3001 = vmatprep.subr.mxu0 0.0
    %3002 = vmatpush1.msra.mxu0 %v2983
    %3003 = vmatprep.subr.mxu0 0.0
    %3004 = vmatpush1.msra.mxu0 %v2984
    %3005 = vmatprep.subr.mxu0 0.0
    %3006 = vmatpush1.msra.mxu0 %v2985
    %3007 = vmatprep.subr.mxu0 0.0
    %3008 = vmatpush1.msra.mxu0 %v2986
    %3009 = vmatprep.subr.mxu0 0.0
    %3010 = vmatpush1.msra.mxu0 %v2987
    %3011 = vmatprep.subr.mxu0 0.0
    %3012 = vmatpush1.msra.mxu0 0.0
    %3013 = vmatprep.subr.mxu0 0.0
    %3014 = vmatpush1.msra.mxu0 0.0
    %3015 = vmatprep.subr.mxu0 0.0
    %3016 = vmatpush1.msra.mxu0 0.0
    %3017 = vmatprep.subr.mxu0 0.0
    %3018 = vmatpush1.msra.mxu0 0.0
    %3019 = vmatprep.subr.mxu0 0.0
    %3020 = vmatpush1.msra.mxu0 0.0
    %3021 = vmatprep.subr.mxu0 0.0
    %3022 = vmatpush1.msra.mxu0 0.0
    %3023 = vmatprep.subr.mxu0 0.0
    %3024 = vmatpush1.msra.mxu0 0.0
    %3025 = vmatprep.subr.mxu0 0.0
    %3026 = vmatpush1.msra.mxu0 0.0
    %3027 = vmatprep.subr.mxu0 0.0
    %3028 = vmatpush1.msra.mxu0 0.0
    %3029 = vmatprep.subr.mxu0 0.0
    %3030 = vmatpush1.msra.mxu0 0.0
    %3031 = vmatprep.subr.mxu0 0.0
    %3032 = vmatpush1.msra.mxu0 0.0
    %3033 = vmatprep.subr.mxu0 0.0
    %3034 = vmatpush1.msra.mxu0 0.0
    %3035 = vmatprep.subr.mxu0 0.0
    %3036 = vmatpush1.msra.mxu0 0.0
    %3037 = vmatprep.subr.mxu0 0.0
    %3038 = vmatpush1.msra.mxu0 0.0
    %3039 = vmatprep.subr.mxu0 0.0
    %3040 = vmatpush1.msra.mxu0 0.0
    %3041 = vmatprep.subr.mxu0 0.0
    %3042 = vmatpush1.msra.mxu0 0.0
    %3043 = vmatprep.subr.mxu0 0.0
    %3044 = vmatpush1.msra.mxu0 0.0
    %3045 = vmatprep.subr.mxu0 0.0
    %3046 = vmatpush1.msra.mxu0 0.0
    %3047 = vmatprep.subr.mxu0 0.0
    %3048 = vmatpush1.msra.mxu0 0.0
    %3049 = vmatprep.subr.mxu0 0.0
    %3050 = vmatpush1.msra.mxu0 0.0
    %3051 = vmatprep.subr.mxu0 0.0
    %3052 = vmatpush1.msra.mxu0 0.0
    %3053 = vmatprep.subr.mxu0 0.0
    %3054 = vmatpush1.msra.mxu0 0.0
    %3055 = vmatprep.subr.mxu0 0.0
    %3056 = vmatpush1.msra.mxu0 0.0
    %3057 = vmatprep.subr.mxu0 0.0
    %3058 = vmatpush1.msra.mxu0 0.0
    %3059 = vmatprep.mubr.f32.mxu0 0.0
    %3060 = vmatmul.mubr.f32.gmra.mrb[0].mxu0 %v2990
    %v3061 = vpop.f32.mrb[0].mxu0
    %v3062 = vadd.f32 0.0, %v3061
    %v3063 = vpop.f32.mrb[0].mxu0
    %3064 = vmatprep.mubr.f32.mxu0 0.0
    %3065 = vmatmul.mubr.f32.gmra.mrb[0].mxu0 %v2993
    %v3066 = vpop.f32.mrb[0].mxu0
    %v3067 = vadd.f32 0.0, %v3066
    %v3068 = vpop.f32.mrb[0].mxu0
    %3069 = vdwg.mxu0
    %v3070 = vadd.f32 %v2833, %v3062
    %v3071 = vadd.f32 %v2834, %v3067
    %v3072 = vlaneseq
    %v3073 = vshrl.u32 %v3072, 7
    %v3074 = vsub.s32 2, %v3073
    %v3075 = vrot.slane %v162, %v3074
    %v3076 = vadd.f32 %v3070, %v3075
    %v3077 = vadd.f32 %v3071, %v3075
    %3078 = vst.msk [vmem:[#allocation16] sm:$0xff] %vm165, %v3076
    %3079 = vst.msk [vmem:[#allocation16 + $0x8] sm:$0xff] %vm165, %v3077
    // Predicated region
    $region86: #{tpu_custom_call.1} parent=1 // pred_check
      _
    $region87: #{tpu_custom_call.1} parent=1 // pred_check_branch
      %3081 = sbr.rel (0) target = $region89
    $region88: #{tpu_custom_call.1} parent=1 // pred_region
      %s3083 = ssub.s32 256, 256
      %3084 = vsyncadd [#allocation4], %s3083
      %s3085 = sshll.u32 [#allocation16], 4
      %s3086 = int_to_ptr.vmem [resolvable:$true] %s3085
      %3091 = dma.vmem_to_hbm [thread:$0]  %s3086, 256, %s13, [#allocation4], 128, 128, 8
    $region89: #{tpu_custom_call.1} parent=1 // pred_fallthru
      _
    // Predicated region
    $region90: #{tpu_custom_call.1} parent=1 // pred_check
      _
    $region91: #{tpu_custom_call.1} parent=1 // pred_check_branch
      %3093 = sbr.rel (0) target = $region93
    $region92: #{tpu_custom_call.1} parent=1 // pred_region
      %3094 = dma.done [#allocation4], 256
    $region93: #{tpu_custom_call.1} parent=1 // pred_fallthru
      _
    %3095 = vsyncpa [#allocation3], 1
    %3096 = vsyncpa [#allocation6], 1
    %3097 = vsyncpa [#allocation9], 1
    %3098 = vsyncpa [#allocation12], 1
    %3099 = vsyncpa [#allocation15], 1
    %3100 = vsyncpa [#allocation4], 1

</llo_original>
